<compile_context>
chip_gen: v7x
topology: tpu7x:2x2x1
jax: 0.10.0
libtpu: 0.0.40
codegen_flags: <defaults>
</compile_context>

<pallas_src>
import functools

import jax
import jax.numpy as jnp
from jax import lax
from jax.experimental import pallas as pl
from jax.experimental.pallas import tpu as pltpu

_VMEM_LIMIT = 32 * 1024 * 1024  # safe scoped-VMEM budget on v5e/v6e/v7x


def _round_up(x, m):
    return ((x + m - 1) // m) * m


def _pad2d(x, rows, cols):
    r, c = x.shape
    if (r, c) == (rows, cols):
        return x
    return jnp.pad(x, ((0, rows - r), (0, cols - c)))


# ---------------------------------------------------------------------------
# Matmul kernels (MXU): bf16 operands, f32 accumulation, fused epilogues
# ---------------------------------------------------------------------------
def _mm_kernel(a_ref, b_ref, o_ref, acc_ref, *, activation):
    k = pl.program_id(2)

    @pl.when(k == 0)
    def _():
        acc_ref[...] = jnp.zeros_like(acc_ref)

    acc_ref[...] += jnp.dot(a_ref[...], b_ref[...],
                            preferred_element_type=jnp.float32)

    @pl.when(k == pl.num_programs(2) - 1)
    def _():
        acc = acc_ref[...]
        if activation == "tanh":
            acc = jnp.tanh(acc)
        o_ref[...] = acc.astype(o_ref.dtype)


def _mm_stats_kernel(a_ref, b_ref, o_ref, s_ref, acc_ref):
    """Matmul + per-(M-tile, channel) sum / sum-of-squares (for BatchNorm)."""
    k = pl.program_id(2)

    @pl.when(k == 0)
    def _():
        acc_ref[...] = jnp.zeros_like(acc_ref)

    acc_ref[...] += jnp.dot(a_ref[...], b_ref[...],
                            preferred_element_type=jnp.float32)

    @pl.when(k == pl.num_programs(2) - 1)
    def _():
        acc = acc_ref[...]
        o_ref[...] = acc.astype(o_ref.dtype)
        row_sum = jnp.sum(acc, axis=0, keepdims=True)         # (1, tn)
        row_sq = jnp.sum(acc * acc, axis=0, keepdims=True)    # (1, tn)
        s_ref[...] = jnp.concatenate([row_sum, row_sq], axis=0)[None]  # (1,2,tn)


def pallas_matmul(a, b, *, activation="none", compute_stats=False):
    """a: (M, K), b: (K, N) -> padded (Mp, Np) f32 output (+ optional stats).

    Operands are cast to bf16 and zero-padded to aligned shapes; results for
    padded rows/columns are exactly zero, so callers simply slice [:M, :N].
    If compute_stats, also returns (Mp//tm, 2, Np) per-tile [sum; sumsq]."""
    M, K = a.shape
    K2, Nout = b.shape
    assert K == K2

    # Tile / pad sizes; double-buffered working set stays far below 32 MiB.
    tm = M if M <= 512 else 512
    tm = _round_up(tm, 8)
    Mp = _round_up(M, tm)

    Kp = _round_up(K, 128)
    if Kp > 2048:
        Kp = _round_up(K, 2048)
        tk = 2048
    else:
        tk = Kp

    Np = _round_up(Nout, 128)
    tn = 256 if Np % 256 == 0 else 128

    a_p = _pad2d(a.astype(jnp.bfloat16), Mp, Kp)
    b_p = _pad2d(b.astype(jnp.bfloat16), Kp, Np)

    gm, gn, gk = Mp // tm, Np // tn, Kp // tk

    a_spec = pl.BlockSpec((tm, tk), lambda i, j, k: (i, k))
    b_spec = pl.BlockSpec((tk, tn), lambda i, j, k: (k, j))
    o_spec = pl.BlockSpec((tm, tn), lambda i, j, k: (i, j))
    scratch = [pltpu.VMEM((tm, tn), jnp.float32)]

    cost = pl.CostEstimate(
        flops=2 * Mp * Kp * Np,
        transcendentals=(Mp * Np) if activation == "tanh" else 0,
        bytes_accessed=a_p.size * 2 + b_p.size * 2 + Mp * Np * 4,
    )
    cparams = pltpu.CompilerParams(
        dimension_semantics=("parallel", "parallel", "arbitrary"),
        vmem_limit_bytes=_VMEM_LIMIT,
    )

    if compute_stats:
        out, stats = pl.pallas_call(
            _mm_stats_kernel,
            out_shape=(jax.ShapeDtypeStruct((Mp, Np), jnp.float32),
                       jax.ShapeDtypeStruct((gm, 2, Np), jnp.float32)),
            grid=(gm, gn, gk),
            in_specs=[a_spec, b_spec],
            out_specs=(o_spec,
                       pl.BlockSpec((1, 2, tn), lambda i, j, k: (i, 0, j))),
            scratch_shapes=scratch,
            compiler_params=cparams,
            cost_estimate=cost,
        )(a_p, b_p)
        return out, stats

    out = pl.pallas_call(
        functools.partial(_mm_kernel, activation=activation),
        out_shape=jax.ShapeDtypeStruct((Mp, Np), jnp.float32),
        grid=(gm, gn, gk),
        in_specs=[a_spec, b_spec],
        out_specs=o_spec,
        scratch_shapes=scratch,
        compiler_params=cparams,
        cost_estimate=cost,
    )(a_p, b_p)
    return out, None


# ---------------------------------------------------------------------------
# BatchNorm(+ReLU) apply kernel: tiled, megacore-parallel, bf16 output
# ---------------------------------------------------------------------------
def _bn_relu_apply_kernel(x_ref, scale_ref, shift_ref, o_ref):
    y = x_ref[...] * scale_ref[...] + shift_ref[...]
    o_ref[...] = jnp.maximum(y, 0.0).astype(o_ref.dtype)


def pallas_bn_relu_apply(x_pad, scale_cols, shift_cols, out_dtype=jnp.bfloat16):
    """x_pad: (Mp, Cp) f32 padded slab; scale/shift: per-column vectors."""
    Mp, Cp = x_pad.shape
    tm = Mp if Mp <= 512 else 512
    assert Mp % tm == 0
    cb = Cp if Cp <= 2048 else 2048
    assert Cp % cb == 0

    ncol = scale_cols.shape[0]
    sc = jnp.zeros((1, Cp), jnp.float32).at[0, :ncol].set(scale_cols)
    sh = jnp.zeros((1, Cp), jnp.float32).at[0, :ncol].set(shift_cols)

    return pl.pallas_call(
        _bn_relu_apply_kernel,
        out_shape=jax.ShapeDtypeStruct((Mp, Cp), out_dtype),
        grid=(Mp // tm, Cp // cb),
        in_specs=[
            pl.BlockSpec((tm, cb), lambda i, j: (i, j)),
            pl.BlockSpec((1, cb), lambda i, j: (0, j)),
            pl.BlockSpec((1, cb), lambda i, j: (0, j)),
        ],
        out_specs=pl.BlockSpec((tm, cb), lambda i, j: (i, j)),
        compiler_params=pltpu.CompilerParams(
            dimension_semantics=("parallel", "parallel"),
            vmem_limit_bytes=_VMEM_LIMIT,
        ),
    )(x_pad, sc, sh)


def _bn_scale_shift(stat_sum, stat_sumsq, count, gamma, beta, eps=1e-5):
    mean = stat_sum / count
    var = jnp.maximum(stat_sumsq / count - mean * mean, 0.0)
    inv = lax.rsqrt(var + eps)
    scale = gamma * inv
    shift = beta - mean * scale
    return scale, shift


# ---------------------------------------------------------------------------
# ConvTranspose2d layers (NHWC activations end-to-end)
# ---------------------------------------------------------------------------
def deconv_first_bn_relu(z2, w, gamma, beta):
    """First layer: ConvTranspose2d(stride=1, pad=0, k=4) on 1x1 input.
    z2: (N, Cin); w: (Cin, Cout, 4, 4).  Returns (N, 4, 4, Cout) bf16."""
    N, Cin = z2.shape
    Cout = w.shape[1]
    ncol = 16 * Cout
    wmat = w.transpose(0, 2, 3, 1).reshape(Cin, ncol)  # columns (kh, kw, co)

    out, stats = pallas_matmul(z2, wmat, compute_stats=True)  # (Mp, Np) f32
    s = stats.sum(axis=0)[:, :ncol].reshape(2, 16, Cout).sum(axis=1)  # (2, Cout)
    scale, shift = _bn_scale_shift(s[0], s[1], N * 16, gamma, beta)

    y = pallas_bn_relu_apply(out, jnp.tile(scale, 16), jnp.tile(shift, 16))
    return y[:N, :ncol].reshape(N, 4, 4, Cout)


def deconv_s2(x_nhwc, w, gamma=None, beta=None):
    """ConvTranspose2d(stride=2, pad=1, k=4) via 4-phase sub-pixel matmuls.
    With gamma/beta: fused batch-stat BN + ReLU, bf16 NHWC output.
    Without: fused tanh epilogue, f32 NHWC output (final layer)."""
    N, H, W, Cin = x_nhwc.shape
    Cout = w.shape[1]
    M = N * H * W
    xp = jnp.pad(x_nhwc, ((0, 0), (1, 1), (1, 1), (0, 0)))

    phase_outs, phase_stats = [], []
    for ph in (0, 1):
        for pw in (0, 1):
            # TODO(synk): patch construction stays in XLA glue; an in-kernel
            # overlapping-window im2col would remove this HBM round trip.
            patches = jnp.concatenate(
                [xp[:, ph + dh: ph + dh + H, pw + dw: pw + dw + W, :]
                 for dh in (0, 1) for dw in (0, 1)],
                axis=-1,
            ).reshape(M, 4 * Cin)
            wph = jnp.stack(
                [w[:, :, 3 - ph - 2 * dh, 3 - pw - 2 * dw]
                 for dh in (0, 1) for dw in (0, 1)],
                axis=0,
            ).reshape(4 * Cin, Cout)
            if gamma is not None:
                o, s = pallas_matmul(patches, wph, compute_stats=True)
                phase_stats.append(s.sum(axis=0))
            else:
                o, _ = pallas_matmul(patches, wph, activation="tanh")
            phase_outs.append(o)

    if gamma is not None:
        s = sum(phase_stats)[:, :Cout]                       # (2, Cout)
        scale, shift = _bn_scale_shift(s[0], s[1], 4 * M, gamma, beta)
        ys = [pallas_bn_relu_apply(o, scale, shift)[:M, :Cout]
              .reshape(N, H, W, Cout) for o in phase_outs]
    else:
        ys = [o[:M, :Cout].reshape(N, H, W, Cout) for o in phase_outs]

    # Interleave the 4 phase outputs: out[:, 2o+ph, 2p+pw, :] = ys[(ph,pw)]
    stacked = jnp.stack(ys, axis=0).reshape(2, 2, N, H, W, Cout)
    out = stacked.transpose(2, 3, 0, 4, 1, 5).reshape(N, 2 * H, 2 * W, Cout)
    return out


# ---------------------------------------------------------------------------
# Generator: parameters + forward
# ---------------------------------------------------------------------------
def init_generator_params(key, z_size, out_size, ngf):
    chans = [z_size, ngf * 8, ngf * 4, ngf * 2, ngf, out_size]
    params = []
    for i in range(5):
        key, sub = jax.random.split(key)
        # nn.ConvTranspose2d weight ~ N(0, 0.02), shape (Cin, Cout, 4, 4), bias=False
        w = 0.02 * jax.random.normal(sub, (chans[i], chans[i + 1], 4, 4), jnp.float32)
        if i < 4:
            gamma = jnp.ones((chans[i + 1],), jnp.float32)   # BatchNorm2d defaults
            beta = jnp.zeros((chans[i + 1],), jnp.float32)
            params.append((w, gamma, beta))
        else:
            params.append((w,))
    return params
    # TODO(synk): BN running-mean/var buffers are training bookkeeping only; not materialized.


def generator_forward(params, z):
    """z: (N, z_size, 1, 1) -> (N, out_size, 64, 64), NCHW like PyTorch."""
    N = z.shape[0]
    z2 = z.reshape(N, -1)                                    # (N, z_size)

    w0, g0, b0 = params[0]
    x = deconv_first_bn_relu(z2, w0, g0, b0)                 # (N, 4, 4, 8*ngf) bf16

    for i in (1, 2, 3):
        w, g, b = params[i]
        x = deconv_s2(x, w, gamma=g, beta=b)                 # NHWC bf16, spatial x2

    (w4,) = params[4]
    y = deconv_s2(x, w4)                                     # (N, 64, 64, out) f32, tanh
    return y.transpose(0, 3, 1, 2)                           # single NHWC->NCHW at the end


if __name__ == "__main__":
    # Small but structurally faithful config: z_size=16, ngf=8, out_size=3, batch=2.
    Z_SIZE, NGF, OUT_SIZE, BATCH = 16, 8, 3, 2

    key = jax.random.PRNGKey(0)
    pkey, zkey = jax.random.split(key)
    params = init_generator_params(pkey, Z_SIZE, OUT_SIZE, NGF)
    z = jax.random.normal(zkey, (BATCH, Z_SIZE, 1, 1), jnp.float32)

    fwd = jax.jit(generator_forward)
    y = fwd(params, z)
    jax.block_until_ready(y)

    assert y.shape == (BATCH, OUT_SIZE, 64, 64), y.shape
    assert y.dtype == jnp.float32
    assert bool(jnp.all(jnp.isfinite(y)))
    assert bool(jnp.all(jnp.abs(y) <= 1.0 + 1e-5))  # tanh output range
    print("KERNEL_OK")
</pallas_src>

<mosaic_0001>
module attributes {stable_mosaic.version = 11 : i64} {
  func.func @_mm_stats_kernel(%arg0: i32, %arg1: i32, %arg2: i32, %arg3: memref<8x128xbf16, #tpu.memory_space<vmem>>, %arg4: memref<128x256xbf16, #tpu.memory_space<vmem>>, %arg5: memref<8x256xf32, #tpu.memory_space<vmem>>, %arg6: memref<1x2x256xf32, #tpu.memory_space<vmem>>, %arg7: memref<8x256xf32, #tpu.memory_space<vmem>>) attributes {dimension_semantics = [#tpu.dimension_semantics<parallel>, #tpu.dimension_semantics<parallel>, #tpu.dimension_semantics<arbitrary>], iteration_bounds = array<i64: 1, 4, 1>, scalar_prefetch = 0 : i64, scratch_operands = 1 : i64, tpu.core_type = #tpu.core_type<tc>, window_params = [{transform_indices = @transform_0, window_bounds = array<i64: 8, 128>}, {transform_indices = @transform_1, window_bounds = array<i64: 128, 256>}, {transform_indices = @transform_2, window_bounds = array<i64: 8, 256>}, {transform_indices = @transform_3, window_bounds = array<i64: 1, 2, 256>}]} {
    %c0_i32 = arith.constant 0 : i32
    %0 = arith.cmpi eq, %arg2, %c0_i32 : i32
    %1 = arith.extui %0 : i1 to i32
    %c0_i32_0 = arith.constant 0 : i32
    %2 = arith.cmpi ne, %1, %c0_i32_0 : i32
    scf.if %2 {
      %cst_10 = arith.constant 0.000000e+00 : f32
      %12 = vector.broadcast %cst_10 : f32 to vector<8x256xf32>
      %c0_11 = arith.constant 0 : index
      %c0_12 = arith.constant 0 : index
      %13 = vector.load %arg7[%c0_11, %c0_12] : memref<8x256xf32, #tpu.memory_space<vmem>>, vector<8x256xf32>
      tpu.vector_store %arg7[%c0_11, %c0_12], %12 {strides = array<i32>} : memref<8x256xf32, #tpu.memory_space<vmem>>, vector<8x256xf32>,
    } else {
    }
    %c0 = arith.constant 0 : index
    %c0_1 = arith.constant 0 : index
    %3 = vector.load %arg7[%c0, %c0_1] : memref<8x256xf32, #tpu.memory_space<vmem>>, vector<8x256xf32>
    %c0_2 = arith.constant 0 : index
    %c0_3 = arith.constant 0 : index
    %4 = vector.load %arg3[%c0_2, %c0_3] : memref<8x128xbf16, #tpu.memory_space<vmem>>, vector<8x128xbf16>
    %c0_4 = arith.constant 0 : index
    %c0_5 = arith.constant 0 : index
    %5 = vector.load %arg4[%c0_4, %c0_5] : memref<128x256xbf16, #tpu.memory_space<vmem>>, vector<128x256xbf16>
    %cst = arith.constant dense<0.000000e+00> : vector<8x256xf32>
    %6 = tpu.matmul %4, %5, %cst {dimension_numbers = #tpu.dot_dimension_numbers<[1], [0], [0], [1], [0, 0, 1, 1], [], []>} : vector<8x128xbf16>, vector<128x256xbf16>, vector<8x256xf32> -> vector<8x256xf32>
    %7 = arith.addf %3, %6 : vector<8x256xf32>
    %c0_6 = arith.constant 0 : index
    %c0_7 = arith.constant 0 : index
    %8 = vector.load %arg7[%c0_6, %c0_7] : memref<8x256xf32, #tpu.memory_space<vmem>>, vector<8x256xf32>
    tpu.vector_store %arg7[%c0_6, %c0_7], %7 {strides = array<i32>} : memref<8x256xf32, #tpu.memory_space<vmem>>, vector<8x256xf32>,
    %c0_i32_8 = arith.constant 0 : i32
    %9 = arith.cmpi eq, %arg2, %c0_i32_8 : i32
    %10 = arith.extui %9 : i1 to i32
    %c0_i32_9 = arith.constant 0 : i32
    %11 = arith.cmpi ne, %10, %c0_i32_9 : i32
    scf.if %11 {
      %c0_10 = arith.constant 0 : index
      %c0_11 = arith.constant 0 : index
      %12 = vector.load %arg7[%c0_10, %c0_11] : memref<8x256xf32, #tpu.memory_space<vmem>>, vector<8x256xf32>
      %c0_12 = arith.constant 0 : index
      %c0_13 = arith.constant 0 : index
      %13 = vector.load %arg5[%c0_12, %c0_13] : memref<8x256xf32, #tpu.memory_space<vmem>>, vector<8x256xf32>
      tpu.vector_store %arg5[%c0_12, %c0_13], %12 {strides = array<i32>} : memref<8x256xf32, #tpu.memory_space<vmem>>, vector<8x256xf32>,
      %cst_14 = arith.constant dense<0.000000e+00> : vector<256xf32>
      %14 = vector.multi_reduction <add>, %12, %cst_14 [0] : vector<8x256xf32> to vector<256xf32>
      %15 = vector.shape_cast %14 : vector<256xf32> to vector<1x256xf32>
      %16 = arith.mulf %12, %12 : vector<8x256xf32>
      %cst_15 = arith.constant dense<0.000000e+00> : vector<256xf32>
      %17 = vector.multi_reduction <add>, %16, %cst_15 [0] : vector<8x256xf32> to vector<256xf32>
      %18 = vector.shape_cast %17 : vector<256xf32> to vector<1x256xf32>
      %19 = tpu.concatenate %15, %18 in 0 : vector<1x256xf32>, vector<1x256xf32> -> vector<2x256xf32>
      %20 = vector.shape_cast %19 : vector<2x256xf32> to vector<1x2x256xf32>
      %c0_16 = arith.constant 0 : index
      %c0_17 = arith.constant 0 : index
      %c0_18 = arith.constant 0 : index
      %21 = vector.load %arg6[%c0_16, %c0_17, %c0_18] : memref<1x2x256xf32, #tpu.memory_space<vmem>>, vector<1x2x256xf32>
      tpu.vector_store %arg6[%c0_16, %c0_17, %c0_18], %20 {strides = array<i32>} : memref<1x2x256xf32, #tpu.memory_space<vmem>>, vector<1x2x256xf32>,
    } else {
    }
    return
  }
  func.func @transform_0(%arg0: i32, %arg1: i32, %arg2: i32) -> (i32, i32) {
    %c0_i32 = arith.constant 0 : i32
    return %arg0, %arg2 : i32, i32
  }
  func.func @transform_1(%arg0: i32, %arg1: i32, %arg2: i32) -> (i32, i32) {
    %c0_i32 = arith.constant 0 : i32
    return %arg2, %arg1 : i32, i32
  }
  func.func @transform_2(%arg0: i32, %arg1: i32, %arg2: i32) -> (i32, i32) {
    %c0_i32 = arith.constant 0 : i32
    return %arg0, %arg1 : i32, i32
  }
  func.func @transform_3(%arg0: i32, %arg1: i32, %arg2: i32) -> (i32, i32, i32) {
    %c0_i32 = arith.constant 0 : i32
    %c0_i32_0 = arith.constant 0 : i32
    return %arg0, %c0_i32, %arg1 : i32, i32, i32
  }
}

module attributes {stable_mosaic.version = 11 : i64} {
  func.func @_bn_relu_apply_kernel(%arg0: i32, %arg1: i32, %arg2: memref<8x1024xf32, #tpu.memory_space<vmem>>, %arg3: memref<1x1024xf32, #tpu.memory_space<vmem>>, %arg4: memref<1x1024xf32, #tpu.memory_space<vmem>>, %arg5: memref<8x1024xbf16, #tpu.memory_space<vmem>>) attributes {dimension_semantics = [#tpu.dimension_semantics<parallel>, #tpu.dimension_semantics<parallel>], iteration_bounds = array<i64: 1, 1>, scalar_prefetch = 0 : i64, scratch_operands = 0 : i64, tpu.core_type = #tpu.core_type<tc>, window_params = [{transform_indices = @transform_0, window_bounds = array<i64: 8, 1024>}, {transform_indices = @transform_1, window_bounds = array<i64: 1, 1024>}, {transform_indices = @transform_2, window_bounds = array<i64: 1, 1024>}, {transform_indices = @transform_3, window_bounds = array<i64: 8, 1024>}]} {
    %c0 = arith.constant 0 : index
    %c0_0 = arith.constant 0 : index
    %0 = vector.load %arg2[%c0, %c0_0] : memref<8x1024xf32, #tpu.memory_space<vmem>>, vector<8x1024xf32>
    %c0_1 = arith.constant 0 : index
    %c0_2 = arith.constant 0 : index
    %1 = vector.load %arg3[%c0_1, %c0_2] : memref<1x1024xf32, #tpu.memory_space<vmem>>, vector<1x1024xf32>
    %2 = vector.broadcast %1 : vector<1x1024xf32> to vector<8x1024xf32>
    %3 = arith.mulf %0, %2 : vector<8x1024xf32>
    %c0_3 = arith.constant 0 : index
    %c0_4 = arith.constant 0 : index
    %4 = vector.load %arg4[%c0_3, %c0_4] : memref<1x1024xf32, #tpu.memory_space<vmem>>, vector<1x1024xf32>
    %5 = vector.broadcast %4 : vector<1x1024xf32> to vector<8x1024xf32>
    %6 = arith.addf %3, %5 : vector<8x1024xf32>
    %cst = arith.constant 0.000000e+00 : f32
    %7 = vector.broadcast %cst : f32 to vector<8x1024xf32>
    %8 = arith.maximumf %6, %7 : vector<8x1024xf32>
    %9 = arith.truncf %8 : vector<8x1024xf32> to vector<8x1024xbf16>
    %c0_5 = arith.constant 0 : index
    %c0_6 = arith.constant 0 : index
    %10 = vector.load %arg5[%c0_5, %c0_6] : memref<8x1024xbf16, #tpu.memory_space<vmem>>, vector<8x1024xbf16>
    tpu.vector_store %arg5[%c0_5, %c0_6], %9 {strides = array<i32>} : memref<8x1024xbf16, #tpu.memory_space<vmem>>, vector<8x1024xbf16>,
    return
  }
  func.func @transform_0(%arg0: i32, %arg1: i32) -> (i32, i32) {
    %c0_i32 = arith.constant 0 : i32
    return %arg0, %arg1 : i32, i32
  }
  func.func @transform_1(%arg0: i32, %arg1: i32) -> (i32, i32) {
    %c0_i32 = arith.constant 0 : i32
    %c0_i32_0 = arith.constant 0 : i32
    return %c0_i32, %arg1 : i32, i32
  }
  func.func @transform_2(%arg0: i32, %arg1: i32) -> (i32, i32) {
    %c0_i32 = arith.constant 0 : i32
    %c0_i32_0 = arith.constant 0 : i32
    return %c0_i32, %arg1 : i32, i32
  }
  func.func @transform_3(%arg0: i32, %arg1: i32) -> (i32, i32) {
    %c0_i32 = arith.constant 0 : i32
    return %arg0, %arg1 : i32, i32
  }
}

module attributes {stable_mosaic.version = 11 : i64} {
  func.func @_mm_stats_kernel(%arg0: i32, %arg1: i32, %arg2: i32, %arg3: memref<32x256xbf16, #tpu.memory_space<vmem>>, %arg4: memref<256x128xbf16, #tpu.memory_space<vmem>>, %arg5: memref<32x128xf32, #tpu.memory_space<vmem>>, %arg6: memref<1x2x128xf32, #tpu.memory_space<vmem>>, %arg7: memref<32x128xf32, #tpu.memory_space<vmem>>) attributes {dimension_semantics = [#tpu.dimension_semantics<parallel>, #tpu.dimension_semantics<parallel>, #tpu.dimension_semantics<arbitrary>], iteration_bounds = array<i64: 1, 1, 1>, scalar_prefetch = 0 : i64, scratch_operands = 1 : i64, tpu.core_type = #tpu.core_type<tc>, window_params = [{transform_indices = @transform_0, window_bounds = array<i64: 32, 256>}, {transform_indices = @transform_1, window_bounds = array<i64: 256, 128>}, {transform_indices = @transform_2, window_bounds = array<i64: 32, 128>}, {transform_indices = @transform_3, window_bounds = array<i64: 1, 2, 128>}]} {
    %c0_i32 = arith.constant 0 : i32
    %0 = arith.cmpi eq, %arg2, %c0_i32 : i32
    %1 = arith.extui %0 : i1 to i32
    %c0_i32_0 = arith.constant 0 : i32
    %2 = arith.cmpi ne, %1, %c0_i32_0 : i32
    scf.if %2 {
      %cst_10 = arith.constant 0.000000e+00 : f32
      %12 = vector.broadcast %cst_10 : f32 to vector<32x128xf32>
      %c0_11 = arith.constant 0 : index
      %c0_12 = arith.constant 0 : index
      %13 = vector.load %arg7[%c0_11, %c0_12] : memref<32x128xf32, #tpu.memory_space<vmem>>, vector<32x128xf32>
      tpu.vector_store %arg7[%c0_11, %c0_12], %12 {strides = array<i32>} : memref<32x128xf32, #tpu.memory_space<vmem>>, vector<32x128xf32>,
    } else {
    }
    %c0 = arith.constant 0 : index
    %c0_1 = arith.constant 0 : index
    %3 = vector.load %arg7[%c0, %c0_1] : memref<32x128xf32, #tpu.memory_space<vmem>>, vector<32x128xf32>
    %c0_2 = arith.constant 0 : index
    %c0_3 = arith.constant 0 : index
    %4 = vector.load %arg3[%c0_2, %c0_3] : memref<32x256xbf16, #tpu.memory_space<vmem>>, vector<32x256xbf16>
    %c0_4 = arith.constant 0 : index
    %c0_5 = arith.constant 0 : index
    %5 = vector.load %arg4[%c0_4, %c0_5] : memref<256x128xbf16, #tpu.memory_space<vmem>>, vector<256x128xbf16>
    %cst = arith.constant dense<0.000000e+00> : vector<32x128xf32>
    %6 = tpu.matmul %4, %5, %cst {dimension_numbers = #tpu.dot_dimension_numbers<[1], [0], [0], [1], [0, 0, 1, 1], [], []>} : vector<32x256xbf16>, vector<256x128xbf16>, vector<32x128xf32> -> vector<32x128xf32>
    %7 = arith.addf %3, %6 : vector<32x128xf32>
    %c0_6 = arith.constant 0 : index
    %c0_7 = arith.constant 0 : index
    %8 = vector.load %arg7[%c0_6, %c0_7] : memref<32x128xf32, #tpu.memory_space<vmem>>, vector<32x128xf32>
    tpu.vector_store %arg7[%c0_6, %c0_7], %7 {strides = array<i32>} : memref<32x128xf32, #tpu.memory_space<vmem>>, vector<32x128xf32>,
    %c0_i32_8 = arith.constant 0 : i32
    %9 = arith.cmpi eq, %arg2, %c0_i32_8 : i32
    %10 = arith.extui %9 : i1 to i32
    %c0_i32_9 = arith.constant 0 : i32
    %11 = arith.cmpi ne, %10, %c0_i32_9 : i32
    scf.if %11 {
      %c0_10 = arith.constant 0 : index
      %c0_11 = arith.constant 0 : index
      %12 = vector.load %arg7[%c0_10, %c0_11] : memref<32x128xf32, #tpu.memory_space<vmem>>, vector<32x128xf32>
      %c0_12 = arith.constant 0 : index
      %c0_13 = arith.constant 0 : index
      %13 = vector.load %arg5[%c0_12, %c0_13] : memref<32x128xf32, #tpu.memory_space<vmem>>, vector<32x128xf32>
      tpu.vector_store %arg5[%c0_12, %c0_13], %12 {strides = array<i32>} : memref<32x128xf32, #tpu.memory_space<vmem>>, vector<32x128xf32>,
      %cst_14 = arith.constant dense<0.000000e+00> : vector<128xf32>
      %14 = vector.multi_reduction <add>, %12, %cst_14 [0] : vector<32x128xf32> to vector<128xf32>
      %15 = vector.shape_cast %14 : vector<128xf32> to vector<1x128xf32>
      %16 = arith.mulf %12, %12 : vector<32x128xf32>
      %cst_15 = arith.constant dense<0.000000e+00> : vector<128xf32>
      %17 = vector.multi_reduction <add>, %16, %cst_15 [0] : vector<32x128xf32> to vector<128xf32>
      %18 = vector.shape_cast %17 : vector<128xf32> to vector<1x128xf32>
      %19 = tpu.concatenate %15, %18 in 0 : vector<1x128xf32>, vector<1x128xf32> -> vector<2x128xf32>
      %20 = vector.shape_cast %19 : vector<2x128xf32> to vector<1x2x128xf32>
      %c0_16 = arith.constant 0 : index
      %c0_17 = arith.constant 0 : index
      %c0_18 = arith.constant 0 : index
      %21 = vector.load %arg6[%c0_16, %c0_17, %c0_18] : memref<1x2x128xf32, #tpu.memory_space<vmem>>, vector<1x2x128xf32>
      tpu.vector_store %arg6[%c0_16, %c0_17, %c0_18], %20 {strides = array<i32>} : memref<1x2x128xf32, #tpu.memory_space<vmem>>, vector<1x2x128xf32>,
    } else {
    }
    return
  }
  func.func @transform_0(%arg0: i32, %arg1: i32, %arg2: i32) -> (i32, i32) {
    %c0_i32 = arith.constant 0 : i32
    return %arg0, %arg2 : i32, i32
  }
  func.func @transform_1(%arg0: i32, %arg1: i32, %arg2: i32) -> (i32, i32) {
    %c0_i32 = arith.constant 0 : i32
    return %arg2, %arg1 : i32, i32
  }
  func.func @transform_2(%arg0: i32, %arg1: i32, %arg2: i32) -> (i32, i32) {
    %c0_i32 = arith.constant 0 : i32
    return %arg0, %arg1 : i32, i32
  }
  func.func @transform_3(%arg0: i32, %arg1: i32, %arg2: i32) -> (i32, i32, i32) {
    %c0_i32 = arith.constant 0 : i32
    %c0_i32_0 = arith.constant 0 : i32
    return %arg0, %c0_i32, %arg1 : i32, i32, i32
  }
}

module attributes {stable_mosaic.version = 11 : i64} {
  func.func @_bn_relu_apply_kernel(%arg0: i32, %arg1: i32, %arg2: memref<32x128xf32, #tpu.memory_space<vmem>>, %arg3: memref<1x128xf32, #tpu.memory_space<vmem>>, %arg4: memref<1x128xf32, #tpu.memory_space<vmem>>, %arg5: memref<32x128xbf16, #tpu.memory_space<vmem>>) attributes {dimension_semantics = [#tpu.dimension_semantics<parallel>, #tpu.dimension_semantics<parallel>], iteration_bounds = array<i64: 1, 1>, scalar_prefetch = 0 : i64, scratch_operands = 0 : i64, tpu.core_type = #tpu.core_type<tc>, window_params = [{transform_indices = @transform_0, window_bounds = array<i64: 32, 128>}, {transform_indices = @transform_1, window_bounds = array<i64: 1, 128>}, {transform_indices = @transform_2, window_bounds = array<i64: 1, 128>}, {transform_indices = @transform_3, window_bounds = array<i64: 32, 128>}]} {
    %c0 = arith.constant 0 : index
    %c0_0 = arith.constant 0 : index
    %0 = vector.load %arg2[%c0, %c0_0] : memref<32x128xf32, #tpu.memory_space<vmem>>, vector<32x128xf32>
    %c0_1 = arith.constant 0 : index
    %c0_2 = arith.constant 0 : index
    %1 = vector.load %arg3[%c0_1, %c0_2] : memref<1x128xf32, #tpu.memory_space<vmem>>, vector<1x128xf32>
    %2 = vector.broadcast %1 : vector<1x128xf32> to vector<32x128xf32>
    %3 = arith.mulf %0, %2 : vector<32x128xf32>
    %c0_3 = arith.constant 0 : index
    %c0_4 = arith.constant 0 : index
    %4 = vector.load %arg4[%c0_3, %c0_4] : memref<1x128xf32, #tpu.memory_space<vmem>>, vector<1x128xf32>
    %5 = vector.broadcast %4 : vector<1x128xf32> to vector<32x128xf32>
    %6 = arith.addf %3, %5 : vector<32x128xf32>
    %cst = arith.constant 0.000000e+00 : f32
    %7 = vector.broadcast %cst : f32 to vector<32x128xf32>
    %8 = arith.maximumf %6, %7 : vector<32x128xf32>
    %9 = arith.truncf %8 : vector<32x128xf32> to vector<32x128xbf16>
    %c0_5 = arith.constant 0 : index
    %c0_6 = arith.constant 0 : index
    %10 = vector.load %arg5[%c0_5, %c0_6] : memref<32x128xbf16, #tpu.memory_space<vmem>>, vector<32x128xbf16>
    tpu.vector_store %arg5[%c0_5, %c0_6], %9 {strides = array<i32>} : memref<32x128xbf16, #tpu.memory_space<vmem>>, vector<32x128xbf16>,
    return
  }
  func.func @transform_0(%arg0: i32, %arg1: i32) -> (i32, i32) {
    %c0_i32 = arith.constant 0 : i32
    return %arg0, %arg1 : i32, i32
  }
  func.func @transform_1(%arg0: i32, %arg1: i32) -> (i32, i32) {
    %c0_i32 = arith.constant 0 : i32
    %c0_i32_0 = arith.constant 0 : i32
    return %c0_i32, %arg1 : i32, i32
  }
  func.func @transform_2(%arg0: i32, %arg1: i32) -> (i32, i32) {
    %c0_i32 = arith.constant 0 : i32
    %c0_i32_0 = arith.constant 0 : i32
    return %c0_i32, %arg1 : i32, i32
  }
  func.func @transform_3(%arg0: i32, %arg1: i32) -> (i32, i32) {
    %c0_i32 = arith.constant 0 : i32
    return %arg0, %arg1 : i32, i32
  }
}

module attributes {stable_mosaic.version = 11 : i64} {
  func.func @_mm_stats_kernel(%arg0: i32, %arg1: i32, %arg2: i32, %arg3: memref<128x128xbf16, #tpu.memory_space<vmem>>, %arg4: memref<128x128xbf16, #tpu.memory_space<vmem>>, %arg5: memref<128x128xf32, #tpu.memory_space<vmem>>, %arg6: memref<1x2x128xf32, #tpu.memory_space<vmem>>, %arg7: memref<128x128xf32, #tpu.memory_space<vmem>>) attributes {dimension_semantics = [#tpu.dimension_semantics<parallel>, #tpu.dimension_semantics<parallel>, #tpu.dimension_semantics<arbitrary>], iteration_bounds = array<i64: 1, 1, 1>, scalar_prefetch = 0 : i64, scratch_operands = 1 : i64, tpu.core_type = #tpu.core_type<tc>, window_params = [{transform_indices = @transform_0, window_bounds = array<i64: 128, 128>}, {transform_indices = @transform_1, window_bounds = array<i64: 128, 128>}, {transform_indices = @transform_2, window_bounds = array<i64: 128, 128>}, {transform_indices = @transform_3, window_bounds = array<i64: 1, 2, 128>}]} {
    %c0_i32 = arith.constant 0 : i32
    %0 = arith.cmpi eq, %arg2, %c0_i32 : i32
    %1 = arith.extui %0 : i1 to i32
    %c0_i32_0 = arith.constant 0 : i32
    %2 = arith.cmpi ne, %1, %c0_i32_0 : i32
    scf.if %2 {
      %cst_10 = arith.constant 0.000000e+00 : f32
      %12 = vector.broadcast %cst_10 : f32 to vector<128x128xf32>
      %c0_11 = arith.constant 0 : index
      %c0_12 = arith.constant 0 : index
      %13 = vector.load %arg7[%c0_11, %c0_12] : memref<128x128xf32, #tpu.memory_space<vmem>>, vector<128x128xf32>
      tpu.vector_store %arg7[%c0_11, %c0_12], %12 {strides = array<i32>} : memref<128x128xf32, #tpu.memory_space<vmem>>, vector<128x128xf32>,
    } else {
    }
    %c0 = arith.constant 0 : index
    %c0_1 = arith.constant 0 : index
    %3 = vector.load %arg7[%c0, %c0_1] : memref<128x128xf32, #tpu.memory_space<vmem>>, vector<128x128xf32>
    %c0_2 = arith.constant 0 : index
    %c0_3 = arith.constant 0 : index
    %4 = vector.load %arg3[%c0_2, %c0_3] : memref<128x128xbf16, #tpu.memory_space<vmem>>, vector<128x128xbf16>
    %c0_4 = arith.constant 0 : index
    %c0_5 = arith.constant 0 : index
    %5 = vector.load %arg4[%c0_4, %c0_5] : memref<128x128xbf16, #tpu.memory_space<vmem>>, vector<128x128xbf16>
    %cst = arith.constant dense<0.000000e+00> : vector<128x128xf32>
    %6 = tpu.matmul %4, %5, %cst {dimension_numbers = #tpu.dot_dimension_numbers<[1], [0], [0], [1], [0, 0, 1, 1], [], []>} : vector<128x128xbf16>, vector<128x128xbf16>, vector<128x128xf32> -> vector<128x128xf32>
    %7 = arith.addf %3, %6 : vector<128x128xf32>
    %c0_6 = arith.constant 0 : index
    %c0_7 = arith.constant 0 : index
    %8 = vector.load %arg7[%c0_6, %c0_7] : memref<128x128xf32, #tpu.memory_space<vmem>>, vector<128x128xf32>
    tpu.vector_store %arg7[%c0_6, %c0_7], %7 {strides = array<i32>} : memref<128x128xf32, #tpu.memory_space<vmem>>, vector<128x128xf32>,
    %c0_i32_8 = arith.constant 0 : i32
    %9 = arith.cmpi eq, %arg2, %c0_i32_8 : i32
    %10 = arith.extui %9 : i1 to i32
    %c0_i32_9 = arith.constant 0 : i32
    %11 = arith.cmpi ne, %10, %c0_i32_9 : i32
    scf.if %11 {
      %c0_10 = arith.constant 0 : index
      %c0_11 = arith.constant 0 : index
      %12 = vector.load %arg7[%c0_10, %c0_11] : memref<128x128xf32, #tpu.memory_space<vmem>>, vector<128x128xf32>
      %c0_12 = arith.constant 0 : index
      %c0_13 = arith.constant 0 : index
      %13 = vector.load %arg5[%c0_12, %c0_13] : memref<128x128xf32, #tpu.memory_space<vmem>>, vector<128x128xf32>
      tpu.vector_store %arg5[%c0_12, %c0_13], %12 {strides = array<i32>} : memref<128x128xf32, #tpu.memory_space<vmem>>, vector<128x128xf32>,
      %cst_14 = arith.constant dense<0.000000e+00> : vector<128xf32>
      %14 = vector.multi_reduction <add>, %12, %cst_14 [0] : vector<128x128xf32> to vector<128xf32>
      %15 = vector.shape_cast %14 : vector<128xf32> to vector<1x128xf32>
      %16 = arith.mulf %12, %12 : vector<128x128xf32>
      %cst_15 = arith.constant dense<0.000000e+00> : vector<128xf32>
      %17 = vector.multi_reduction <add>, %16, %cst_15 [0] : vector<128x128xf32> to vector<128xf32>
      %18 = vector.shape_cast %17 : vector<128xf32> to vector<1x128xf32>
      %19 = tpu.concatenate %15, %18 in 0 : vector<1x128xf32>, vector<1x128xf32> -> vector<2x128xf32>
      %20 = vector.shape_cast %19 : vector<2x128xf32> to vector<1x2x128xf32>
      %c0_16 = arith.constant 0 : index
      %c0_17 = arith.constant 0 : index
      %c0_18 = arith.constant 0 : index
      %21 = vector.load %arg6[%c0_16, %c0_17, %c0_18] : memref<1x2x128xf32, #tpu.memory_space<vmem>>, vector<1x2x128xf32>
      tpu.vector_store %arg6[%c0_16, %c0_17, %c0_18], %20 {strides = array<i32>} : memref<1x2x128xf32, #tpu.memory_space<vmem>>, vector<1x2x128xf32>,
    } else {
    }
    return
  }
  func.func @transform_0(%arg0: i32, %arg1: i32, %arg2: i32) -> (i32, i32) {
    %c0_i32 = arith.constant 0 : i32
    return %arg0, %arg2 : i32, i32
  }
  func.func @transform_1(%arg0: i32, %arg1: i32, %arg2: i32) -> (i32, i32) {
    %c0_i32 = arith.constant 0 : i32
    return %arg2, %arg1 : i32, i32
  }
  func.func @transform_2(%arg0: i32, %arg1: i32, %arg2: i32) -> (i32, i32) {
    %c0_i32 = arith.constant 0 : i32
    return %arg0, %arg1 : i32, i32
  }
  func.func @transform_3(%arg0: i32, %arg1: i32, %arg2: i32) -> (i32, i32, i32) {
    %c0_i32 = arith.constant 0 : i32
    %c0_i32_0 = arith.constant 0 : i32
    return %arg0, %c0_i32, %arg1 : i32, i32, i32
  }
}

module attributes {stable_mosaic.version = 11 : i64} {
  func.func @_bn_relu_apply_kernel(%arg0: i32, %arg1: i32, %arg2: memref<128x128xf32, #tpu.memory_space<vmem>>, %arg3: memref<1x128xf32, #tpu.memory_space<vmem>>, %arg4: memref<1x128xf32, #tpu.memory_space<vmem>>, %arg5: memref<128x128xbf16, #tpu.memory_space<vmem>>) attributes {dimension_semantics = [#tpu.dimension_semantics<parallel>, #tpu.dimension_semantics<parallel>], iteration_bounds = array<i64: 1, 1>, scalar_prefetch = 0 : i64, scratch_operands = 0 : i64, tpu.core_type = #tpu.core_type<tc>, window_params = [{transform_indices = @transform_0, window_bounds = array<i64: 128, 128>}, {transform_indices = @transform_1, window_bounds = array<i64: 1, 128>}, {transform_indices = @transform_2, window_bounds = array<i64: 1, 128>}, {transform_indices = @transform_3, window_bounds = array<i64: 128, 128>}]} {
    %c0 = arith.constant 0 : index
    %c0_0 = arith.constant 0 : index
    %0 = vector.load %arg2[%c0, %c0_0] : memref<128x128xf32, #tpu.memory_space<vmem>>, vector<128x128xf32>
    %c0_1 = arith.constant 0 : index
    %c0_2 = arith.constant 0 : index
    %1 = vector.load %arg3[%c0_1, %c0_2] : memref<1x128xf32, #tpu.memory_space<vmem>>, vector<1x128xf32>
    %2 = vector.broadcast %1 : vector<1x128xf32> to vector<128x128xf32>
    %3 = arith.mulf %0, %2 : vector<128x128xf32>
    %c0_3 = arith.constant 0 : index
    %c0_4 = arith.constant 0 : index
    %4 = vector.load %arg4[%c0_3, %c0_4] : memref<1x128xf32, #tpu.memory_space<vmem>>, vector<1x128xf32>
    %5 = vector.broadcast %4 : vector<1x128xf32> to vector<128x128xf32>
    %6 = arith.addf %3, %5 : vector<128x128xf32>
    %cst = arith.constant 0.000000e+00 : f32
    %7 = vector.broadcast %cst : f32 to vector<128x128xf32>
    %8 = arith.maximumf %6, %7 : vector<128x128xf32>
    %9 = arith.truncf %8 : vector<128x128xf32> to vector<128x128xbf16>
    %c0_5 = arith.constant 0 : index
    %c0_6 = arith.constant 0 : index
    %10 = vector.load %arg5[%c0_5, %c0_6] : memref<128x128xbf16, #tpu.memory_space<vmem>>, vector<128x128xbf16>
    tpu.vector_store %arg5[%c0_5, %c0_6], %9 {strides = array<i32>} : memref<128x128xbf16, #tpu.memory_space<vmem>>, vector<128x128xbf16>,
    return
  }
  func.func @transform_0(%arg0: i32, %arg1: i32) -> (i32, i32) {
    %c0_i32 = arith.constant 0 : i32
    return %arg0, %arg1 : i32, i32
  }
  func.func @transform_1(%arg0: i32, %arg1: i32) -> (i32, i32) {
    %c0_i32 = arith.constant 0 : i32
    %c0_i32_0 = arith.constant 0 : i32
    return %c0_i32, %arg1 : i32, i32
  }
  func.func @transform_2(%arg0: i32, %arg1: i32) -> (i32, i32) {
    %c0_i32 = arith.constant 0 : i32
    %c0_i32_0 = arith.constant 0 : i32
    return %c0_i32, %arg1 : i32, i32
  }
  func.func @transform_3(%arg0: i32, %arg1: i32) -> (i32, i32) {
    %c0_i32 = arith.constant 0 : i32
    return %arg0, %arg1 : i32, i32
  }
}

module attributes {stable_mosaic.version = 11 : i64} {
  func.func @_mm_stats_kernel(%arg0: i32, %arg1: i32, %arg2: i32, %arg3: memref<512x128xbf16, #tpu.memory_space<vmem>>, %arg4: memref<128x128xbf16, #tpu.memory_space<vmem>>, %arg5: memref<512x128xf32, #tpu.memory_space<vmem>>, %arg6: memref<1x2x128xf32, #tpu.memory_space<vmem>>, %arg7: memref<512x128xf32, #tpu.memory_space<vmem>>) attributes {dimension_semantics = [#tpu.dimension_semantics<parallel>, #tpu.dimension_semantics<parallel>, #tpu.dimension_semantics<arbitrary>], iteration_bounds = array<i64: 1, 1, 1>, scalar_prefetch = 0 : i64, scratch_operands = 1 : i64, tpu.core_type = #tpu.core_type<tc>, window_params = [{transform_indices = @transform_0, window_bounds = array<i64: 512, 128>}, {transform_indices = @transform_1, window_bounds = array<i64: 128, 128>}, {transform_indices = @transform_2, window_bounds = array<i64: 512, 128>}, {transform_indices = @transform_3, window_bounds = array<i64: 1, 2, 128>}]} {
    %c0_i32 = arith.constant 0 : i32
    %0 = arith.cmpi eq, %arg2, %c0_i32 : i32
    %1 = arith.extui %0 : i1 to i32
    %c0_i32_0 = arith.constant 0 : i32
    %2 = arith.cmpi ne, %1, %c0_i32_0 : i32
    scf.if %2 {
      %cst_10 = arith.constant 0.000000e+00 : f32
      %12 = vector.broadcast %cst_10 : f32 to vector<512x128xf32>
      %c0_11 = arith.constant 0 : index
      %c0_12 = arith.constant 0 : index
      %13 = vector.load %arg7[%c0_11, %c0_12] : memref<512x128xf32, #tpu.memory_space<vmem>>, vector<512x128xf32>
      tpu.vector_store %arg7[%c0_11, %c0_12], %12 {strides = array<i32>} : memref<512x128xf32, #tpu.memory_space<vmem>>, vector<512x128xf32>,
    } else {
    }
    %c0 = arith.constant 0 : index
    %c0_1 = arith.constant 0 : index
    %3 = vector.load %arg7[%c0, %c0_1] : memref<512x128xf32, #tpu.memory_space<vmem>>, vector<512x128xf32>
    %c0_2 = arith.constant 0 : index
    %c0_3 = arith.constant 0 : index
    %4 = vector.load %arg3[%c0_2, %c0_3] : memref<512x128xbf16, #tpu.memory_space<vmem>>, vector<512x128xbf16>
    %c0_4 = arith.constant 0 : index
    %c0_5 = arith.constant 0 : index
    %5 = vector.load %arg4[%c0_4, %c0_5] : memref<128x128xbf16, #tpu.memory_space<vmem>>, vector<128x128xbf16>
    %cst = arith.constant dense<0.000000e+00> : vector<512x128xf32>
    %6 = tpu.matmul %4, %5, %cst {dimension_numbers = #tpu.dot_dimension_numbers<[1], [0], [0], [1], [0, 0, 1, 1], [], []>} : vector<512x128xbf16>, vector<128x128xbf16>, vector<512x128xf32> -> vector<512x128xf32>
    %7 = arith.addf %3, %6 : vector<512x128xf32>
    %c0_6 = arith.constant 0 : index
    %c0_7 = arith.constant 0 : index
    %8 = vector.load %arg7[%c0_6, %c0_7] : memref<512x128xf32, #tpu.memory_space<vmem>>, vector<512x128xf32>
    tpu.vector_store %arg7[%c0_6, %c0_7], %7 {strides = array<i32>} : memref<512x128xf32, #tpu.memory_space<vmem>>, vector<512x128xf32>,
    %c0_i32_8 = arith.constant 0 : i32
    %9 = arith.cmpi eq, %arg2, %c0_i32_8 : i32
    %10 = arith.extui %9 : i1 to i32
    %c0_i32_9 = arith.constant 0 : i32
    %11 = arith.cmpi ne, %10, %c0_i32_9 : i32
    scf.if %11 {
      %c0_10 = arith.constant 0 : index
      %c0_11 = arith.constant 0 : index
      %12 = vector.load %arg7[%c0_10, %c0_11] : memref<512x128xf32, #tpu.memory_space<vmem>>, vector<512x128xf32>
      %c0_12 = arith.constant 0 : index
      %c0_13 = arith.constant 0 : index
      %13 = vector.load %arg5[%c0_12, %c0_13] : memref<512x128xf32, #tpu.memory_space<vmem>>, vector<512x128xf32>
      tpu.vector_store %arg5[%c0_12, %c0_13], %12 {strides = array<i32>} : memref<512x128xf32, #tpu.memory_space<vmem>>, vector<512x128xf32>,
      %cst_14 = arith.constant dense<0.000000e+00> : vector<128xf32>
      %14 = vector.multi_reduction <add>, %12, %cst_14 [0] : vector<512x128xf32> to vector<128xf32>
      %15 = vector.shape_cast %14 : vector<128xf32> to vector<1x128xf32>
      %16 = arith.mulf %12, %12 : vector<512x128xf32>
      %cst_15 = arith.constant dense<0.000000e+00> : vector<128xf32>
      %17 = vector.multi_reduction <add>, %16, %cst_15 [0] : vector<512x128xf32> to vector<128xf32>
      %18 = vector.shape_cast %17 : vector<128xf32> to vector<1x128xf32>
      %19 = tpu.concatenate %15, %18 in 0 : vector<1x128xf32>, vector<1x128xf32> -> vector<2x128xf32>
      %20 = vector.shape_cast %19 : vector<2x128xf32> to vector<1x2x128xf32>
      %c0_16 = arith.constant 0 : index
      %c0_17 = arith.constant 0 : index
      %c0_18 = arith.constant 0 : index
      %21 = vector.load %arg6[%c0_16, %c0_17, %c0_18] : memref<1x2x128xf32, #tpu.memory_space<vmem>>, vector<1x2x128xf32>
      tpu.vector_store %arg6[%c0_16, %c0_17, %c0_18], %20 {strides = array<i32>} : memref<1x2x128xf32, #tpu.memory_space<vmem>>, vector<1x2x128xf32>,
    } else {
    }
    return
  }
  func.func @transform_0(%arg0: i32, %arg1: i32, %arg2: i32) -> (i32, i32) {
    %c0_i32 = arith.constant 0 : i32
    return %arg0, %arg2 : i32, i32
  }
  func.func @transform_1(%arg0: i32, %arg1: i32, %arg2: i32) -> (i32, i32) {
    %c0_i32 = arith.constant 0 : i32
    return %arg2, %arg1 : i32, i32
  }
  func.func @transform_2(%arg0: i32, %arg1: i32, %arg2: i32) -> (i32, i32) {
    %c0_i32 = arith.constant 0 : i32
    return %arg0, %arg1 : i32, i32
  }
  func.func @transform_3(%arg0: i32, %arg1: i32, %arg2: i32) -> (i32, i32, i32) {
    %c0_i32 = arith.constant 0 : i32
    %c0_i32_0 = arith.constant 0 : i32
    return %arg0, %c0_i32, %arg1 : i32, i32, i32
  }
}

module attributes {stable_mosaic.version = 11 : i64} {
  func.func @_bn_relu_apply_kernel(%arg0: i32, %arg1: i32, %arg2: memref<512x128xf32, #tpu.memory_space<vmem>>, %arg3: memref<1x128xf32, #tpu.memory_space<vmem>>, %arg4: memref<1x128xf32, #tpu.memory_space<vmem>>, %arg5: memref<512x128xbf16, #tpu.memory_space<vmem>>) attributes {dimension_semantics = [#tpu.dimension_semantics<parallel>, #tpu.dimension_semantics<parallel>], iteration_bounds = array<i64: 1, 1>, scalar_prefetch = 0 : i64, scratch_operands = 0 : i64, tpu.core_type = #tpu.core_type<tc>, window_params = [{transform_indices = @transform_0, window_bounds = array<i64: 512, 128>}, {transform_indices = @transform_1, window_bounds = array<i64: 1, 128>}, {transform_indices = @transform_2, window_bounds = array<i64: 1, 128>}, {transform_indices = @transform_3, window_bounds = array<i64: 512, 128>}]} {
    %c0 = arith.constant 0 : index
    %c0_0 = arith.constant 0 : index
    %0 = vector.load %arg2[%c0, %c0_0] : memref<512x128xf32, #tpu.memory_space<vmem>>, vector<512x128xf32>
    %c0_1 = arith.constant 0 : index
    %c0_2 = arith.constant 0 : index
    %1 = vector.load %arg3[%c0_1, %c0_2] : memref<1x128xf32, #tpu.memory_space<vmem>>, vector<1x128xf32>
    %2 = vector.broadcast %1 : vector<1x128xf32> to vector<512x128xf32>
    %3 = arith.mulf %0, %2 : vector<512x128xf32>
    %c0_3 = arith.constant 0 : index
    %c0_4 = arith.constant 0 : index
    %4 = vector.load %arg4[%c0_3, %c0_4] : memref<1x128xf32, #tpu.memory_space<vmem>>, vector<1x128xf32>
    %5 = vector.broadcast %4 : vector<1x128xf32> to vector<512x128xf32>
    %6 = arith.addf %3, %5 : vector<512x128xf32>
    %cst = arith.constant 0.000000e+00 : f32
    %7 = vector.broadcast %cst : f32 to vector<512x128xf32>
    %8 = arith.maximumf %6, %7 : vector<512x128xf32>
    %9 = arith.truncf %8 : vector<512x128xf32> to vector<512x128xbf16>
    %c0_5 = arith.constant 0 : index
    %c0_6 = arith.constant 0 : index
    %10 = vector.load %arg5[%c0_5, %c0_6] : memref<512x128xbf16, #tpu.memory_space<vmem>>, vector<512x128xbf16>
    tpu.vector_store %arg5[%c0_5, %c0_6], %9 {strides = array<i32>} : memref<512x128xbf16, #tpu.memory_space<vmem>>, vector<512x128xbf16>,
    return
  }
  func.func @transform_0(%arg0: i32, %arg1: i32) -> (i32, i32) {
    %c0_i32 = arith.constant 0 : i32
    return %arg0, %arg1 : i32, i32
  }
  func.func @transform_1(%arg0: i32, %arg1: i32) -> (i32, i32) {
    %c0_i32 = arith.constant 0 : i32
    %c0_i32_0 = arith.constant 0 : i32
    return %c0_i32, %arg1 : i32, i32
  }
  func.func @transform_2(%arg0: i32, %arg1: i32) -> (i32, i32) {
    %c0_i32 = arith.constant 0 : i32
    %c0_i32_0 = arith.constant 0 : i32
    return %c0_i32, %arg1 : i32, i32
  }
  func.func @transform_3(%arg0: i32, %arg1: i32) -> (i32, i32) {
    %c0_i32 = arith.constant 0 : i32
    return %arg0, %arg1 : i32, i32
  }
}

module attributes {stable_mosaic.version = 11 : i64} {
  func.func @_mm_kernel(%arg0: i32, %arg1: i32, %arg2: i32, %arg3: memref<512x128xbf16, #tpu.memory_space<vmem>>, %arg4: memref<128x128xbf16, #tpu.memory_space<vmem>>, %arg5: memref<512x128xf32, #tpu.memory_space<vmem>>, %arg6: memref<512x128xf32, #tpu.memory_space<vmem>>) attributes {dimension_semantics = [#tpu.dimension_semantics<parallel>, #tpu.dimension_semantics<parallel>, #tpu.dimension_semantics<arbitrary>], iteration_bounds = array<i64: 4, 1, 1>, scalar_prefetch = 0 : i64, scratch_operands = 1 : i64, tpu.core_type = #tpu.core_type<tc>, window_params = [{transform_indices = @transform_0, window_bounds = array<i64: 512, 128>}, {transform_indices = @transform_1, window_bounds = array<i64: 128, 128>}, {transform_indices = @transform_2, window_bounds = array<i64: 512, 128>}]} {
    %c0_i32 = arith.constant 0 : i32
    %0 = arith.cmpi eq, %arg2, %c0_i32 : i32
    %1 = arith.extui %0 : i1 to i32
    %c0_i32_0 = arith.constant 0 : i32
    %2 = arith.cmpi ne, %1, %c0_i32_0 : i32
    scf.if %2 {
      %cst_10 = arith.constant 0.000000e+00 : f32
      %12 = vector.broadcast %cst_10 : f32 to vector<512x128xf32>
      %c0_11 = arith.constant 0 : index
      %c0_12 = arith.constant 0 : index
      %13 = vector.load %arg6[%c0_11, %c0_12] : memref<512x128xf32, #tpu.memory_space<vmem>>, vector<512x128xf32>
      tpu.vector_store %arg6[%c0_11, %c0_12], %12 {strides = array<i32>} : memref<512x128xf32, #tpu.memory_space<vmem>>, vector<512x128xf32>,
    } else {
    }
    %c0 = arith.constant 0 : index
    %c0_1 = arith.constant 0 : index
    %3 = vector.load %arg6[%c0, %c0_1] : memref<512x128xf32, #tpu.memory_space<vmem>>, vector<512x128xf32>
    %c0_2 = arith.constant 0 : index
    %c0_3 = arith.constant 0 : index
    %4 = vector.load %arg3[%c0_2, %c0_3] : memref<512x128xbf16, #tpu.memory_space<vmem>>, vector<512x128xbf16>
    %c0_4 = arith.constant 0 : index
    %c0_5 = arith.constant 0 : index
    %5 = vector.load %arg4[%c0_4, %c0_5] : memref<128x128xbf16, #tpu.memory_space<vmem>>, vector<128x128xbf16>
    %cst = arith.constant dense<0.000000e+00> : vector<512x128xf32>
    %6 = tpu.matmul %4, %5, %cst {dimension_numbers = #tpu.dot_dimension_numbers<[1], [0], [0], [1], [0, 0, 1, 1], [], []>} : vector<512x128xbf16>, vector<128x128xbf16>, vector<512x128xf32> -> vector<512x128xf32>
    %7 = arith.addf %3, %6 : vector<512x128xf32>
    %c0_6 = arith.constant 0 : index
    %c0_7 = arith.constant 0 : index
    %8 = vector.load %arg6[%c0_6, %c0_7] : memref<512x128xf32, #tpu.memory_space<vmem>>, vector<512x128xf32>
    tpu.vector_store %arg6[%c0_6, %c0_7], %7 {strides = array<i32>} : memref<512x128xf32, #tpu.memory_space<vmem>>, vector<512x128xf32>,
    %c0_i32_8 = arith.constant 0 : i32
    %9 = arith.cmpi eq, %arg2, %c0_i32_8 : i32
    %10 = arith.extui %9 : i1 to i32
    %c0_i32_9 = arith.constant 0 : i32
    %11 = arith.cmpi ne, %10, %c0_i32_9 : i32
    scf.if %11 {
      %c0_10 = arith.constant 0 : index
      %c0_11 = arith.constant 0 : index
      %12 = vector.load %arg6[%c0_10, %c0_11] : memref<512x128xf32, #tpu.memory_space<vmem>>, vector<512x128xf32>
      %13 = math.tanh %12 : vector<512x128xf32>
      %c0_12 = arith.constant 0 : index
      %c0_13 = arith.constant 0 : index
      %14 = vector.load %arg5[%c0_12, %c0_13] : memref<512x128xf32, #tpu.memory_space<vmem>>, vector<512x128xf32>
      tpu.vector_store %arg5[%c0_12, %c0_13], %13 {strides = array<i32>} : memref<512x128xf32, #tpu.memory_space<vmem>>, vector<512x128xf32>,
    } else {
    }
    return
  }
  func.func @transform_0(%arg0: i32, %arg1: i32, %arg2: i32) -> (i32, i32) {
    %c0_i32 = arith.constant 0 : i32
    return %arg0, %arg2 : i32, i32
  }
  func.func @transform_1(%arg0: i32, %arg1: i32, %arg2: i32) -> (i32, i32) {
    %c0_i32 = arith.constant 0 : i32
    return %arg2, %arg1 : i32, i32
  }
  func.func @transform_2(%arg0: i32, %arg1: i32, %arg2: i32) -> (i32, i32) {
    %c0_i32 = arith.constant 0 : i32
    return %arg0, %arg1 : i32, i32
  }
}

</mosaic_0001>

<llo_original>
// kernel: tile.13
$region0: #{tile.13}
  #allocation0 [shape = 's32[1]{0}', space=sflag, size = 0x4, scoped, tag = 'scoped memory for tile.13']
  %s0 = inlined_call_operand.vmem [shape: f32[64], index: 0, kind: input, shape index: {}]
  %s1 = inlined_call_operand.vmem [shape: f32[16,64], index: 1, kind: output, shape index: {}]
  // Predicated region
  $region2: #{tile.13} parent=0 // pred_check
    _
  $region3: #{tile.13} parent=0 // pred_check_branch
    %3 = sbr.rel (0) target = $region5
  $region4: #{tile.13} parent=0 // pred_region
    _
  $region5: #{tile.13} parent=0 // pred_fallthru
    _
  %v4 = vld [vmem:[%s0] ss:$0 sm:$0xff]
  %5 = vst [vmem:[%s1] sm:$0xff] %v4
  %s6 = scalar_lea.vmem %s1, 8
  %7 = vst [vmem:[%s6] sm:$0xff] %v4

// kernel: generator_forward.30
$region0: #{generator_forward.30}
  #allocation0 [shape = 'u32[]', space=smem, size = 0x4, offset = 0x4, fixed_abs, tag = 'smem constant byte address 0x4 - core index']
  #allocation1 [shape = 'u32[144,128]{1,0:T(1,128)}', space=vmem, size = 0x12000, scoped, tag = 'internal scratch']
  #allocation2 [shape = 'f32[8,256]{1,0:T(8,128)}', space=vmem, size = 0x2000, scoped, tag = 'scratch operand']
  %s0 = inlined_call_operand.vmem [shape: bf16[8,128], index: 0, kind: input, shape index: {}]
  %s1 = inlined_call_operand.vmem [shape: bf16[128,1024], index: 1, kind: input, shape index: {}]
  %s2 = inlined_call_operand.vmem [shape: f32[8,1024], index: 2, kind: output, shape index: {0}]
  %s3 = inlined_call_operand.vmem [shape: f32[1,2,1024], index: 3, kind: output, shape index: {1}]
  %4 = xla_tuple %s2, %s3
  %s5 = sld [smem:[#allocation0]]
  $region95: #{generator_forward.30} parent=0
    _
  %s7 = ssub.s32 1, %s5
  %s8 = scalar_select 0, %s7, %s5
  $region1: #{generator_forward.30} parent=0
    #allocation3 [shape = 'u8[131072]{0}', space=vmem, size = 0x20000, scoped, tag = 'input window, operand 1']
    loop: start=0, step=1, limit=6
    $region2: #{generator_forward.30} parent=1 // loop_pre_header
      _
    $region3: #{generator_forward.30} parent=1 // loop_header
      %s10 = sphi 0, %s14
      %p11 = scmp.ge.s32.totalorder %s10, 6
      %s17 = sphi 0, %s36
      %s18 = sphi 0, %s32
      %s19 = sphi 0, %s28
      %s20 = sphi 0, %s17
      %s21 = sphi 0, %s18
      %s22 = sphi 0, %s19
      %s23 = sphi 0, %s20
      %s24 = sphi 0, %s21
      %s25 = sphi 0, %s22
      %s41 = sphi 0, %s43
      %s44 = sphi 0, %s41
      %s45 = sphi 0, %s44
      %s61 = sphi 0, %s45
      %s69 = sphi 0, %s71
      %s72 = sphi 0, %s69
      %s73 = sphi 0, %s72
      %s89 = sphi 0, %s73
      %s97 = sphi 0, %s99
      %s100 = sphi 0, %s97
      %s101 = sphi 0, %s100
      %s117 = sphi 0, %s101
      %s125 = sphi 0, %s127
      %s128 = sphi 0, %s125
      %s129 = sphi 0, %s128
      %s145 = sphi 0, %s129
    $region4: #{generator_forward.30} parent=1 // loop_header_branch
      %13 = sbr.rel (%p11) target = $region8
    $region5: #{generator_forward.30} parent=1 // loop_body
      %s15 = ssub.s32 %s10, 1
      %s16 = ssub.s32 %s10, 2
      %s26 = sadd.s32 1, %s19
      %p27 = scmp.ge.s32.totalorder %s26, 1
      %s28 = scalar_select %p27, 0, %s26
      %s29 = sadd.s32 1, %s18
      %s30 = scalar_select %p27, %s29, %s18
      %p31 = scmp.ge.s32.totalorder %s30, 4
      %s32 = scalar_select %p31, 0, %s30
      %s33 = sadd.s32 1, %s17
      %s34 = scalar_select %p31, %s33, %s17
      %p35 = scmp.ge.s32.totalorder %s34, 1
      %s36 = scalar_select %p35, 0, %s34
      %s37 = ssub.s32 %s17, %s36
      %s38 = ssub.s32 %s19, %s28
      %s39 = sor.u32 %s37, %s38
      %p40 = scmp.eq.s32.totalorder %s39, 0
      %s42 = sadd.s32 %s41, 1
      %s43 = scalar_select %p40, %s41, %s42
      %p46 = pneg %p40
      %p47 = scmp.eq.s32.totalorder %s10, 3
      %p48 = por %p46, %p47
      %p49 = scmp.ne.s32.totalorder %s41, %s44
      %p50 = scmp.eq.s32.totalorder %s10, 0
      %p51 = por %p49, %p50
      %p52 = scmp.ne.s32.totalorder %s41, %s44
      %p53 = scmp.eq.s32.totalorder %s15, 3
      %p54 = por %p52, %p53
      %p55 = scmp.ne.s32.totalorder %s44, %s45
      %p56 = scmp.eq.s32.totalorder %s15, 0
      %p57 = por %p55, %p56
      %p58 = scmp.ne.s32.totalorder %s44, %s45
      %p59 = scmp.eq.s32.totalorder %s16, 3
      %p60 = por %p58, %p59
      %p62 = scmp.ne.s32.totalorder %s45, %s61
      %p63 = scmp.eq.s32.totalorder %s16, 0
      %p64 = por %p62, %p63
      %s65 = ssub.s32 %s19, %s28
      %s66 = ssub.s32 %s18, %s32
      %s67 = sor.u32 %s65, %s66
      %p68 = scmp.eq.s32.totalorder %s67, 0
      %s70 = sadd.s32 %s69, 1
      %s71 = scalar_select %p68, %s69, %s70
      %p74 = pneg %p68
      %p75 = scmp.eq.s32.totalorder %s10, 3
      %p76 = por %p74, %p75
      %p77 = scmp.ne.s32.totalorder %s69, %s72
      %p78 = scmp.eq.s32.totalorder %s10, 0
      %p79 = por %p77, %p78
      %p80 = scmp.ne.s32.totalorder %s69, %s72
      %p81 = scmp.eq.s32.totalorder %s15, 3
      %p82 = por %p80, %p81
      %p83 = scmp.ne.s32.totalorder %s72, %s73
      %p84 = scmp.eq.s32.totalorder %s15, 0
      %p85 = por %p83, %p84
      %p86 = scmp.ne.s32.totalorder %s72, %s73
      %p87 = scmp.eq.s32.totalorder %s16, 3
      %p88 = por %p86, %p87
      %p90 = scmp.ne.s32.totalorder %s73, %s89
      %p91 = scmp.eq.s32.totalorder %s16, 0
      %p92 = por %p90, %p91
      %s93 = ssub.s32 %s17, %s36
      %s94 = ssub.s32 %s18, %s32
      %s95 = sor.u32 %s93, %s94
      %p96 = scmp.eq.s32.totalorder %s95, 0
      %s98 = sadd.s32 %s97, 1
      %s99 = scalar_select %p96, %s97, %s98
      %p102 = pneg %p96
      %p103 = scmp.eq.s32.totalorder %s10, 3
      %p104 = por %p102, %p103
      %p105 = scmp.ne.s32.totalorder %s97, %s100
      %p106 = scmp.eq.s32.totalorder %s10, 0
      %p107 = por %p105, %p106
      %p108 = scmp.ne.s32.totalorder %s97, %s100
      %p109 = scmp.eq.s32.totalorder %s15, 3
      %p110 = por %p108, %p109
      %p111 = scmp.ne.s32.totalorder %s100, %s101
      %p112 = scmp.eq.s32.totalorder %s15, 0
      %p113 = por %p111, %p112
      %p114 = scmp.ne.s32.totalorder %s100, %s101
      %p115 = scmp.eq.s32.totalorder %s16, 3
      %p116 = por %p114, %p115
      %p118 = scmp.ne.s32.totalorder %s101, %s117
      %p119 = scmp.eq.s32.totalorder %s16, 0
      %p120 = por %p118, %p119
      %s121 = ssub.s32 %s17, %s36
      %s122 = ssub.s32 %s18, %s32
      %s123 = sor.u32 %s121, %s122
      %p124 = scmp.eq.s32.totalorder %s123, 0
      %s126 = sadd.s32 %s125, 1
      %s127 = scalar_select %p124, %s125, %s126
      %p130 = pneg %p124
      %p131 = scmp.eq.s32.totalorder %s10, 3
      %p132 = por %p130, %p131
      %p133 = scmp.ne.s32.totalorder %s125, %s128
      %p134 = scmp.eq.s32.totalorder %s10, 0
      %p135 = por %p133, %p134
      %p136 = scmp.ne.s32.totalorder %s125, %s128
      %p137 = scmp.eq.s32.totalorder %s15, 3
      %p138 = por %p136, %p137
      %p139 = scmp.ne.s32.totalorder %s128, %s129
      %p140 = scmp.eq.s32.totalorder %s15, 0
      %p141 = por %p139, %p140
      %p142 = scmp.ne.s32.totalorder %s128, %s129
      %p143 = scmp.eq.s32.totalorder %s16, 3
      %p144 = por %p142, %p143
      %p146 = scmp.ne.s32.totalorder %s129, %s145
      %p147 = scmp.eq.s32.totalorder %s16, 0
      %p148 = por %p146, %p147
      %p149 = scmp.le.s32.totalorder 1, %s10
      %p150 = scmp.lt.s32.totalorder %s10, 5
      %p151 = pnand %p149, %p150
      %p152 = pneg %p151
      // Predicated region
      $region9: #{generator_forward.30} parent=5 // pred_check
        _
      $region10: #{generator_forward.30} parent=5 // pred_check_branch
        %154 = sbr.rel (%p151) target = $region12
      $region11: #{generator_forward.30} parent=5 // pred_region
        %s155 = ssub.s32 %s10, 1
        // Predicated region
        $region13: #{generator_forward.30} parent=11 // pred_check
          %p156 = pneg %p57
        $region14: #{generator_forward.30} parent=11 // pred_check_branch
          %158 = sbr.rel (%p156) target = $region16
        $region15: #{generator_forward.30} parent=11 // pred_region
          %p159 = scmp.lt.s32.totalorder %s20, 0
          %s160 = scalar_select %p159, %s20, 0
          %p161 = scmp.lt.s32.totalorder %s22, 0
          %s162 = scalar_select %p161, %s22, 0
          %s163 = sadd.s32 %s162, %s160
          %s164 = smul.addr %s163, 4
          %s165 = scalar_lea.vmem %s0, %s164
        $region16: #{generator_forward.30} parent=11 // pred_fallthru
          _
      $region12: #{generator_forward.30} parent=5 // pred_fallthru
        _
      %p166 = scmp.lt.s32.totalorder %s10, 4
      // Predicated region
      $region17: #{generator_forward.30} parent=5 // pred_check
        %p167 = pneg %p166
      $region18: #{generator_forward.30} parent=5 // pred_check_branch
        %169 = sbr.rel (%p167) target = $region20
      $region19: #{generator_forward.30} parent=5 // pred_region
        // Predicated region
        $region21: #{generator_forward.30} parent=19 // pred_check
          %p170 = pneg %p79
        $region22: #{generator_forward.30} parent=19 // pred_check_branch
          %172 = sbr.rel (%p170) target = $region24
        $region23: #{generator_forward.30} parent=19 // pred_region
          %s173 = sand.u32 %s69, 1
          %s174 = sand.u32 %s69, 1
          %s175 = smul.addr %s174, 128
          %s176 = scalar_lea.vmem [#allocation3], %s175
          %s177 = smul.u32 16, %s19
          %s178 = smul.u32 2, %s18
          %s179 = smul.addr %s177, 8
          %s180 = sadd.s32 %s178, %s179
          %s181 = smul.addr %s180, 4
          %s182 = scalar_lea.vmem %s1, %s181
          // Predicated region
          $region25: #{generator_forward.30} parent=23 // pred_check
            _
          $region26: #{generator_forward.30} parent=23 // pred_check_branch
            %184 = sbr.rel (0) target = $region28
          $region27: #{generator_forward.30} parent=23 // pred_region
            // Predicated region
            $region29: #{generator_forward.30} parent=27 // pred_check
              _
            $region30: #{generator_forward.30} parent=27 // pred_check_branch
              %186 = sbr.rel (0) target = $region32
            $region31: #{generator_forward.30} parent=27 // pred_region
              // Predicated region
              $region44: #{generator_forward.30} parent=31 // pred_check
                _
              $region45: #{generator_forward.30} parent=31 // pred_check_branch
                %231 = sbr.rel (0) target = $region47
              $region46: #{generator_forward.30} parent=31 // pred_region
                loop: start=0, step=1, limit=1
                $region48: #{generator_forward.30} parent=46 // loop_pre_header
                  _
                $region49: #{generator_forward.30} parent=46 // loop_header
                  %s233 = sphi 0, %s237
                  %p234 = scmp.ge.s32.totalorder %s233, 1
                  %s238 = sphi %s182, %s182
                  %s239 = sphi %s176, %s176
                $region50: #{generator_forward.30} parent=46 // loop_header_branch
                  %236 = sbr.rel (%p234) target = $region54
                $region51: #{generator_forward.30} parent=46 // loop_body
                  %v240 = vld [vmem:[%s238] sm:$0xff]
                  %241 = vst [vmem:[%s239] sm:$0xff] %v240
                  %v242 = vld [vmem:[%s238 + $0x20] sm:$0xff]
                  %243 = vst [vmem:[%s239 + $0x8] sm:$0xff] %v242
                  %v244 = vld [vmem:[%s238 + $0x40] sm:$0xff]
                  %245 = vst [vmem:[%s239 + $0x10] sm:$0xff] %v244
                  %v246 = vld [vmem:[%s238 + $0x60] sm:$0xff]
                  %247 = vst [vmem:[%s239 + $0x18] sm:$0xff] %v246
                  %v248 = vld [vmem:[%s238 + $0x80] sm:$0xff]
                  %249 = vst [vmem:[%s239 + $0x20] sm:$0xff] %v248
                  %v250 = vld [vmem:[%s238 + $0xa0] sm:$0xff]
                  %251 = vst [vmem:[%s239 + $0x28] sm:$0xff] %v250
                  %v252 = vld [vmem:[%s238 + $0xc0] sm:$0xff]
                  %253 = vst [vmem:[%s239 + $0x30] sm:$0xff] %v252
                  %v254 = vld [vmem:[%s238 + $0xe0] sm:$0xff]
                  %255 = vst [vmem:[%s239 + $0x38] sm:$0xff] %v254
                  %v256 = vld [vmem:[%s238 + $0x100] sm:$0xff]
                  %257 = vst [vmem:[%s239 + $0x40] sm:$0xff] %v256
                  %v258 = vld [vmem:[%s238 + $0x120] sm:$0xff]
                  %259 = vst [vmem:[%s239 + $0x48] sm:$0xff] %v258
                  %v260 = vld [vmem:[%s238 + $0x140] sm:$0xff]
                  %261 = vst [vmem:[%s239 + $0x50] sm:$0xff] %v260
                  %v262 = vld [vmem:[%s238 + $0x160] sm:$0xff]
                  %263 = vst [vmem:[%s239 + $0x58] sm:$0xff] %v262
                  %v264 = vld [vmem:[%s238 + $0x180] sm:$0xff]
                  %265 = vst [vmem:[%s239 + $0x60] sm:$0xff] %v264
                  %v266 = vld [vmem:[%s238 + $0x1a0] sm:$0xff]
                  %267 = vst [vmem:[%s239 + $0x68] sm:$0xff] %v266
                  %v268 = vld [vmem:[%s238 + $0x1c0] sm:$0xff]
                  %269 = vst [vmem:[%s239 + $0x70] sm:$0xff] %v268
                  %v270 = vld [vmem:[%s238 + $0x1e0] sm:$0xff]
                  %271 = vst [vmem:[%s239 + $0x78] sm:$0xff] %v270
                $region52: #{generator_forward.30} parent=46 // loop_footer
                  %s237 = sadd.s32 1, %s233
                $region53: #{generator_forward.30} parent=46 // loop_footer_branch
                  %232 = sbr.rel target = $region49
                $region54: #{generator_forward.30} parent=46 // loop_exit
                  _
              $region47: #{generator_forward.30} parent=31 // pred_fallthru
                _
              // Predicated region
              $region55: #{generator_forward.30} parent=31 // pred_check
                _
              $region56: #{generator_forward.30} parent=31 // pred_check_branch
                %273 = sbr.rel target = $region58
              $region57: #{generator_forward.30} parent=31 // pred_region
                _
              $region58: #{generator_forward.30} parent=31 // pred_fallthru
                _
            $region32: #{generator_forward.30} parent=27 // pred_fallthru
              _
            // Predicated region
            $region33: #{generator_forward.30} parent=27 // pred_check
              _
            $region34: #{generator_forward.30} parent=27 // pred_check_branch
              %188 = sbr.rel target = $region36
            $region35: #{generator_forward.30} parent=27 // pred_region
              loop: start=0, step=1, limit=1
              $region37: #{generator_forward.30} parent=35 // loop_pre_header
                _
              $region38: #{generator_forward.30} parent=35 // loop_header
                %s191 = sphi 0, %s195
                %p192 = scmp.ge.s32.totalorder %s191, 1
                %s196 = sphi %s182, %s182
                %s197 = sphi %s176, %s176
              $region39: #{generator_forward.30} parent=35 // loop_header_branch
                %194 = sbr.rel (%p192) target = $region43
              $region40: #{generator_forward.30} parent=35 // loop_body
                %v198 = vld [vmem:[%s196] sm:$0xff]
                %199 = vst [vmem:[%s197] sm:$0xff] %v198
                %v200 = vld [vmem:[%s196 + $0x20] sm:$0xff]
                %201 = vst [vmem:[%s197 + $0x8] sm:$0xff] %v200
                %v202 = vld [vmem:[%s196 + $0x40] sm:$0xff]
                %203 = vst [vmem:[%s197 + $0x10] sm:$0xff] %v202
                %v204 = vld [vmem:[%s196 + $0x60] sm:$0xff]
                %205 = vst [vmem:[%s197 + $0x18] sm:$0xff] %v204
                %v206 = vld [vmem:[%s196 + $0x80] sm:$0xff]
                %207 = vst [vmem:[%s197 + $0x20] sm:$0xff] %v206
                %v208 = vld [vmem:[%s196 + $0xa0] sm:$0xff]
                %209 = vst [vmem:[%s197 + $0x28] sm:$0xff] %v208
                %v210 = vld [vmem:[%s196 + $0xc0] sm:$0xff]
                %211 = vst [vmem:[%s197 + $0x30] sm:$0xff] %v210
                %v212 = vld [vmem:[%s196 + $0xe0] sm:$0xff]
                %213 = vst [vmem:[%s197 + $0x38] sm:$0xff] %v212
                %v214 = vld [vmem:[%s196 + $0x100] sm:$0xff]
                %215 = vst [vmem:[%s197 + $0x40] sm:$0xff] %v214
                %v216 = vld [vmem:[%s196 + $0x120] sm:$0xff]
                %217 = vst [vmem:[%s197 + $0x48] sm:$0xff] %v216
                %v218 = vld [vmem:[%s196 + $0x140] sm:$0xff]
                %219 = vst [vmem:[%s197 + $0x50] sm:$0xff] %v218
                %v220 = vld [vmem:[%s196 + $0x160] sm:$0xff]
                %221 = vst [vmem:[%s197 + $0x58] sm:$0xff] %v220
                %v222 = vld [vmem:[%s196 + $0x180] sm:$0xff]
                %223 = vst [vmem:[%s197 + $0x60] sm:$0xff] %v222
                %v224 = vld [vmem:[%s196 + $0x1a0] sm:$0xff]
                %225 = vst [vmem:[%s197 + $0x68] sm:$0xff] %v224
                %v226 = vld [vmem:[%s196 + $0x1c0] sm:$0xff]
                %227 = vst [vmem:[%s197 + $0x70] sm:$0xff] %v226
                %v228 = vld [vmem:[%s196 + $0x1e0] sm:$0xff]
                %229 = vst [vmem:[%s197 + $0x78] sm:$0xff] %v228
              $region41: #{generator_forward.30} parent=35 // loop_footer
                %s195 = sadd.s32 1, %s191
              $region42: #{generator_forward.30} parent=35 // loop_footer_branch
                %190 = sbr.rel target = $region38
              $region43: #{generator_forward.30} parent=35 // loop_exit
                _
            $region36: #{generator_forward.30} parent=27 // pred_fallthru
              _
          $region28: #{generator_forward.30} parent=23 // pred_fallthru
            _
          %274 = vnop
        $region24: #{generator_forward.30} parent=19 // pred_fallthru
          _
      $region20: #{generator_forward.30} parent=5 // pred_fallthru
        _
      %p275 = scmp.le.s32.totalorder 1, %s10
      %p276 = scmp.lt.s32.totalorder %s10, 5
      %p277 = pnand %p275, %p276
      %p278 = pneg %p277
      // Predicated region
      $region59: #{generator_forward.30} parent=5 // pred_check
        _
      $region60: #{generator_forward.30} parent=5 // pred_check_branch
        %280 = sbr.rel (%p277) target = $region62
      $region61: #{generator_forward.30} parent=5 // pred_region
        %s281 = ssub.s32 %s10, 1
        %s282 = sand.u32 %s72, 1
        %s283 = sand.u32 %s72, 1
        %s284 = smul.addr %s283, 128
        %s285 = scalar_lea.vmem [#allocation3], %s284
        // Predicated region
        $region63: #{generator_forward.30} parent=61 // pred_check
          %p286 = pneg %p85
        $region64: #{generator_forward.30} parent=61 // pred_check_branch
          %288 = sbr.rel (%p286) target = $region66
        $region65: #{generator_forward.30} parent=61 // pred_region
          _
        $region66: #{generator_forward.30} parent=61 // pred_fallthru
          _
        %p289 = scmp.lt.s32.totalorder %s20, 0
        %s290 = scalar_select %p289, %s20, 0
        %p291 = scmp.lt.s32.totalorder %s22, 0
        %s292 = scalar_select %p291, %s22, 0
        %s293 = sadd.s32 %s292, %s290
        %s294 = smul.addr %s293, 4
        %s295 = scalar_lea.vmem %s0, %s294
        %p296 = pneg %p57
        %p297 = pneg %p54
        %s298 = sand.u32 %s72, 1
        %s299 = sand.u32 %s72, 1
        %s300 = smul.addr %s299, 128
        %s301 = scalar_lea.vmem [#allocation3], %s300
        %p302 = pneg %p85
        %p303 = pneg %p82
        %p304 = pneg %p113
        %p305 = pneg %p110
        %s306 = smul.u32 2, %s21
        %p307 = scmp.lt.s32.totalorder %s20, 0
        %s308 = scalar_select %p307, %s20, 0
        %p309 = scmp.lt.s32.totalorder %s306, 7
        %s310 = scalar_select %p309, %s306, 7
        %s311 = smul.addr %s308, 8
        %s312 = sadd.s32 %s310, %s311
        %s313 = smul.addr %s312, 8
        %s314 = scalar_lea.vmem %s2, %s313
        %p315 = pneg %p141
        %p316 = pneg %p138
        %s317 = smul.u32 2, %s21
        %p318 = scmp.lt.s32.totalorder %s20, 0
        %s319 = scalar_select %p318, %s20, 0
        %p320 = scmp.lt.s32.totalorder %s317, 7
        %s321 = scalar_select %p320, %s317, 7
        %s322 = smul.addr %s319, 8
        %s323 = sadd.s32 %s321, %s322
        %s324 = smul.addr %s323, 2
        %s325 = scalar_lea.vmem %s3, %s324
        %p326 = scmp.lt.s32.totalorder %s20, 0
        %s327 = scalar_select %p326, %s20, 0
        %p328 = scmp.lt.s32.totalorder %s22, 0
        %s329 = scalar_select %p328, %s22, 0
        %s330 = sadd.s32 %s329, %s327
        %s331 = smul.addr %s330, 4
        %s332 = scalar_lea.vmem %s0, %s331
        %s333 = smul.u32 16, %s22
        %s334 = smul.u32 2, %s21
        %s335 = smul.u32 2, %s21
        %p336 = scmp.lt.s32.totalorder %s20, 0
        %s337 = scalar_select %p336, %s20, 0
        %p338 = scmp.lt.s32.totalorder %s335, 7
        %s339 = scalar_select %p338, %s335, 7
        %s340 = smul.addr %s337, 8
        %s341 = sadd.s32 %s339, %s340
        %s342 = smul.addr %s341, 8
        %s343 = scalar_lea.vmem %s2, %s342
        %s344 = smul.u32 2, %s21
        %s345 = smul.u32 2, %s21
        %p346 = scmp.lt.s32.totalorder %s20, 0
        %s347 = scalar_select %p346, %s20, 0
        %p348 = scmp.lt.s32.totalorder %s345, 7
        %s349 = scalar_select %p348, %s345, 7
        %s350 = smul.addr %s347, 8
        %s351 = sadd.s32 %s349, %s350
        %s352 = smul.addr %s351, 2
        %s353 = scalar_lea.vmem %s3, %s352
        %s354 = smul.u32 2, %s21
        %p356 = scmp.eq.s32.totalorder %s22, 0
        // Predicated region
        $region67: #{generator_forward.30} parent=61 // pred_check
          %p357 = pneg %p356
        $region68: #{generator_forward.30} parent=61 // pred_check_branch
          %359 = sbr.rel (%p357) target = $region70
        $region69: #{generator_forward.30} parent=61 // pred_region
          %360 = vst [vmem:[#allocation2] sm:$0xff] 0.0
          %361 = vst [vmem:[#allocation2 + $0x8] sm:$0xff] 0.0
        $region70: #{generator_forward.30} parent=61 // pred_fallthru
          _
        %v362 = vld [vmem:[#allocation2] sm:$0xff]
        %v363 = vld [vmem:[#allocation2 + $0x8] sm:$0xff]
        %v364 = vld [vmem:[%s332] sm:$0xf]
        %v365 = vld [vmem:[%s285] sm:$0xff]
        %v366 = vld [vmem:[%s285 + $0x8] sm:$0xff]
        %v367 = vld [vmem:[%s285 + $0x10] sm:$0xff]
        %v368 = vld [vmem:[%s285 + $0x18] sm:$0xff]
        %v369 = vld [vmem:[%s285 + $0x20] sm:$0xff]
        %v370 = vld [vmem:[%s285 + $0x28] sm:$0xff]
        %v371 = vld [vmem:[%s285 + $0x30] sm:$0xff]
        %v372 = vld [vmem:[%s285 + $0x38] sm:$0xff]
        %v373 = vld [vmem:[%s285 + $0x40] sm:$0xff]
        %v374 = vld [vmem:[%s285 + $0x48] sm:$0xff]
        %v375 = vld [vmem:[%s285 + $0x50] sm:$0xff]
        %v376 = vld [vmem:[%s285 + $0x58] sm:$0xff]
        %v377 = vld [vmem:[%s285 + $0x60] sm:$0xff]
        %v378 = vld [vmem:[%s285 + $0x68] sm:$0xff]
        %v379 = vld [vmem:[%s285 + $0x70] sm:$0xff]
        %v380 = vld [vmem:[%s285 + $0x78] sm:$0xff]
        %v397 = vunpack.c.l.b16 %v365
        %v398 = vunpack.c.h.b16 %v365
        %v399 = vunpack.c.l.b16 %v366
        %v400 = vunpack.c.h.b16 %v366
        %v401 = vunpack.c.l.b16 %v367
        %v402 = vunpack.c.h.b16 %v367
        %v403 = vunpack.c.l.b16 %v368
        %v404 = vunpack.c.h.b16 %v368
        %v405 = vunpack.c.l.b16 %v369
        %v406 = vunpack.c.h.b16 %v369
        %v407 = vunpack.c.l.b16 %v370
        %v408 = vunpack.c.h.b16 %v370
        %v409 = vunpack.c.l.b16 %v371
        %v410 = vunpack.c.h.b16 %v371
        %v411 = vunpack.c.l.b16 %v372
        %v412 = vunpack.c.h.b16 %v372
        %v413 = vunpack.c.l.b16 %v373
        %v414 = vunpack.c.h.b16 %v373
        %v415 = vunpack.c.l.b16 %v374
        %v416 = vunpack.c.h.b16 %v374
        %v417 = vunpack.c.l.b16 %v375
        %v418 = vunpack.c.h.b16 %v375
        %v419 = vunpack.c.l.b16 %v376
        %v420 = vunpack.c.h.b16 %v376
        %v421 = vunpack.c.l.b16 %v377
        %v422 = vunpack.c.h.b16 %v377
        %v423 = vunpack.c.l.b16 %v378
        %v424 = vunpack.c.h.b16 %v378
        %v425 = vunpack.c.l.b16 %v379
        %v426 = vunpack.c.h.b16 %v379
        %v427 = vunpack.c.l.b16 %v380
        %v428 = vunpack.c.h.b16 %v380
        %v429 = vpack.c.b16 %v399, %v397
        %v430 = vpack.c.b16 %v400, %v398
        %v431 = vpack.c.b16 %v403, %v401
        %v432 = vpack.c.b16 %v404, %v402
        %v433 = vpack.c.b16 %v407, %v405
        %v434 = vpack.c.b16 %v408, %v406
        %v435 = vpack.c.b16 %v411, %v409
        %v436 = vpack.c.b16 %v412, %v410
        %v437 = vpack.c.b16 %v415, %v413
        %v438 = vpack.c.b16 %v416, %v414
        %v439 = vpack.c.b16 %v419, %v417
        %v440 = vpack.c.b16 %v420, %v418
        %v441 = vpack.c.b16 %v423, %v421
        %v442 = vpack.c.b16 %v424, %v422
        %v443 = vpack.c.b16 %v427, %v425
        %v444 = vpack.c.b16 %v428, %v426
        %461 = vmatprep.subr.bf16.mxu0 %v430
        %462 = vmatpush1.bf16.msra.mxu0 %v429
        %463 = vmatprep.subr.bf16.mxu0 %v432
        %464 = vmatpush1.bf16.msra.mxu0 %v431
        %465 = vmatprep.subr.bf16.mxu0 %v434
        %466 = vmatpush1.bf16.msra.mxu0 %v433
        %467 = vmatprep.subr.bf16.mxu0 %v436
        %468 = vmatpush1.bf16.msra.mxu0 %v435
        %469 = vmatprep.subr.bf16.mxu0 %v438
        %470 = vmatpush1.bf16.msra.mxu0 %v437
        %471 = vmatprep.subr.bf16.mxu0 %v440
        %472 = vmatpush1.bf16.msra.mxu0 %v439
        %473 = vmatprep.subr.bf16.mxu0 %v442
        %474 = vmatpush1.bf16.msra.mxu0 %v441
        %475 = vmatprep.subr.bf16.mxu0 %v444
        %476 = vmatpush1.bf16.msra.mxu0 %v443
        %477 = vmatprep.subr.bf16.mxu0 0
        %478 = vmatpush1.bf16.msra.mxu0 0
        %479 = vmatprep.subr.bf16.mxu0 0
        %480 = vmatpush1.bf16.msra.mxu0 0
        %481 = vmatprep.subr.bf16.mxu0 0
        %482 = vmatpush1.bf16.msra.mxu0 0
        %483 = vmatprep.subr.bf16.mxu0 0
        %484 = vmatpush1.bf16.msra.mxu0 0
        %485 = vmatprep.subr.bf16.mxu0 0
        %486 = vmatpush1.bf16.msra.mxu0 0
        %487 = vmatprep.subr.bf16.mxu0 0
        %488 = vmatpush1.bf16.msra.mxu0 0
        %489 = vmatprep.subr.bf16.mxu0 0
        %490 = vmatpush1.bf16.msra.mxu0 0
        %491 = vmatprep.subr.bf16.mxu0 0
        %492 = vmatpush1.bf16.msra.mxu0 0
        %493 = vmatprep.mubr.bf16.mxu0 0
        %494 = vmatmul.mubr.bf16.gmra.mrb[0].mxu0 %v364
        %v495 = vpop.f32.mrb[0].mxu0
        %v496 = vadd.f32 0.0, %v495
        %v497 = vpop.f32.mrb[0].mxu0
        %v498 = vadd.f32 0.0, %v497
        %v499 = vpop.f32.mrb[0].mxu0
        %v500 = vpop.f32.mrb[0].mxu0
        %501 = vdwg.mxu0
        %v502 = vadd.f32 %v362, %v496
        %v503 = vadd.f32 %v363, %v498
        %504 = vst [vmem:[#allocation2] sm:$0xff] %v502
        %505 = vst [vmem:[#allocation2 + $0x8] sm:$0xff] %v503
        // Predicated region
        $region71: #{generator_forward.30} parent=61 // pred_check
          %p506 = pneg %p356
        $region72: #{generator_forward.30} parent=61 // pred_check_branch
          %508 = sbr.rel (%p506) target = $region74
        $region73: #{generator_forward.30} parent=61 // pred_region
          %v509 = vld [vmem:[#allocation2] sm:$0xff]
          %v510 = vld [vmem:[#allocation2 + $0x8] sm:$0xff]
          %511 = vst [vmem:[%s343] sm:$0xff] %v509
          %512 = vst [vmem:[%s343 + $0x8] sm:$0xff] %v510
          %v513 = vrot.slane %v509, 4
          %v514 = vadd.f32 %v509, %v513
          %v515 = vrot.slane %v514, 2
          %v516 = vadd.f32 %v514, %v515
          %v517 = vrot.slane %v516, 1
          %v518 = vadd.f32 %v516, %v517
          %v519 = vrot.slane %v510, 4
          %v520 = vadd.f32 %v510, %v519
          %v521 = vrot.slane %v520, 2
          %v522 = vadd.f32 %v520, %v521
          %v523 = vrot.slane %v522, 1
          %v524 = vadd.f32 %v522, %v523
          %v525 = vmul.f32 %v509, %v509
          %v526 = vmul.f32 %v510, %v510
          %v527 = vrot.slane %v525, 4
          %v528 = vadd.f32 %v525, %v527
          %v529 = vrot.slane %v528, 2
          %v530 = vadd.f32 %v528, %v529
          %v531 = vrot.slane %v530, 1
          %v532 = vadd.f32 %v530, %v531
          %v533 = vrot.slane %v526, 4
          %v534 = vadd.f32 %v526, %v533
          %v535 = vrot.slane %v534, 2
          %v536 = vadd.f32 %v534, %v535
          %v537 = vrot.slane %v536, 1
          %v538 = vadd.f32 %v536, %v537
          %vm539 = vcmask 1040384
          %v540 = vsel %vm539, %v518, %v532
          %v541 = vsel %vm539, %v524, %v538
          %v544 = vcombine.low %v540, %v541
          %v546 = vunpack.c.l.s4 1983009808
          %v547 = vunpack.c.0.s8 %v546
          %v548 = vlaneseq
          %v549 = vshrl.u32 %v548, 7
          %v550 = vsub.s32 %v547, %v549
          %v551 = vrot.slane %v544, %v550
          %553 = vst [vmem:[%s353] sm:$0xf] %v551
        $region74: #{generator_forward.30} parent=61 // pred_fallthru
          _
        %s554 = smul.u32 2, %s21
        %p555 = scmp.lt.s32.totalorder %s20, 0
        %s556 = scalar_select %p555, %s20, 0
        %p557 = scmp.lt.s32.totalorder %s554, 7
        %s558 = scalar_select %p557, %s554, 7
        %s559 = smul.addr %s556, 8
        %s560 = sadd.s32 %s558, %s559
        %s561 = smul.addr %s560, 8
        %s562 = scalar_lea.vmem %s2, %s561
        %s563 = smul.u32 2, %s21
        %p564 = scmp.lt.s32.totalorder %s20, 0
        %s565 = scalar_select %p564, %s20, 0
        %p566 = scmp.lt.s32.totalorder %s563, 7
        %s567 = scalar_select %p566, %s563, 7
        %s568 = smul.addr %s565, 8
        %s569 = sadd.s32 %s567, %s568
        %s570 = smul.addr %s569, 2
        %s571 = scalar_lea.vmem %s3, %s570
        // Predicated region
        $region75: #{generator_forward.30} parent=61 // pred_check
          %p572 = pneg %p110
        $region76: #{generator_forward.30} parent=61 // pred_check_branch
          %574 = sbr.rel (%p572) target = $region78
        $region77: #{generator_forward.30} parent=61 // pred_region
          %s575 = smul.u32 2, %s21
        $region78: #{generator_forward.30} parent=61 // pred_fallthru
          _
        // Predicated region
        $region79: #{generator_forward.30} parent=61 // pred_check
          %p576 = pneg %p138
        $region80: #{generator_forward.30} parent=61 // pred_check_branch
          %578 = sbr.rel (%p576) target = $region82
        $region81: #{generator_forward.30} parent=61 // pred_region
          %s579 = smul.u32 2, %s21
        $region82: #{generator_forward.30} parent=61 // pred_fallthru
          _
      $region62: #{generator_forward.30} parent=5 // pred_fallthru
        _
      %p580 = scmp.le.s32.totalorder 2, %s10
      // Predicated region
      $region83: #{generator_forward.30} parent=5 // pred_check
        %p581 = pneg %p580
      $region84: #{generator_forward.30} parent=5 // pred_check_branch
        %583 = sbr.rel (%p581) target = $region86
      $region85: #{generator_forward.30} parent=5 // pred_region
        %s584 = ssub.s32 %s10, 2
        // Predicated region
        $region87: #{generator_forward.30} parent=85 // pred_check
          %p585 = pneg %p116
        $region88: #{generator_forward.30} parent=85 // pred_check_branch
          %587 = sbr.rel (%p585) target = $region90
        $region89: #{generator_forward.30} parent=85 // pred_region
          %s588 = smul.u32 2, %s24
          %p589 = scmp.lt.s32.totalorder %s23, 0
          %s590 = scalar_select %p589, %s23, 0
          %p591 = scmp.lt.s32.totalorder %s588, 7
          %s592 = scalar_select %p591, %s588, 7
          %s593 = smul.addr %s590, 8
          %s594 = sadd.s32 %s592, %s593
          %s595 = smul.addr %s594, 8
          %s596 = scalar_lea.vmem %s2, %s595
        $region90: #{generator_forward.30} parent=85 // pred_fallthru
          _
        // Predicated region
        $region91: #{generator_forward.30} parent=85 // pred_check
          %p597 = pneg %p144
        $region92: #{generator_forward.30} parent=85 // pred_check_branch
          %599 = sbr.rel (%p597) target = $region94
        $region93: #{generator_forward.30} parent=85 // pred_region
          %s600 = smul.u32 2, %s24
          %p601 = scmp.lt.s32.totalorder %s23, 0
          %s602 = scalar_select %p601, %s23, 0
          %p603 = scmp.lt.s32.totalorder %s600, 7
          %s604 = scalar_select %p603, %s600, 7
          %s605 = smul.addr %s602, 8
          %s606 = sadd.s32 %s604, %s605
          %s607 = smul.addr %s606, 2
          %s608 = scalar_lea.vmem %s3, %s607
        $region94: #{generator_forward.30} parent=85 // pred_fallthru
          _
      $region86: #{generator_forward.30} parent=5 // pred_fallthru
        _
    $region6: #{generator_forward.30} parent=1 // loop_footer
      %s14 = sadd.s32 1, %s10
    $region7: #{generator_forward.30} parent=1 // loop_footer_branch
      %9 = sbr.rel target = $region3
    $region8: #{generator_forward.30} parent=1 // loop_exit
      _

// kernel: generator_forward.31
$region0: #{generator_forward.31}
  #allocation0 [shape = 'u32[]', space=smem, size = 0x4, offset = 0x4, fixed_abs, tag = 'smem constant byte address 0x4 - core index']
  #allocation1 [shape = 'u32[144,128]{1,0:T(1,128)}', space=vmem, size = 0x12000, scoped, tag = 'internal scratch']
  %s0 = inlined_call_operand.vmem [shape: f32[8,1024], index: 0, kind: input, shape index: {}]
  %s1 = inlined_call_operand.vmem [shape: f32[1,1024], index: 1, kind: input, shape index: {}]
  %s2 = inlined_call_operand.vmem [shape: f32[1,1024], index: 2, kind: input, shape index: {}]
  %s3 = inlined_call_operand.vmem [shape: bf16[8,1024], index: 3, kind: output, shape index: {}]
  %s4 = sld [smem:[#allocation0]]
  $region22: #{generator_forward.31} parent=0
    _
  %s6 = ssub.s32 1, %s4
  %s7 = scalar_select 0, %s6, %s4
  // Predicated region
  $region2: #{generator_forward.31} parent=0 // pred_check
    _
  $region3: #{generator_forward.31} parent=0 // pred_check_branch
    %9 = sbr.rel (0) target = $region5
  $region4: #{generator_forward.31} parent=0 // pred_region
    _
  $region5: #{generator_forward.31} parent=0 // pred_fallthru
    _
  // Predicated region
  $region6: #{generator_forward.31} parent=0 // pred_check
    _
  $region7: #{generator_forward.31} parent=0 // pred_check_branch
    %11 = sbr.rel (0) target = $region9
  $region8: #{generator_forward.31} parent=0 // pred_region
    _
  $region9: #{generator_forward.31} parent=0 // pred_fallthru
    _
  // Predicated region
  $region10: #{generator_forward.31} parent=0 // pred_check
    _
  $region11: #{generator_forward.31} parent=0 // pred_check_branch
    %13 = sbr.rel (0) target = $region13
  $region12: #{generator_forward.31} parent=0 // pred_region
    _
  $region13: #{generator_forward.31} parent=0 // pred_fallthru
    _
  %v14 = vld [vmem:[%s0] sm:$0xff]
  %v15 = vld [vmem:[%s0 + $0x8] sm:$0xff]
  %v16 = vld [vmem:[%s0 + $0x10] sm:$0xff]
  %v17 = vld [vmem:[%s0 + $0x18] sm:$0xff]
  %v18 = vld [vmem:[%s0 + $0x20] sm:$0xff]
  %v19 = vld [vmem:[%s0 + $0x28] sm:$0xff]
  %v20 = vld [vmem:[%s0 + $0x30] sm:$0xff]
  %v21 = vld [vmem:[%s0 + $0x38] sm:$0xff]
  %v22 = vld [vmem:[%s1] sm:$0xff]
  %v24 = vlaneseq
  %v25 = vshrl.u32 %v24, 7
  %v26 = vsub.s32 0, %v25
  %v27 = vrot.slane %v22, %v26
  %v28 = vlaneseq
  %v29 = vshrl.u32 %v28, 7
  %v30 = vsub.s32 1, %v29
  %v31 = vrot.slane %v22, %v30
  %v32 = vlaneseq
  %v33 = vshrl.u32 %v32, 7
  %v34 = vsub.s32 2, %v33
  %v35 = vrot.slane %v22, %v34
  %v36 = vlaneseq
  %v37 = vshrl.u32 %v36, 7
  %v38 = vsub.s32 3, %v37
  %v39 = vrot.slane %v22, %v38
  %v40 = vlaneseq
  %v41 = vshrl.u32 %v40, 7
  %v42 = vsub.s32 4, %v41
  %v43 = vrot.slane %v22, %v42
  %v44 = vlaneseq
  %v45 = vshrl.u32 %v44, 7
  %v46 = vsub.s32 5, %v45
  %v47 = vrot.slane %v22, %v46
  %v48 = vlaneseq
  %v49 = vshrl.u32 %v48, 7
  %v50 = vsub.s32 6, %v49
  %v51 = vrot.slane %v22, %v50
  %v52 = vlaneseq
  %v53 = vshrl.u32 %v52, 7
  %v54 = vsub.s32 7, %v53
  %v55 = vrot.slane %v22, %v54
  %v64 = vmul.f32 %v14, %v27
  %v65 = vmul.f32 %v15, %v31
  %v66 = vmul.f32 %v16, %v35
  %v67 = vmul.f32 %v17, %v39
  %v68 = vmul.f32 %v18, %v43
  %v69 = vmul.f32 %v19, %v47
  %v70 = vmul.f32 %v20, %v51
  %v71 = vmul.f32 %v21, %v55
  %v72 = vld [vmem:[%s2] sm:$0xff]
  %v74 = vlaneseq
  %v75 = vshrl.u32 %v74, 7
  %v76 = vsub.s32 0, %v75
  %v77 = vrot.slane %v72, %v76
  %v78 = vlaneseq
  %v79 = vshrl.u32 %v78, 7
  %v80 = vsub.s32 1, %v79
  %v81 = vrot.slane %v72, %v80
  %v82 = vlaneseq
  %v83 = vshrl.u32 %v82, 7
  %v84 = vsub.s32 2, %v83
  %v85 = vrot.slane %v72, %v84
  %v86 = vlaneseq
  %v87 = vshrl.u32 %v86, 7
  %v88 = vsub.s32 3, %v87
  %v89 = vrot.slane %v72, %v88
  %v90 = vlaneseq
  %v91 = vshrl.u32 %v90, 7
  %v92 = vsub.s32 4, %v91
  %v93 = vrot.slane %v72, %v92
  %v94 = vlaneseq
  %v95 = vshrl.u32 %v94, 7
  %v96 = vsub.s32 5, %v95
  %v97 = vrot.slane %v72, %v96
  %v98 = vlaneseq
  %v99 = vshrl.u32 %v98, 7
  %v100 = vsub.s32 6, %v99
  %v101 = vrot.slane %v72, %v100
  %v102 = vlaneseq
  %v103 = vshrl.u32 %v102, 7
  %v104 = vsub.s32 7, %v103
  %v105 = vrot.slane %v72, %v104
  %v114 = vadd.f32 %v64, %v77
  %v115 = vadd.f32 %v65, %v81
  %v116 = vadd.f32 %v66, %v85
  %v117 = vadd.f32 %v67, %v89
  %v118 = vadd.f32 %v68, %v93
  %v119 = vadd.f32 %v69, %v97
  %v120 = vadd.f32 %v70, %v101
  %v121 = vadd.f32 %v71, %v105
  %v122 = vmax.f32 %v114, 0.0
  %v123 = vmax.f32 %v115, 0.0
  %v124 = vmax.f32 %v116, 0.0
  %v125 = vmax.f32 %v117, 0.0
  %v126 = vmax.f32 %v118, 0.0
  %v127 = vmax.f32 %v119, 0.0
  %v128 = vmax.f32 %v120, 0.0
  %v129 = vmax.f32 %v121, 0.0
  %v130 = vpack.c.bf16 %v122, %v122
  %v131 = vpack.c.bf16 %v123, %v123
  %v132 = vpack.c.bf16 %v124, %v124
  %v133 = vpack.c.bf16 %v125, %v125
  %v134 = vpack.c.bf16 %v126, %v126
  %v135 = vpack.c.bf16 %v127, %v127
  %v136 = vpack.c.bf16 %v128, %v128
  %v137 = vpack.c.bf16 %v129, %v129
  %v146 = vunpack.c.l.b16 %v130
  %v147 = vunpack.c.l.b16 %v131
  %v148 = vunpack.c.l.b16 %v132
  %v149 = vunpack.c.l.b16 %v133
  %v150 = vunpack.c.l.b16 %v134
  %v151 = vunpack.c.l.b16 %v135
  %v152 = vunpack.c.l.b16 %v136
  %v153 = vunpack.c.l.b16 %v137
  %v154 = vpack.c.b16 %v147, %v146
  %v155 = vpack.c.b16 %v149, %v148
  %v156 = vpack.c.b16 %v151, %v150
  %v157 = vpack.c.b16 %v153, %v152
  %162 = vst [vmem:[%s3] sm:$0xff] %v154
  %163 = vst [vmem:[%s3 + $0x8] sm:$0xff] %v155
  %164 = vst [vmem:[%s3 + $0x10] sm:$0xff] %v156
  %165 = vst [vmem:[%s3 + $0x18] sm:$0xff] %v157
  // Predicated region
  $region14: #{generator_forward.31} parent=0 // pred_check
    _
  $region15: #{generator_forward.31} parent=0 // pred_check_branch
    %167 = sbr.rel (0) target = $region17
  $region16: #{generator_forward.31} parent=0 // pred_region
    _
  $region17: #{generator_forward.31} parent=0 // pred_fallthru
    _
  // Predicated region
  $region18: #{generator_forward.31} parent=0 // pred_check
    _
  $region19: #{generator_forward.31} parent=0 // pred_check_branch
    %169 = sbr.rel (0) target = $region21
  $region20: #{generator_forward.31} parent=0 // pred_region
    _
  $region21: #{generator_forward.31} parent=0 // pred_fallthru
    _

// kernel: generator_forward.36
$region0: #{generator_forward.36}
  #allocation0 [shape = 'u32[]', space=smem, size = 0x4, offset = 0x4, fixed_abs, tag = 'smem constant byte address 0x4 - core index']
  #allocation1 [shape = 'u32[144,128]{1,0:T(1,128)}', space=vmem, size = 0x12000, scoped, tag = 'internal scratch']
  %s0 = inlined_call_operand.vmem [shape: f32[32,128], index: 0, kind: input, shape index: {}]
  %s1 = inlined_call_operand.vmem [shape: f32[1,128], index: 1, kind: input, shape index: {}]
  %s2 = inlined_call_operand.vmem [shape: f32[1,128], index: 2, kind: input, shape index: {}]
  %s3 = inlined_call_operand.vmem [shape: bf16[32,128], index: 3, kind: output, shape index: {}]
  %s4 = sld [smem:[#allocation0]]
  $region22: #{generator_forward.36} parent=0
    _
  %s6 = ssub.s32 1, %s4
  %s7 = scalar_select 0, %s6, %s4
  // Predicated region
  $region2: #{generator_forward.36} parent=0 // pred_check
    _
  $region3: #{generator_forward.36} parent=0 // pred_check_branch
    %9 = sbr.rel (0) target = $region5
  $region4: #{generator_forward.36} parent=0 // pred_region
    _
  $region5: #{generator_forward.36} parent=0 // pred_fallthru
    _
  // Predicated region
  $region6: #{generator_forward.36} parent=0 // pred_check
    _
  $region7: #{generator_forward.36} parent=0 // pred_check_branch
    %11 = sbr.rel (0) target = $region9
  $region8: #{generator_forward.36} parent=0 // pred_region
    _
  $region9: #{generator_forward.36} parent=0 // pred_fallthru
    _
  // Predicated region
  $region10: #{generator_forward.36} parent=0 // pred_check
    _
  $region11: #{generator_forward.36} parent=0 // pred_check_branch
    %13 = sbr.rel (0) target = $region13
  $region12: #{generator_forward.36} parent=0 // pred_region
    _
  $region13: #{generator_forward.36} parent=0 // pred_fallthru
    _
  %v14 = vld [vmem:[%s0] sm:$0xff]
  %v15 = vld [vmem:[%s0 + $0x8] sm:$0xff]
  %v16 = vld [vmem:[%s0 + $0x10] sm:$0xff]
  %v17 = vld [vmem:[%s0 + $0x18] sm:$0xff]
  %v18 = vld [vmem:[%s1] sm:$0x1]
  %v20 = vlaneseq
  %v21 = vshrl.u32 %v20, 7
  %v22 = vsub.s32 0, %v21
  %v23 = vrot.slane %v18, %v22
  %v25 = vmul.f32 %v14, %v23
  %v26 = vmul.f32 %v15, %v23
  %v27 = vmul.f32 %v16, %v23
  %v28 = vmul.f32 %v17, %v23
  %v29 = vld [vmem:[%s2] sm:$0x1]
  %v31 = vlaneseq
  %v32 = vshrl.u32 %v31, 7
  %v33 = vsub.s32 0, %v32
  %v34 = vrot.slane %v29, %v33
  %v36 = vadd.f32 %v25, %v34
  %v37 = vadd.f32 %v26, %v34
  %v38 = vadd.f32 %v27, %v34
  %v39 = vadd.f32 %v28, %v34
  %v40 = vmax.f32 %v36, 0.0
  %v41 = vmax.f32 %v37, 0.0
  %v42 = vmax.f32 %v38, 0.0
  %v43 = vmax.f32 %v39, 0.0
  %v44 = vpack.c.bf16 %v41, %v40
  %v45 = vpack.c.bf16 %v43, %v42
  %v48 = vunpack.c.l.b16 %v44
  %v49 = vunpack.c.h.b16 %v44
  %v50 = vunpack.c.l.b16 %v45
  %v51 = vunpack.c.h.b16 %v45
  %v52 = vpack.c.b16 %v48, %v48
  %v53 = vpack.c.b16 %v49, %v49
  %v54 = vpack.c.b16 %v50, %v50
  %v55 = vpack.c.b16 %v51, %v51
  %60 = vst [vmem:[%s3] sm:$0xf] %v52
  %61 = vst [vmem:[%s3 + $0x4] sm:$0xf] %v53
  %62 = vst [vmem:[%s3 + $0x8] sm:$0xf] %v54
  %63 = vst [vmem:[%s3 + $0xc] sm:$0xf] %v55
  // Predicated region
  $region14: #{generator_forward.36} parent=0 // pred_check
    _
  $region15: #{generator_forward.36} parent=0 // pred_check_branch
    %65 = sbr.rel (0) target = $region17
  $region16: #{generator_forward.36} parent=0 // pred_region
    _
  $region17: #{generator_forward.36} parent=0 // pred_fallthru
    _
  // Predicated region
  $region18: #{generator_forward.36} parent=0 // pred_check
    _
  $region19: #{generator_forward.36} parent=0 // pred_check_branch
    %67 = sbr.rel (0) target = $region21
  $region20: #{generator_forward.36} parent=0 // pred_region
    _
  $region21: #{generator_forward.36} parent=0 // pred_fallthru
    _

// kernel: generator_forward.33
$region0: #{generator_forward.33}
  #allocation0 [shape = 'u32[]', space=smem, size = 0x4, offset = 0x4, fixed_abs, tag = 'smem constant byte address 0x4 - core index']
  #allocation1 [shape = 'u32[144,128]{1,0:T(1,128)}', space=vmem, size = 0x12000, scoped, tag = 'internal scratch']
  #allocation2 [shape = 'f32[32,128]{1,0:T(8,128)}', space=vmem, size = 0x4000, scoped, tag = 'scratch operand']
  %s0 = inlined_call_operand.vmem [shape: bf16[32,256], index: 0, kind: input, shape index: {}]
  %s1 = inlined_call_operand.vmem [shape: bf16[256,128], index: 1, kind: input, shape index: {}]
  %s2 = inlined_call_operand.vmem [shape: f32[32,128], index: 2, kind: output, shape index: {0}]
  %s3 = inlined_call_operand.vmem [shape: f32[1,2,128], index: 3, kind: output, shape index: {1}]
  %4 = xla_tuple %s2, %s3
  %s5 = sld [smem:[#allocation0]]
  $region34: #{generator_forward.33} parent=0
    _
  %s7 = ssub.s32 1, %s5
  %s8 = scalar_select 0, %s7, %s5
  // Predicated region
  $region2: #{generator_forward.33} parent=0 // pred_check
    _
  $region3: #{generator_forward.33} parent=0 // pred_check_branch
    %10 = sbr.rel (0) target = $region5
  $region4: #{generator_forward.33} parent=0 // pred_region
    _
  $region5: #{generator_forward.33} parent=0 // pred_fallthru
    _
  // Predicated region
  $region6: #{generator_forward.33} parent=0 // pred_check
    _
  $region7: #{generator_forward.33} parent=0 // pred_check_branch
    %12 = sbr.rel (0) target = $region9
  $region8: #{generator_forward.33} parent=0 // pred_region
    _
  $region9: #{generator_forward.33} parent=0 // pred_fallthru
    _
  %p14 = scmp.eq.s32.totalorder 0, 0
  // Predicated region
  $region10: #{generator_forward.33} parent=0 // pred_check
    %p15 = pneg %p14
  $region11: #{generator_forward.33} parent=0 // pred_check_branch
    %17 = sbr.rel (%p15) target = $region13
  $region12: #{generator_forward.33} parent=0 // pred_region
    %18 = vst [vmem:[#allocation2] sm:$0xff] 0.0
    %19 = vst [vmem:[#allocation2 + $0x8] sm:$0xff] 0.0
    %20 = vst [vmem:[#allocation2 + $0x10] sm:$0xff] 0.0
    %21 = vst [vmem:[#allocation2 + $0x18] sm:$0xff] 0.0
  $region13: #{generator_forward.33} parent=0 // pred_fallthru
    _
  %v22 = vld [vmem:[#allocation2] sm:$0xff]
  %v23 = vld [vmem:[#allocation2 + $0x8] sm:$0xff]
  %v24 = vld [vmem:[#allocation2 + $0x10] sm:$0xff]
  %v25 = vld [vmem:[#allocation2 + $0x18] sm:$0xff]
  %v26 = vld [vmem:[%s0] sm:$0xff]
  %v27 = vld [vmem:[%s0 + $0x8] sm:$0xff]
  %v28 = vld [vmem:[%s0 + $0x10] sm:$0xff]
  %v29 = vld [vmem:[%s0 + $0x18] sm:$0xff]
  %v30 = vld [vmem:[%s1] sm:$0xf]
  %v31 = vld [vmem:[%s1 + $0x4] sm:$0xf]
  %v32 = vld [vmem:[%s1 + $0x8] sm:$0xf]
  %v33 = vld [vmem:[%s1 + $0xc] sm:$0xf]
  %v34 = vld [vmem:[%s1 + $0x10] sm:$0xf]
  %v35 = vld [vmem:[%s1 + $0x14] sm:$0xf]
  %v36 = vld [vmem:[%s1 + $0x18] sm:$0xf]
  %v37 = vld [vmem:[%s1 + $0x1c] sm:$0xf]
  %v38 = vld [vmem:[%s1 + $0x20] sm:$0xf]
  %v39 = vld [vmem:[%s1 + $0x24] sm:$0xf]
  %v40 = vld [vmem:[%s1 + $0x28] sm:$0xf]
  %v41 = vld [vmem:[%s1 + $0x2c] sm:$0xf]
  %v42 = vld [vmem:[%s1 + $0x30] sm:$0xf]
  %v43 = vld [vmem:[%s1 + $0x34] sm:$0xf]
  %v44 = vld [vmem:[%s1 + $0x38] sm:$0xf]
  %v45 = vld [vmem:[%s1 + $0x3c] sm:$0xf]
  %v46 = vld [vmem:[%s1 + $0x40] sm:$0xf]
  %v47 = vld [vmem:[%s1 + $0x44] sm:$0xf]
  %v48 = vld [vmem:[%s1 + $0x48] sm:$0xf]
  %v49 = vld [vmem:[%s1 + $0x4c] sm:$0xf]
  %v50 = vld [vmem:[%s1 + $0x50] sm:$0xf]
  %v51 = vld [vmem:[%s1 + $0x54] sm:$0xf]
  %v52 = vld [vmem:[%s1 + $0x58] sm:$0xf]
  %v53 = vld [vmem:[%s1 + $0x5c] sm:$0xf]
  %v54 = vld [vmem:[%s1 + $0x60] sm:$0xf]
  %v55 = vld [vmem:[%s1 + $0x64] sm:$0xf]
  %v56 = vld [vmem:[%s1 + $0x68] sm:$0xf]
  %v57 = vld [vmem:[%s1 + $0x6c] sm:$0xf]
  %v58 = vld [vmem:[%s1 + $0x70] sm:$0xf]
  %v59 = vld [vmem:[%s1 + $0x74] sm:$0xf]
  %v60 = vld [vmem:[%s1 + $0x78] sm:$0xf]
  %v61 = vld [vmem:[%s1 + $0x7c] sm:$0xf]
  %v66 = vunpack.c.l.b16 %v26
  %v67 = vunpack.c.h.b16 %v26
  %v68 = vunpack.c.l.b16 %v27
  %v69 = vunpack.c.h.b16 %v27
  %v70 = vunpack.c.l.b16 %v28
  %v71 = vunpack.c.h.b16 %v28
  %v72 = vunpack.c.l.b16 %v29
  %v73 = vunpack.c.h.b16 %v29
  %v74 = vpack.c.b16 %v68, %v66
  %v75 = vpack.c.b16 %v69, %v67
  %v76 = vpack.c.b16 %v72, %v70
  %v77 = vpack.c.b16 %v73, %v71
  %v114 = vunpack.c.l.b16 %v30
  %v115 = vunpack.c.l.b16 %v31
  %v116 = vunpack.c.l.b16 %v32
  %v117 = vunpack.c.l.b16 %v33
  %v118 = vunpack.c.l.b16 %v34
  %v119 = vunpack.c.l.b16 %v35
  %v120 = vunpack.c.l.b16 %v36
  %v121 = vunpack.c.l.b16 %v37
  %v122 = vunpack.c.l.b16 %v38
  %v123 = vunpack.c.l.b16 %v39
  %v124 = vunpack.c.l.b16 %v40
  %v125 = vunpack.c.l.b16 %v41
  %v126 = vunpack.c.l.b16 %v42
  %v127 = vunpack.c.l.b16 %v43
  %v128 = vunpack.c.l.b16 %v44
  %v129 = vunpack.c.l.b16 %v45
  %v130 = vunpack.c.l.b16 %v46
  %v131 = vunpack.c.l.b16 %v47
  %v132 = vunpack.c.l.b16 %v48
  %v133 = vunpack.c.l.b16 %v49
  %v134 = vunpack.c.l.b16 %v50
  %v135 = vunpack.c.l.b16 %v51
  %v136 = vunpack.c.l.b16 %v52
  %v137 = vunpack.c.l.b16 %v53
  %v138 = vunpack.c.l.b16 %v54
  %v139 = vunpack.c.l.b16 %v55
  %v140 = vunpack.c.l.b16 %v56
  %v141 = vunpack.c.l.b16 %v57
  %v142 = vunpack.c.l.b16 %v58
  %v143 = vunpack.c.l.b16 %v59
  %v144 = vunpack.c.l.b16 %v60
  %v145 = vunpack.c.l.b16 %v61
  %v146 = vpack.c.b16 %v115, %v114
  %v147 = vpack.c.b16 %v117, %v116
  %v148 = vpack.c.b16 %v119, %v118
  %v149 = vpack.c.b16 %v121, %v120
  %v150 = vpack.c.b16 %v123, %v122
  %v151 = vpack.c.b16 %v125, %v124
  %v152 = vpack.c.b16 %v127, %v126
  %v153 = vpack.c.b16 %v129, %v128
  %v154 = vpack.c.b16 %v131, %v130
  %v155 = vpack.c.b16 %v133, %v132
  %v156 = vpack.c.b16 %v135, %v134
  %v157 = vpack.c.b16 %v137, %v136
  %v158 = vpack.c.b16 %v139, %v138
  %v159 = vpack.c.b16 %v141, %v140
  %v160 = vpack.c.b16 %v143, %v142
  %v161 = vpack.c.b16 %v145, %v144
  %178 = vmatprep.subr.bf16.mxu0 0
  %179 = vmatpush1.bf16.msra.mxu0 %v146
  %180 = vmatprep.subr.bf16.mxu0 0
  %181 = vmatpush1.bf16.msra.mxu0 %v147
  %182 = vmatprep.subr.bf16.mxu0 0
  %183 = vmatpush1.bf16.msra.mxu0 %v148
  %184 = vmatprep.subr.bf16.mxu0 0
  %185 = vmatpush1.bf16.msra.mxu0 %v149
  %186 = vmatprep.subr.bf16.mxu0 0
  %187 = vmatpush1.bf16.msra.mxu0 %v150
  %188 = vmatprep.subr.bf16.mxu0 0
  %189 = vmatpush1.bf16.msra.mxu0 %v151
  %190 = vmatprep.subr.bf16.mxu0 0
  %191 = vmatpush1.bf16.msra.mxu0 %v152
  %192 = vmatprep.subr.bf16.mxu0 0
  %193 = vmatpush1.bf16.msra.mxu0 %v153
  %194 = vmatprep.subr.bf16.mxu0 0
  %195 = vmatpush1.bf16.msra.mxu0 %v154
  %196 = vmatprep.subr.bf16.mxu0 0
  %197 = vmatpush1.bf16.msra.mxu0 %v155
  %198 = vmatprep.subr.bf16.mxu0 0
  %199 = vmatpush1.bf16.msra.mxu0 %v156
  %200 = vmatprep.subr.bf16.mxu0 0
  %201 = vmatpush1.bf16.msra.mxu0 %v157
  %202 = vmatprep.subr.bf16.mxu0 0
  %203 = vmatpush1.bf16.msra.mxu0 %v158
  %204 = vmatprep.subr.bf16.mxu0 0
  %205 = vmatpush1.bf16.msra.mxu0 %v159
  %206 = vmatprep.subr.bf16.mxu0 0
  %207 = vmatpush1.bf16.msra.mxu0 %v160
  %208 = vmatprep.subr.bf16.mxu0 0
  %209 = vmatpush1.bf16.msra.mxu0 %v161
  %210 = vmatprep.mubr.bf16.mxu0 %v75
  %211 = vmatmul.mubr.bf16.gmra.mrb[0].mxu0 %v74
  %v212 = vpop.f32.mrb[0].mxu0
  %v213 = vadd.f32 0.0, %v212
  %v214 = vpop.f32.mrb[0].mxu0
  %v215 = vpop.f32.mrb[0].mxu0
  %v216 = vadd.f32 0.0, %v215
  %v217 = vpop.f32.mrb[0].mxu0
  %218 = vmatprep.mubr.bf16.mxu0 %v77
  %219 = vmatmul.mubr.bf16.gmra.mrb[0].mxu0 %v76
  %v220 = vpop.f32.mrb[0].mxu0
  %v221 = vadd.f32 0.0, %v220
  %v222 = vpop.f32.mrb[0].mxu0
  %v223 = vpop.f32.mrb[0].mxu0
  %v224 = vadd.f32 0.0, %v223
  %v225 = vpop.f32.mrb[0].mxu0
  %226 = vdwg.mxu0
  %v227 = vadd.f32 %v22, %v213
  %v228 = vadd.f32 %v23, %v216
  %v229 = vadd.f32 %v24, %v221
  %v230 = vadd.f32 %v25, %v224
  %231 = vst [vmem:[#allocation2] sm:$0xff] %v227
  %232 = vst [vmem:[#allocation2 + $0x8] sm:$0xff] %v228
  %233 = vst [vmem:[#allocation2 + $0x10] sm:$0xff] %v229
  %234 = vst [vmem:[#allocation2 + $0x18] sm:$0xff] %v230
  // Predicated region
  $region14: #{generator_forward.33} parent=0 // pred_check
    %p235 = pneg %p14
  $region15: #{generator_forward.33} parent=0 // pred_check_branch
    %237 = sbr.rel (%p235) target = $region17
  $region16: #{generator_forward.33} parent=0 // pred_region
    %v238 = vld [vmem:[#allocation2] sm:$0xff]
    %v239 = vld [vmem:[#allocation2 + $0x8] sm:$0xff]
    %v240 = vld [vmem:[#allocation2 + $0x10] sm:$0xff]
    %v241 = vld [vmem:[#allocation2 + $0x18] sm:$0xff]
    %242 = vst [vmem:[%s2] sm:$0xff] %v238
    %243 = vst [vmem:[%s2 + $0x8] sm:$0xff] %v239
    %244 = vst [vmem:[%s2 + $0x10] sm:$0xff] %v240
    %245 = vst [vmem:[%s2 + $0x18] sm:$0xff] %v241
    %v246 = vadd.f32 %v238, %v239
    %v247 = vadd.f32 %v246, %v240
    %v248 = vadd.f32 %v247, %v241
    %v249 = vrot.slane %v248, 4
    %v250 = vadd.f32 %v248, %v249
    %v251 = vrot.slane %v250, 2
    %v252 = vadd.f32 %v250, %v251
    %v253 = vrot.slane %v252, 1
    %v254 = vadd.f32 %v252, %v253
    %v255 = vmul.f32 %v238, %v238
    %v256 = vmul.f32 %v239, %v239
    %v257 = vmul.f32 %v240, %v240
    %v258 = vmul.f32 %v241, %v241
    %v259 = vadd.f32 %v255, %v256
    %v260 = vadd.f32 %v259, %v257
    %v261 = vadd.f32 %v260, %v258
    %v262 = vrot.slane %v261, 4
    %v263 = vadd.f32 %v261, %v262
    %v264 = vrot.slane %v263, 2
    %v265 = vadd.f32 %v263, %v264
    %v266 = vrot.slane %v265, 1
    %v267 = vadd.f32 %v265, %v266
    %vm268 = vcmask 1040384
    %v269 = vsel %vm268, %v254, %v267
    %270 = vst [vmem:[%s3] sm:$0x3] %v269
  $region17: #{generator_forward.33} parent=0 // pred_fallthru
    _
  // Predicated region
  $region18: #{generator_forward.33} parent=0 // pred_check
    _
  $region19: #{generator_forward.33} parent=0 // pred_check_branch
    %272 = sbr.rel (0) target = $region21
  $region20: #{generator_forward.33} parent=0 // pred_region
    _
  $region21: #{generator_forward.33} parent=0 // pred_fallthru
    _
  // Predicated region
  $region22: #{generator_forward.33} parent=0 // pred_check
    _
  $region23: #{generator_forward.33} parent=0 // pred_check_branch
    %274 = sbr.rel (0) target = $region25
  $region24: #{generator_forward.33} parent=0 // pred_region
    _
  $region25: #{generator_forward.33} parent=0 // pred_fallthru
    _
  // Predicated region
  $region26: #{generator_forward.33} parent=0 // pred_check
    _
  $region27: #{generator_forward.33} parent=0 // pred_check_branch
    %276 = sbr.rel (0) target = $region29
  $region28: #{generator_forward.33} parent=0 // pred_region
    _
  $region29: #{generator_forward.33} parent=0 // pred_fallthru
    _
  // Predicated region
  $region30: #{generator_forward.33} parent=0 // pred_check
    _
  $region31: #{generator_forward.33} parent=0 // pred_check_branch
    %278 = sbr.rel (0) target = $region33
  $region32: #{generator_forward.33} parent=0 // pred_region
    _
  $region33: #{generator_forward.33} parent=0 // pred_fallthru
    _

// kernel: generator_forward.41
$region0: #{generator_forward.41}
  #allocation0 [shape = 'u32[]', space=smem, size = 0x4, offset = 0x4, fixed_abs, tag = 'smem constant byte address 0x4 - core index']
  #allocation1 [shape = 'u32[144,128]{1,0:T(1,128)}', space=vmem, size = 0x12000, scoped, tag = 'internal scratch']
  #allocation2 [shape = 'f32[128,128]{1,0:T(8,128)}', space=vmem, size = 0x10000, scoped, tag = 'scratch operand']
  %s0 = inlined_call_operand.vmem [shape: bf16[128,128], index: 0, kind: input, shape index: {}]
  %s1 = inlined_call_operand.vmem [shape: bf16[128,128], index: 1, kind: input, shape index: {}]
  %s2 = inlined_call_operand.vmem [shape: f32[128,128], index: 2, kind: output, shape index: {0}]
  %s3 = inlined_call_operand.vmem [shape: f32[1,2,128], index: 3, kind: output, shape index: {1}]
  %4 = xla_tuple %s2, %s3
  %s5 = sld [smem:[#allocation0]]
  $region34: #{generator_forward.41} parent=0
    _
  %s7 = ssub.s32 1, %s5
  %s8 = scalar_select 0, %s7, %s5
  // Predicated region
  $region2: #{generator_forward.41} parent=0 // pred_check
    _
  $region3: #{generator_forward.41} parent=0 // pred_check_branch
    %10 = sbr.rel (0) target = $region5
  $region4: #{generator_forward.41} parent=0 // pred_region
    _
  $region5: #{generator_forward.41} parent=0 // pred_fallthru
    _
  // Predicated region
  $region6: #{generator_forward.41} parent=0 // pred_check
    _
  $region7: #{generator_forward.41} parent=0 // pred_check_branch
    %12 = sbr.rel (0) target = $region9
  $region8: #{generator_forward.41} parent=0 // pred_region
    _
  $region9: #{generator_forward.41} parent=0 // pred_fallthru
    _
  %p14 = scmp.eq.s32.totalorder 0, 0
  // Predicated region
  $region10: #{generator_forward.41} parent=0 // pred_check
    %p15 = pneg %p14
  $region11: #{generator_forward.41} parent=0 // pred_check_branch
    %17 = sbr.rel (%p15) target = $region13
  $region12: #{generator_forward.41} parent=0 // pred_region
    %18 = vst [vmem:[#allocation2] sm:$0xff] 0.0
    %19 = vst [vmem:[#allocation2 + $0x8] sm:$0xff] 0.0
    %20 = vst [vmem:[#allocation2 + $0x10] sm:$0xff] 0.0
    %21 = vst [vmem:[#allocation2 + $0x18] sm:$0xff] 0.0
    %22 = vst [vmem:[#allocation2 + $0x20] sm:$0xff] 0.0
    %23 = vst [vmem:[#allocation2 + $0x28] sm:$0xff] 0.0
    %24 = vst [vmem:[#allocation2 + $0x30] sm:$0xff] 0.0
    %25 = vst [vmem:[#allocation2 + $0x38] sm:$0xff] 0.0
    %26 = vst [vmem:[#allocation2 + $0x40] sm:$0xff] 0.0
    %27 = vst [vmem:[#allocation2 + $0x48] sm:$0xff] 0.0
    %28 = vst [vmem:[#allocation2 + $0x50] sm:$0xff] 0.0
    %29 = vst [vmem:[#allocation2 + $0x58] sm:$0xff] 0.0
    %30 = vst [vmem:[#allocation2 + $0x60] sm:$0xff] 0.0
    %31 = vst [vmem:[#allocation2 + $0x68] sm:$0xff] 0.0
    %32 = vst [vmem:[#allocation2 + $0x70] sm:$0xff] 0.0
    %33 = vst [vmem:[#allocation2 + $0x78] sm:$0xff] 0.0
  $region13: #{generator_forward.41} parent=0 // pred_fallthru
    _
  %v34 = vld [vmem:[#allocation2] sm:$0xff]
  %v35 = vld [vmem:[#allocation2 + $0x8] sm:$0xff]
  %v36 = vld [vmem:[#allocation2 + $0x10] sm:$0xff]
  %v37 = vld [vmem:[#allocation2 + $0x18] sm:$0xff]
  %v38 = vld [vmem:[#allocation2 + $0x20] sm:$0xff]
  %v39 = vld [vmem:[#allocation2 + $0x28] sm:$0xff]
  %v40 = vld [vmem:[#allocation2 + $0x30] sm:$0xff]
  %v41 = vld [vmem:[#allocation2 + $0x38] sm:$0xff]
  %v42 = vld [vmem:[#allocation2 + $0x40] sm:$0xff]
  %v43 = vld [vmem:[#allocation2 + $0x48] sm:$0xff]
  %v44 = vld [vmem:[#allocation2 + $0x50] sm:$0xff]
  %v45 = vld [vmem:[#allocation2 + $0x58] sm:$0xff]
  %v46 = vld [vmem:[#allocation2 + $0x60] sm:$0xff]
  %v47 = vld [vmem:[#allocation2 + $0x68] sm:$0xff]
  %v48 = vld [vmem:[#allocation2 + $0x70] sm:$0xff]
  %v49 = vld [vmem:[#allocation2 + $0x78] sm:$0xff]
  %v50 = vld [vmem:[%s0] sm:$0xf]
  %v51 = vld [vmem:[%s0 + $0x4] sm:$0xf]
  %v52 = vld [vmem:[%s0 + $0x8] sm:$0xf]
  %v53 = vld [vmem:[%s0 + $0xc] sm:$0xf]
  %v54 = vld [vmem:[%s0 + $0x10] sm:$0xf]
  %v55 = vld [vmem:[%s0 + $0x14] sm:$0xf]
  %v56 = vld [vmem:[%s0 + $0x18] sm:$0xf]
  %v57 = vld [vmem:[%s0 + $0x1c] sm:$0xf]
  %v58 = vld [vmem:[%s0 + $0x20] sm:$0xf]
  %v59 = vld [vmem:[%s0 + $0x24] sm:$0xf]
  %v60 = vld [vmem:[%s0 + $0x28] sm:$0xf]
  %v61 = vld [vmem:[%s0 + $0x2c] sm:$0xf]
  %v62 = vld [vmem:[%s0 + $0x30] sm:$0xf]
  %v63 = vld [vmem:[%s0 + $0x34] sm:$0xf]
  %v64 = vld [vmem:[%s0 + $0x38] sm:$0xf]
  %v65 = vld [vmem:[%s0 + $0x3c] sm:$0xf]
  %v66 = vld [vmem:[%s1] sm:$0xf]
  %v67 = vld [vmem:[%s1 + $0x4] sm:$0xf]
  %v68 = vld [vmem:[%s1 + $0x8] sm:$0xf]
  %v69 = vld [vmem:[%s1 + $0xc] sm:$0xf]
  %v70 = vld [vmem:[%s1 + $0x10] sm:$0xf]
  %v71 = vld [vmem:[%s1 + $0x14] sm:$0xf]
  %v72 = vld [vmem:[%s1 + $0x18] sm:$0xf]
  %v73 = vld [vmem:[%s1 + $0x1c] sm:$0xf]
  %v74 = vld [vmem:[%s1 + $0x20] sm:$0xf]
  %v75 = vld [vmem:[%s1 + $0x24] sm:$0xf]
  %v76 = vld [vmem:[%s1 + $0x28] sm:$0xf]
  %v77 = vld [vmem:[%s1 + $0x2c] sm:$0xf]
  %v78 = vld [vmem:[%s1 + $0x30] sm:$0xf]
  %v79 = vld [vmem:[%s1 + $0x34] sm:$0xf]
  %v80 = vld [vmem:[%s1 + $0x38] sm:$0xf]
  %v81 = vld [vmem:[%s1 + $0x3c] sm:$0xf]
  %v98 = vunpack.c.l.b16 %v50
  %v99 = vunpack.c.l.b16 %v51
  %v100 = vunpack.c.l.b16 %v52
  %v101 = vunpack.c.l.b16 %v53
  %v102 = vunpack.c.l.b16 %v54
  %v103 = vunpack.c.l.b16 %v55
  %v104 = vunpack.c.l.b16 %v56
  %v105 = vunpack.c.l.b16 %v57
  %v106 = vunpack.c.l.b16 %v58
  %v107 = vunpack.c.l.b16 %v59
  %v108 = vunpack.c.l.b16 %v60
  %v109 = vunpack.c.l.b16 %v61
  %v110 = vunpack.c.l.b16 %v62
  %v111 = vunpack.c.l.b16 %v63
  %v112 = vunpack.c.l.b16 %v64
  %v113 = vunpack.c.l.b16 %v65
  %v114 = vpack.c.b16 %v99, %v98
  %v115 = vpack.c.b16 %v101, %v100
  %v116 = vpack.c.b16 %v103, %v102
  %v117 = vpack.c.b16 %v105, %v104
  %v118 = vpack.c.b16 %v107, %v106
  %v119 = vpack.c.b16 %v109, %v108
  %v120 = vpack.c.b16 %v111, %v110
  %v121 = vpack.c.b16 %v113, %v112
  %v146 = vunpack.c.l.b16 %v66
  %v147 = vunpack.c.l.b16 %v67
  %v148 = vunpack.c.l.b16 %v68
  %v149 = vunpack.c.l.b16 %v69
  %v150 = vunpack.c.l.b16 %v70
  %v151 = vunpack.c.l.b16 %v71
  %v152 = vunpack.c.l.b16 %v72
  %v153 = vunpack.c.l.b16 %v73
  %v154 = vunpack.c.l.b16 %v74
  %v155 = vunpack.c.l.b16 %v75
  %v156 = vunpack.c.l.b16 %v76
  %v157 = vunpack.c.l.b16 %v77
  %v158 = vunpack.c.l.b16 %v78
  %v159 = vunpack.c.l.b16 %v79
  %v160 = vunpack.c.l.b16 %v80
  %v161 = vunpack.c.l.b16 %v81
  %v162 = vpack.c.b16 %v147, %v146
  %v163 = vpack.c.b16 %v149, %v148
  %v164 = vpack.c.b16 %v151, %v150
  %v165 = vpack.c.b16 %v153, %v152
  %v166 = vpack.c.b16 %v155, %v154
  %v167 = vpack.c.b16 %v157, %v156
  %v168 = vpack.c.b16 %v159, %v158
  %v169 = vpack.c.b16 %v161, %v160
  %178 = vmatprep.subr.bf16.mxu0 0
  %179 = vmatpush1.bf16.msra.mxu0 %v162
  %180 = vmatprep.subr.bf16.mxu0 0
  %181 = vmatpush1.bf16.msra.mxu0 %v163
  %182 = vmatprep.subr.bf16.mxu0 0
  %183 = vmatpush1.bf16.msra.mxu0 %v164
  %184 = vmatprep.subr.bf16.mxu0 0
  %185 = vmatpush1.bf16.msra.mxu0 %v165
  %186 = vmatprep.subr.bf16.mxu0 0
  %187 = vmatpush1.bf16.msra.mxu0 %v166
  %188 = vmatprep.subr.bf16.mxu0 0
  %189 = vmatpush1.bf16.msra.mxu0 %v167
  %190 = vmatprep.subr.bf16.mxu0 0
  %191 = vmatpush1.bf16.msra.mxu0 %v168
  %192 = vmatprep.subr.bf16.mxu0 0
  %193 = vmatpush1.bf16.msra.mxu0 %v169
  %194 = vmatprep.subr.bf16.mxu0 0
  %195 = vmatpush1.bf16.msra.mxu0 0
  %196 = vmatprep.subr.bf16.mxu0 0
  %197 = vmatpush1.bf16.msra.mxu0 0
  %198 = vmatprep.subr.bf16.mxu0 0
  %199 = vmatpush1.bf16.msra.mxu0 0
  %200 = vmatprep.subr.bf16.mxu0 0
  %201 = vmatpush1.bf16.msra.mxu0 0
  %202 = vmatprep.subr.bf16.mxu0 0
  %203 = vmatpush1.bf16.msra.mxu0 0
  %204 = vmatprep.subr.bf16.mxu0 0
  %205 = vmatpush1.bf16.msra.mxu0 0
  %206 = vmatprep.subr.bf16.mxu0 0
  %207 = vmatpush1.bf16.msra.mxu0 0
  %208 = vmatprep.subr.bf16.mxu0 0
  %209 = vmatpush1.bf16.msra.mxu0 0
  %210 = vmatprep.mubr.bf16.mxu0 0
  %211 = vmatmul.mubr.bf16.gmra.mrb[0].mxu0 %v114
  %v212 = vpop.f32.mrb[0].mxu0
  %v213 = vadd.f32 0.0, %v212
  %v214 = vpop.f32.mrb[0].mxu0
  %v215 = vpop.f32.mrb[0].mxu0
  %v216 = vadd.f32 0.0, %v215
  %v217 = vpop.f32.mrb[0].mxu0
  %218 = vmatprep.mubr.bf16.mxu0 0
  %219 = vmatmul.mubr.bf16.gmra.mrb[0].mxu0 %v115
  %v220 = vpop.f32.mrb[0].mxu0
  %v221 = vadd.f32 0.0, %v220
  %v222 = vpop.f32.mrb[0].mxu0
  %v223 = vpop.f32.mrb[0].mxu0
  %v224 = vadd.f32 0.0, %v223
  %v225 = vpop.f32.mrb[0].mxu0
  %226 = vmatprep.mubr.bf16.mxu0 0
  %227 = vmatmul.mubr.bf16.gmra.mrb[0].mxu0 %v116
  %v228 = vpop.f32.mrb[0].mxu0
  %v229 = vadd.f32 0.0, %v228
  %v230 = vpop.f32.mrb[0].mxu0
  %v231 = vpop.f32.mrb[0].mxu0
  %v232 = vadd.f32 0.0, %v231
  %v233 = vpop.f32.mrb[0].mxu0
  %234 = vmatprep.mubr.bf16.mxu0 0
  %235 = vmatmul.mubr.bf16.gmra.mrb[0].mxu0 %v117
  %v236 = vpop.f32.mrb[0].mxu0
  %v237 = vadd.f32 0.0, %v236
  %v238 = vpop.f32.mrb[0].mxu0
  %v239 = vpop.f32.mrb[0].mxu0
  %v240 = vadd.f32 0.0, %v239
  %v241 = vpop.f32.mrb[0].mxu0
  %242 = vmatprep.mubr.bf16.mxu0 0
  %243 = vmatmul.mubr.bf16.gmra.mrb[0].mxu0 %v118
  %v244 = vpop.f32.mrb[0].mxu0
  %v245 = vadd.f32 0.0, %v244
  %v246 = vpop.f32.mrb[0].mxu0
  %v247 = vpop.f32.mrb[0].mxu0
  %v248 = vadd.f32 0.0, %v247
  %v249 = vpop.f32.mrb[0].mxu0
  %250 = vmatprep.mubr.bf16.mxu0 0
  %251 = vmatmul.mubr.bf16.gmra.mrb[0].mxu0 %v119
  %v252 = vpop.f32.mrb[0].mxu0
  %v253 = vadd.f32 0.0, %v252
  %v254 = vpop.f32.mrb[0].mxu0
  %v255 = vpop.f32.mrb[0].mxu0
  %v256 = vadd.f32 0.0, %v255
  %v257 = vpop.f32.mrb[0].mxu0
  %258 = vmatprep.mubr.bf16.mxu0 0
  %259 = vmatmul.mubr.bf16.gmra.mrb[0].mxu0 %v120
  %v260 = vpop.f32.mrb[0].mxu0
  %v261 = vadd.f32 0.0, %v260
  %v262 = vpop.f32.mrb[0].mxu0
  %v263 = vpop.f32.mrb[0].mxu0
  %v264 = vadd.f32 0.0, %v263
  %v265 = vpop.f32.mrb[0].mxu0
  %266 = vmatprep.mubr.bf16.mxu0 0
  %267 = vmatmul.mubr.bf16.gmra.mrb[0].mxu0 %v121
  %v268 = vpop.f32.mrb[0].mxu0
  %v269 = vadd.f32 0.0, %v268
  %v270 = vpop.f32.mrb[0].mxu0
  %v271 = vpop.f32.mrb[0].mxu0
  %v272 = vadd.f32 0.0, %v271
  %v273 = vpop.f32.mrb[0].mxu0
  %274 = vdwg.mxu0
  %v275 = vadd.f32 %v34, %v213
  %v276 = vadd.f32 %v35, %v216
  %v277 = vadd.f32 %v36, %v221
  %v278 = vadd.f32 %v37, %v224
  %v279 = vadd.f32 %v38, %v229
  %v280 = vadd.f32 %v39, %v232
  %v281 = vadd.f32 %v40, %v237
  %v282 = vadd.f32 %v41, %v240
  %v283 = vadd.f32 %v42, %v245
  %v284 = vadd.f32 %v43, %v248
  %v285 = vadd.f32 %v44, %v253
  %v286 = vadd.f32 %v45, %v256
  %v287 = vadd.f32 %v46, %v261
  %v288 = vadd.f32 %v47, %v264
  %v289 = vadd.f32 %v48, %v269
  %v290 = vadd.f32 %v49, %v272
  %291 = vst [vmem:[#allocation2] sm:$0xff] %v275
  %292 = vst [vmem:[#allocation2 + $0x8] sm:$0xff] %v276
  %293 = vst [vmem:[#allocation2 + $0x10] sm:$0xff] %v277
  %294 = vst [vmem:[#allocation2 + $0x18] sm:$0xff] %v278
  %295 = vst [vmem:[#allocation2 + $0x20] sm:$0xff] %v279
  %296 = vst [vmem:[#allocation2 + $0x28] sm:$0xff] %v280
  %297 = vst [vmem:[#allocation2 + $0x30] sm:$0xff] %v281
  %298 = vst [vmem:[#allocation2 + $0x38] sm:$0xff] %v282
  %299 = vst [vmem:[#allocation2 + $0x40] sm:$0xff] %v283
  %300 = vst [vmem:[#allocation2 + $0x48] sm:$0xff] %v284
  %301 = vst [vmem:[#allocation2 + $0x50] sm:$0xff] %v285
  %302 = vst [vmem:[#allocation2 + $0x58] sm:$0xff] %v286
  %303 = vst [vmem:[#allocation2 + $0x60] sm:$0xff] %v287
  %304 = vst [vmem:[#allocation2 + $0x68] sm:$0xff] %v288
  %305 = vst [vmem:[#allocation2 + $0x70] sm:$0xff] %v289
  %306 = vst [vmem:[#allocation2 + $0x78] sm:$0xff] %v290
  // Predicated region
  $region14: #{generator_forward.41} parent=0 // pred_check
    %p307 = pneg %p14
  $region15: #{generator_forward.41} parent=0 // pred_check_branch
    %309 = sbr.rel (%p307) target = $region17
  $region16: #{generator_forward.41} parent=0 // pred_region
    %v310 = vld [vmem:[#allocation2] sm:$0xff]
    %v311 = vld [vmem:[#allocation2 + $0x8] sm:$0xff]
    %v312 = vld [vmem:[#allocation2 + $0x10] sm:$0xff]
    %v313 = vld [vmem:[#allocation2 + $0x18] sm:$0xff]
    %v314 = vld [vmem:[#allocation2 + $0x20] sm:$0xff]
    %v315 = vld [vmem:[#allocation2 + $0x28] sm:$0xff]
    %v316 = vld [vmem:[#allocation2 + $0x30] sm:$0xff]
    %v317 = vld [vmem:[#allocation2 + $0x38] sm:$0xff]
    %v318 = vld [vmem:[#allocation2 + $0x40] sm:$0xff]
    %v319 = vld [vmem:[#allocation2 + $0x48] sm:$0xff]
    %v320 = vld [vmem:[#allocation2 + $0x50] sm:$0xff]
    %v321 = vld [vmem:[#allocation2 + $0x58] sm:$0xff]
    %v322 = vld [vmem:[#allocation2 + $0x60] sm:$0xff]
    %v323 = vld [vmem:[#allocation2 + $0x68] sm:$0xff]
    %v324 = vld [vmem:[#allocation2 + $0x70] sm:$0xff]
    %v325 = vld [vmem:[#allocation2 + $0x78] sm:$0xff]
    %326 = vst [vmem:[%s2] sm:$0xff] %v310
    %327 = vst [vmem:[%s2 + $0x8] sm:$0xff] %v311
    %328 = vst [vmem:[%s2 + $0x10] sm:$0xff] %v312
    %329 = vst [vmem:[%s2 + $0x18] sm:$0xff] %v313
    %330 = vst [vmem:[%s2 + $0x20] sm:$0xff] %v314
    %331 = vst [vmem:[%s2 + $0x28] sm:$0xff] %v315
    %332 = vst [vmem:[%s2 + $0x30] sm:$0xff] %v316
    %333 = vst [vmem:[%s2 + $0x38] sm:$0xff] %v317
    %334 = vst [vmem:[%s2 + $0x40] sm:$0xff] %v318
    %335 = vst [vmem:[%s2 + $0x48] sm:$0xff] %v319
    %336 = vst [vmem:[%s2 + $0x50] sm:$0xff] %v320
    %337 = vst [vmem:[%s2 + $0x58] sm:$0xff] %v321
    %338 = vst [vmem:[%s2 + $0x60] sm:$0xff] %v322
    %339 = vst [vmem:[%s2 + $0x68] sm:$0xff] %v323
    %340 = vst [vmem:[%s2 + $0x70] sm:$0xff] %v324
    %341 = vst [vmem:[%s2 + $0x78] sm:$0xff] %v325
    %v342 = vadd.f32 %v310, %v311
    %v343 = vadd.f32 %v342, %v312
    %v344 = vadd.f32 %v343, %v313
    %v345 = vadd.f32 %v344, %v314
    %v346 = vadd.f32 %v345, %v315
    %v347 = vadd.f32 %v346, %v316
    %v348 = vadd.f32 %v347, %v317
    %v349 = vadd.f32 %v348, %v318
    %v350 = vadd.f32 %v349, %v319
    %v351 = vadd.f32 %v350, %v320
    %v352 = vadd.f32 %v351, %v321
    %v353 = vadd.f32 %v352, %v322
    %v354 = vadd.f32 %v353, %v323
    %v355 = vadd.f32 %v354, %v324
    %v356 = vadd.f32 %v355, %v325
    %v357 = vrot.slane %v356, 4
    %v358 = vadd.f32 %v356, %v357
    %v359 = vrot.slane %v358, 2
    %v360 = vadd.f32 %v358, %v359
    %v361 = vrot.slane %v360, 1
    %v362 = vadd.f32 %v360, %v361
    %v363 = vmul.f32 %v310, %v310
    %v364 = vmul.f32 %v311, %v311
    %v365 = vmul.f32 %v312, %v312
    %v366 = vmul.f32 %v313, %v313
    %v367 = vmul.f32 %v314, %v314
    %v368 = vmul.f32 %v315, %v315
    %v369 = vmul.f32 %v316, %v316
    %v370 = vmul.f32 %v317, %v317
    %v371 = vmul.f32 %v318, %v318
    %v372 = vmul.f32 %v319, %v319
    %v373 = vmul.f32 %v320, %v320
    %v374 = vmul.f32 %v321, %v321
    %v375 = vmul.f32 %v322, %v322
    %v376 = vmul.f32 %v323, %v323
    %v377 = vmul.f32 %v324, %v324
    %v378 = vmul.f32 %v325, %v325
    %v379 = vadd.f32 %v363, %v364
    %v380 = vadd.f32 %v379, %v365
    %v381 = vadd.f32 %v380, %v366
    %v382 = vadd.f32 %v381, %v367
    %v383 = vadd.f32 %v382, %v368
    %v384 = vadd.f32 %v383, %v369
    %v385 = vadd.f32 %v384, %v370
    %v386 = vadd.f32 %v385, %v371
    %v387 = vadd.f32 %v386, %v372
    %v388 = vadd.f32 %v387, %v373
    %v389 = vadd.f32 %v388, %v374
    %v390 = vadd.f32 %v389, %v375
    %v391 = vadd.f32 %v390, %v376
    %v392 = vadd.f32 %v391, %v377
    %v393 = vadd.f32 %v392, %v378
    %v394 = vrot.slane %v393, 4
    %v395 = vadd.f32 %v393, %v394
    %v396 = vrot.slane %v395, 2
    %v397 = vadd.f32 %v395, %v396
    %v398 = vrot.slane %v397, 1
    %v399 = vadd.f32 %v397, %v398
    %vm400 = vcmask 1040384
    %v401 = vsel %vm400, %v362, %v399
    %402 = vst [vmem:[%s3] sm:$0x3] %v401
  $region17: #{generator_forward.41} parent=0 // pred_fallthru
    _
  // Predicated region
  $region18: #{generator_forward.41} parent=0 // pred_check
    _
  $region19: #{generator_forward.41} parent=0 // pred_check_branch
    %404 = sbr.rel (0) target = $region21
  $region20: #{generator_forward.41} parent=0 // pred_region
    _
  $region21: #{generator_forward.41} parent=0 // pred_fallthru
    _
  // Predicated region
  $region22: #{generator_forward.41} parent=0 // pred_check
    _
  $region23: #{generator_forward.41} parent=0 // pred_check_branch
    %406 = sbr.rel (0) target = $region25
  $region24: #{generator_forward.41} parent=0 // pred_region
    _
  $region25: #{generator_forward.41} parent=0 // pred_fallthru
    _
  // Predicated region
  $region26: #{generator_forward.41} parent=0 // pred_check
    _
  $region27: #{generator_forward.41} parent=0 // pred_check_branch
    %408 = sbr.rel (0) target = $region29
  $region28: #{generator_forward.41} parent=0 // pred_region
    _
  $region29: #{generator_forward.41} parent=0 // pred_fallthru
    _
  // Predicated region
  $region30: #{generator_forward.41} parent=0 // pred_check
    _
  $region31: #{generator_forward.41} parent=0 // pred_check_branch
    %410 = sbr.rel (0) target = $region33
  $region32: #{generator_forward.41} parent=0 // pred_region
    _
  $region33: #{generator_forward.41} parent=0 // pred_fallthru
    _

// kernel: generator_forward.44
$region0: #{generator_forward.44}
  #allocation0 [shape = 'u32[]', space=smem, size = 0x4, offset = 0x4, fixed_abs, tag = 'smem constant byte address 0x4 - core index']
  #allocation1 [shape = 'u32[144,128]{1,0:T(1,128)}', space=vmem, size = 0x12000, scoped, tag = 'internal scratch']
  %s0 = inlined_call_operand.vmem [shape: f32[128,128], index: 0, kind: input, shape index: {}]
  %s1 = inlined_call_operand.vmem [shape: f32[1,128], index: 1, kind: input, shape index: {}]
  %s2 = inlined_call_operand.vmem [shape: f32[1,128], index: 2, kind: input, shape index: {}]
  %s3 = inlined_call_operand.vmem [shape: bf16[128,128], index: 3, kind: output, shape index: {}]
  %s4 = sld [smem:[#allocation0]]
  $region22: #{generator_forward.44} parent=0
    _
  %s6 = ssub.s32 1, %s4
  %s7 = scalar_select 0, %s6, %s4
  // Predicated region
  $region2: #{generator_forward.44} parent=0 // pred_check
    _
  $region3: #{generator_forward.44} parent=0 // pred_check_branch
    %9 = sbr.rel (0) target = $region5
  $region4: #{generator_forward.44} parent=0 // pred_region
    _
  $region5: #{generator_forward.44} parent=0 // pred_fallthru
    _
  // Predicated region
  $region6: #{generator_forward.44} parent=0 // pred_check
    _
  $region7: #{generator_forward.44} parent=0 // pred_check_branch
    %11 = sbr.rel (0) target = $region9
  $region8: #{generator_forward.44} parent=0 // pred_region
    _
  $region9: #{generator_forward.44} parent=0 // pred_fallthru
    _
  // Predicated region
  $region10: #{generator_forward.44} parent=0 // pred_check
    _
  $region11: #{generator_forward.44} parent=0 // pred_check_branch
    %13 = sbr.rel (0) target = $region13
  $region12: #{generator_forward.44} parent=0 // pred_region
    _
  $region13: #{generator_forward.44} parent=0 // pred_fallthru
    _
  %v14 = vld [vmem:[%s0] sm:$0xff]
  %v15 = vld [vmem:[%s0 + $0x8] sm:$0xff]
  %v16 = vld [vmem:[%s0 + $0x10] sm:$0xff]
  %v17 = vld [vmem:[%s0 + $0x18] sm:$0xff]
  %v18 = vld [vmem:[%s0 + $0x20] sm:$0xff]
  %v19 = vld [vmem:[%s0 + $0x28] sm:$0xff]
  %v20 = vld [vmem:[%s0 + $0x30] sm:$0xff]
  %v21 = vld [vmem:[%s0 + $0x38] sm:$0xff]
  %v22 = vld [vmem:[%s0 + $0x40] sm:$0xff]
  %v23 = vld [vmem:[%s0 + $0x48] sm:$0xff]
  %v24 = vld [vmem:[%s0 + $0x50] sm:$0xff]
  %v25 = vld [vmem:[%s0 + $0x58] sm:$0xff]
  %v26 = vld [vmem:[%s0 + $0x60] sm:$0xff]
  %v27 = vld [vmem:[%s0 + $0x68] sm:$0xff]
  %v28 = vld [vmem:[%s0 + $0x70] sm:$0xff]
  %v29 = vld [vmem:[%s0 + $0x78] sm:$0xff]
  %v30 = vld [vmem:[%s1] sm:$0x1]
  %v32 = vlaneseq
  %v33 = vshrl.u32 %v32, 7
  %v34 = vsub.s32 0, %v33
  %v35 = vrot.slane %v30, %v34
  %v37 = vmul.f32 %v14, %v35
  %v38 = vmul.f32 %v15, %v35
  %v39 = vmul.f32 %v16, %v35
  %v40 = vmul.f32 %v17, %v35
  %v41 = vmul.f32 %v18, %v35
  %v42 = vmul.f32 %v19, %v35
  %v43 = vmul.f32 %v20, %v35
  %v44 = vmul.f32 %v21, %v35
  %v45 = vmul.f32 %v22, %v35
  %v46 = vmul.f32 %v23, %v35
  %v47 = vmul.f32 %v24, %v35
  %v48 = vmul.f32 %v25, %v35
  %v49 = vmul.f32 %v26, %v35
  %v50 = vmul.f32 %v27, %v35
  %v51 = vmul.f32 %v28, %v35
  %v52 = vmul.f32 %v29, %v35
  %v53 = vld [vmem:[%s2] sm:$0x1]
  %v55 = vlaneseq
  %v56 = vshrl.u32 %v55, 7
  %v57 = vsub.s32 0, %v56
  %v58 = vrot.slane %v53, %v57
  %v60 = vadd.f32 %v37, %v58
  %v61 = vadd.f32 %v38, %v58
  %v62 = vadd.f32 %v39, %v58
  %v63 = vadd.f32 %v40, %v58
  %v64 = vadd.f32 %v41, %v58
  %v65 = vadd.f32 %v42, %v58
  %v66 = vadd.f32 %v43, %v58
  %v67 = vadd.f32 %v44, %v58
  %v68 = vadd.f32 %v45, %v58
  %v69 = vadd.f32 %v46, %v58
  %v70 = vadd.f32 %v47, %v58
  %v71 = vadd.f32 %v48, %v58
  %v72 = vadd.f32 %v49, %v58
  %v73 = vadd.f32 %v50, %v58
  %v74 = vadd.f32 %v51, %v58
  %v75 = vadd.f32 %v52, %v58
  %v76 = vmax.f32 %v60, 0.0
  %v77 = vmax.f32 %v61, 0.0
  %v78 = vmax.f32 %v62, 0.0
  %v79 = vmax.f32 %v63, 0.0
  %v80 = vmax.f32 %v64, 0.0
  %v81 = vmax.f32 %v65, 0.0
  %v82 = vmax.f32 %v66, 0.0
  %v83 = vmax.f32 %v67, 0.0
  %v84 = vmax.f32 %v68, 0.0
  %v85 = vmax.f32 %v69, 0.0
  %v86 = vmax.f32 %v70, 0.0
  %v87 = vmax.f32 %v71, 0.0
  %v88 = vmax.f32 %v72, 0.0
  %v89 = vmax.f32 %v73, 0.0
  %v90 = vmax.f32 %v74, 0.0
  %v91 = vmax.f32 %v75, 0.0
  %v92 = vpack.c.bf16 %v77, %v76
  %v93 = vpack.c.bf16 %v79, %v78
  %v94 = vpack.c.bf16 %v81, %v80
  %v95 = vpack.c.bf16 %v83, %v82
  %v96 = vpack.c.bf16 %v85, %v84
  %v97 = vpack.c.bf16 %v87, %v86
  %v98 = vpack.c.bf16 %v89, %v88
  %v99 = vpack.c.bf16 %v91, %v90
  %v108 = vunpack.c.l.b16 %v92
  %v109 = vunpack.c.h.b16 %v92
  %v110 = vunpack.c.l.b16 %v93
  %v111 = vunpack.c.h.b16 %v93
  %v112 = vunpack.c.l.b16 %v94
  %v113 = vunpack.c.h.b16 %v94
  %v114 = vunpack.c.l.b16 %v95
  %v115 = vunpack.c.h.b16 %v95
  %v116 = vunpack.c.l.b16 %v96
  %v117 = vunpack.c.h.b16 %v96
  %v118 = vunpack.c.l.b16 %v97
  %v119 = vunpack.c.h.b16 %v97
  %v120 = vunpack.c.l.b16 %v98
  %v121 = vunpack.c.h.b16 %v98
  %v122 = vunpack.c.l.b16 %v99
  %v123 = vunpack.c.h.b16 %v99
  %v124 = vpack.c.b16 %v108, %v108
  %v125 = vpack.c.b16 %v109, %v109
  %v126 = vpack.c.b16 %v110, %v110
  %v127 = vpack.c.b16 %v111, %v111
  %v128 = vpack.c.b16 %v112, %v112
  %v129 = vpack.c.b16 %v113, %v113
  %v130 = vpack.c.b16 %v114, %v114
  %v131 = vpack.c.b16 %v115, %v115
  %v132 = vpack.c.b16 %v116, %v116
  %v133 = vpack.c.b16 %v117, %v117
  %v134 = vpack.c.b16 %v118, %v118
  %v135 = vpack.c.b16 %v119, %v119
  %v136 = vpack.c.b16 %v120, %v120
  %v137 = vpack.c.b16 %v121, %v121
  %v138 = vpack.c.b16 %v122, %v122
  %v139 = vpack.c.b16 %v123, %v123
  %156 = vst [vmem:[%s3] sm:$0xf] %v124
  %157 = vst [vmem:[%s3 + $0x4] sm:$0xf] %v125
  %158 = vst [vmem:[%s3 + $0x8] sm:$0xf] %v126
  %159 = vst [vmem:[%s3 + $0xc] sm:$0xf] %v127
  %160 = vst [vmem:[%s3 + $0x10] sm:$0xf] %v128
  %161 = vst [vmem:[%s3 + $0x14] sm:$0xf] %v129
  %162 = vst [vmem:[%s3 + $0x18] sm:$0xf] %v130
  %163 = vst [vmem:[%s3 + $0x1c] sm:$0xf] %v131
  %164 = vst [vmem:[%s3 + $0x20] sm:$0xf] %v132
  %165 = vst [vmem:[%s3 + $0x24] sm:$0xf] %v133
  %166 = vst [vmem:[%s3 + $0x28] sm:$0xf] %v134
  %167 = vst [vmem:[%s3 + $0x2c] sm:$0xf] %v135
  %168 = vst [vmem:[%s3 + $0x30] sm:$0xf] %v136
  %169 = vst [vmem:[%s3 + $0x34] sm:$0xf] %v137
  %170 = vst [vmem:[%s3 + $0x38] sm:$0xf] %v138
  %171 = vst [vmem:[%s3 + $0x3c] sm:$0xf] %v139
  // Predicated region
  $region14: #{generator_forward.44} parent=0 // pred_check
    _
  $region15: #{generator_forward.44} parent=0 // pred_check_branch
    %173 = sbr.rel (0) target = $region17
  $region16: #{generator_forward.44} parent=0 // pred_region
    _
  $region17: #{generator_forward.44} parent=0 // pred_fallthru
    _
  // Predicated region
  $region18: #{generator_forward.44} parent=0 // pred_check
    _
  $region19: #{generator_forward.44} parent=0 // pred_check_branch
    %175 = sbr.rel (0) target = $region21
  $region20: #{generator_forward.44} parent=0 // pred_region
    _
  $region21: #{generator_forward.44} parent=0 // pred_fallthru
    _

// kernel: generator_forward.48
$region0: #{generator_forward.48}
  #allocation0 [shape = 'u32[]', space=smem, size = 0x4, offset = 0x4, fixed_abs, tag = 'smem constant byte address 0x4 - core index']
  #allocation1 [shape = 'u32[144,128]{1,0:T(1,128)}', space=vmem, size = 0x12000, scoped, tag = 'internal scratch']
  #allocation2 [shape = 'f32[512,128]{1,0:T(8,128)}', space=vmem, size = 0x40000, scoped, tag = 'scratch operand']
  %s0 = inlined_call_operand.vmem [shape: bf16[512,128], index: 0, kind: input, shape index: {}]
  %s1 = inlined_call_operand.vmem [shape: bf16[128,128], index: 1, kind: input, shape index: {}]
  %s2 = inlined_call_operand.vmem [shape: f32[512,128], index: 2, kind: output, shape index: {0}]
  %s3 = inlined_call_operand.vmem [shape: f32[1,2,128], index: 3, kind: output, shape index: {1}]
  %4 = xla_tuple %s2, %s3
  %s5 = sld [smem:[#allocation0]]
  $region34: #{generator_forward.48} parent=0
    _
  %s7 = ssub.s32 1, %s5
  %s8 = scalar_select 0, %s7, %s5
  // Predicated region
  $region2: #{generator_forward.48} parent=0 // pred_check
    _
  $region3: #{generator_forward.48} parent=0 // pred_check_branch
    %10 = sbr.rel (0) target = $region5
  $region4: #{generator_forward.48} parent=0 // pred_region
    _
  $region5: #{generator_forward.48} parent=0 // pred_fallthru
    _
  // Predicated region
  $region6: #{generator_forward.48} parent=0 // pred_check
    _
  $region7: #{generator_forward.48} parent=0 // pred_check_branch
    %12 = sbr.rel (0) target = $region9
  $region8: #{generator_forward.48} parent=0 // pred_region
    _
  $region9: #{generator_forward.48} parent=0 // pred_fallthru
    _
  %p14 = scmp.eq.s32.totalorder 0, 0
  // Predicated region
  $region10: #{generator_forward.48} parent=0 // pred_check
    %p15 = pneg %p14
  $region11: #{generator_forward.48} parent=0 // pred_check_branch
    %17 = sbr.rel (%p15) target = $region13
  $region12: #{generator_forward.48} parent=0 // pred_region
    %18 = vst [vmem:[#allocation2] sm:$0xff] 0.0
    %19 = vst [vmem:[#allocation2 + $0x8] sm:$0xff] 0.0
    %20 = vst [vmem:[#allocation2 + $0x10] sm:$0xff] 0.0
    %21 = vst [vmem:[#allocation2 + $0x18] sm:$0xff] 0.0
    %22 = vst [vmem:[#allocation2 + $0x20] sm:$0xff] 0.0
    %23 = vst [vmem:[#allocation2 + $0x28] sm:$0xff] 0.0
    %24 = vst [vmem:[#allocation2 + $0x30] sm:$0xff] 0.0
    %25 = vst [vmem:[#allocation2 + $0x38] sm:$0xff] 0.0
    %26 = vst [vmem:[#allocation2 + $0x40] sm:$0xff] 0.0
    %27 = vst [vmem:[#allocation2 + $0x48] sm:$0xff] 0.0
    %28 = vst [vmem:[#allocation2 + $0x50] sm:$0xff] 0.0
    %29 = vst [vmem:[#allocation2 + $0x58] sm:$0xff] 0.0
    %30 = vst [vmem:[#allocation2 + $0x60] sm:$0xff] 0.0
    %31 = vst [vmem:[#allocation2 + $0x68] sm:$0xff] 0.0
    %32 = vst [vmem:[#allocation2 + $0x70] sm:$0xff] 0.0
    %33 = vst [vmem:[#allocation2 + $0x78] sm:$0xff] 0.0
    %34 = vst [vmem:[#allocation2 + $0x80] sm:$0xff] 0.0
    %35 = vst [vmem:[#allocation2 + $0x88] sm:$0xff] 0.0
    %36 = vst [vmem:[#allocation2 + $0x90] sm:$0xff] 0.0
    %37 = vst [vmem:[#allocation2 + $0x98] sm:$0xff] 0.0
    %38 = vst [vmem:[#allocation2 + $0xa0] sm:$0xff] 0.0
    %39 = vst [vmem:[#allocation2 + $0xa8] sm:$0xff] 0.0
    %40 = vst [vmem:[#allocation2 + $0xb0] sm:$0xff] 0.0
    %41 = vst [vmem:[#allocation2 + $0xb8] sm:$0xff] 0.0
    %42 = vst [vmem:[#allocation2 + $0xc0] sm:$0xff] 0.0
    %43 = vst [vmem:[#allocation2 + $0xc8] sm:$0xff] 0.0
    %44 = vst [vmem:[#allocation2 + $0xd0] sm:$0xff] 0.0
    %45 = vst [vmem:[#allocation2 + $0xd8] sm:$0xff] 0.0
    %46 = vst [vmem:[#allocation2 + $0xe0] sm:$0xff] 0.0
    %47 = vst [vmem:[#allocation2 + $0xe8] sm:$0xff] 0.0
    %48 = vst [vmem:[#allocation2 + $0xf0] sm:$0xff] 0.0
    %49 = vst [vmem:[#allocation2 + $0xf8] sm:$0xff] 0.0
    %50 = vst [vmem:[#allocation2 + $0x100] sm:$0xff] 0.0
    %51 = vst [vmem:[#allocation2 + $0x108] sm:$0xff] 0.0
    %52 = vst [vmem:[#allocation2 + $0x110] sm:$0xff] 0.0
    %53 = vst [vmem:[#allocation2 + $0x118] sm:$0xff] 0.0
    %54 = vst [vmem:[#allocation2 + $0x120] sm:$0xff] 0.0
    %55 = vst [vmem:[#allocation2 + $0x128] sm:$0xff] 0.0
    %56 = vst [vmem:[#allocation2 + $0x130] sm:$0xff] 0.0
    %57 = vst [vmem:[#allocation2 + $0x138] sm:$0xff] 0.0
    %58 = vst [vmem:[#allocation2 + $0x140] sm:$0xff] 0.0
    %59 = vst [vmem:[#allocation2 + $0x148] sm:$0xff] 0.0
    %60 = vst [vmem:[#allocation2 + $0x150] sm:$0xff] 0.0
    %61 = vst [vmem:[#allocation2 + $0x158] sm:$0xff] 0.0
    %62 = vst [vmem:[#allocation2 + $0x160] sm:$0xff] 0.0
    %63 = vst [vmem:[#allocation2 + $0x168] sm:$0xff] 0.0
    %64 = vst [vmem:[#allocation2 + $0x170] sm:$0xff] 0.0
    %65 = vst [vmem:[#allocation2 + $0x178] sm:$0xff] 0.0
    %66 = vst [vmem:[#allocation2 + $0x180] sm:$0xff] 0.0
    %67 = vst [vmem:[#allocation2 + $0x188] sm:$0xff] 0.0
    %68 = vst [vmem:[#allocation2 + $0x190] sm:$0xff] 0.0
    %69 = vst [vmem:[#allocation2 + $0x198] sm:$0xff] 0.0
    %70 = vst [vmem:[#allocation2 + $0x1a0] sm:$0xff] 0.0
    %71 = vst [vmem:[#allocation2 + $0x1a8] sm:$0xff] 0.0
    %72 = vst [vmem:[#allocation2 + $0x1b0] sm:$0xff] 0.0
    %73 = vst [vmem:[#allocation2 + $0x1b8] sm:$0xff] 0.0
    %74 = vst [vmem:[#allocation2 + $0x1c0] sm:$0xff] 0.0
    %75 = vst [vmem:[#allocation2 + $0x1c8] sm:$0xff] 0.0
    %76 = vst [vmem:[#allocation2 + $0x1d0] sm:$0xff] 0.0
    %77 = vst [vmem:[#allocation2 + $0x1d8] sm:$0xff] 0.0
    %78 = vst [vmem:[#allocation2 + $0x1e0] sm:$0xff] 0.0
    %79 = vst [vmem:[#allocation2 + $0x1e8] sm:$0xff] 0.0
    %80 = vst [vmem:[#allocation2 + $0x1f0] sm:$0xff] 0.0
    %81 = vst [vmem:[#allocation2 + $0x1f8] sm:$0xff] 0.0
  $region13: #{generator_forward.48} parent=0 // pred_fallthru
    _
  %v82 = vld [vmem:[#allocation2] sm:$0xff]
  %v83 = vld [vmem:[#allocation2 + $0x8] sm:$0xff]
  %v84 = vld [vmem:[#allocation2 + $0x10] sm:$0xff]
  %v85 = vld [vmem:[#allocation2 + $0x18] sm:$0xff]
  %v86 = vld [vmem:[#allocation2 + $0x20] sm:$0xff]
  %v87 = vld [vmem:[#allocation2 + $0x28] sm:$0xff]
  %v88 = vld [vmem:[#allocation2 + $0x30] sm:$0xff]
  %v89 = vld [vmem:[#allocation2 + $0x38] sm:$0xff]
  %v90 = vld [vmem:[#allocation2 + $0x40] sm:$0xff]
  %v91 = vld [vmem:[#allocation2 + $0x48] sm:$0xff]
  %v92 = vld [vmem:[#allocation2 + $0x50] sm:$0xff]
  %v93 = vld [vmem:[#allocation2 + $0x58] sm:$0xff]
  %v94 = vld [vmem:[#allocation2 + $0x60] sm:$0xff]
  %v95 = vld [vmem:[#allocation2 + $0x68] sm:$0xff]
  %v96 = vld [vmem:[#allocation2 + $0x70] sm:$0xff]
  %v97 = vld [vmem:[#allocation2 + $0x78] sm:$0xff]
  %v98 = vld [vmem:[#allocation2 + $0x80] sm:$0xff]
  %v99 = vld [vmem:[#allocation2 + $0x88] sm:$0xff]
  %v100 = vld [vmem:[#allocation2 + $0x90] sm:$0xff]
  %v101 = vld [vmem:[#allocation2 + $0x98] sm:$0xff]
  %v102 = vld [vmem:[#allocation2 + $0xa0] sm:$0xff]
  %v103 = vld [vmem:[#allocation2 + $0xa8] sm:$0xff]
  %v104 = vld [vmem:[#allocation2 + $0xb0] sm:$0xff]
  %v105 = vld [vmem:[#allocation2 + $0xb8] sm:$0xff]
  %v106 = vld [vmem:[#allocation2 + $0xc0] sm:$0xff]
  %v107 = vld [vmem:[#allocation2 + $0xc8] sm:$0xff]
  %v108 = vld [vmem:[#allocation2 + $0xd0] sm:$0xff]
  %v109 = vld [vmem:[#allocation2 + $0xd8] sm:$0xff]
  %v110 = vld [vmem:[#allocation2 + $0xe0] sm:$0xff]
  %v111 = vld [vmem:[#allocation2 + $0xe8] sm:$0xff]
  %v112 = vld [vmem:[#allocation2 + $0xf0] sm:$0xff]
  %v113 = vld [vmem:[#allocation2 + $0xf8] sm:$0xff]
  %v114 = vld [vmem:[#allocation2 + $0x100] sm:$0xff]
  %v115 = vld [vmem:[#allocation2 + $0x108] sm:$0xff]
  %v116 = vld [vmem:[#allocation2 + $0x110] sm:$0xff]
  %v117 = vld [vmem:[#allocation2 + $0x118] sm:$0xff]
  %v118 = vld [vmem:[#allocation2 + $0x120] sm:$0xff]
  %v119 = vld [vmem:[#allocation2 + $0x128] sm:$0xff]
  %v120 = vld [vmem:[#allocation2 + $0x130] sm:$0xff]
  %v121 = vld [vmem:[#allocation2 + $0x138] sm:$0xff]
  %v122 = vld [vmem:[#allocation2 + $0x140] sm:$0xff]
  %v123 = vld [vmem:[#allocation2 + $0x148] sm:$0xff]
  %v124 = vld [vmem:[#allocation2 + $0x150] sm:$0xff]
  %v125 = vld [vmem:[#allocation2 + $0x158] sm:$0xff]
  %v126 = vld [vmem:[#allocation2 + $0x160] sm:$0xff]
  %v127 = vld [vmem:[#allocation2 + $0x168] sm:$0xff]
  %v128 = vld [vmem:[#allocation2 + $0x170] sm:$0xff]
  %v129 = vld [vmem:[#allocation2 + $0x178] sm:$0xff]
  %v130 = vld [vmem:[#allocation2 + $0x180] sm:$0xff]
  %v131 = vld [vmem:[#allocation2 + $0x188] sm:$0xff]
  %v132 = vld [vmem:[#allocation2 + $0x190] sm:$0xff]
  %v133 = vld [vmem:[#allocation2 + $0x198] sm:$0xff]
  %v134 = vld [vmem:[#allocation2 + $0x1a0] sm:$0xff]
  %v135 = vld [vmem:[#allocation2 + $0x1a8] sm:$0xff]
  %v136 = vld [vmem:[#allocation2 + $0x1b0] sm:$0xff]
  %v137 = vld [vmem:[#allocation2 + $0x1b8] sm:$0xff]
  %v138 = vld [vmem:[#allocation2 + $0x1c0] sm:$0xff]
  %v139 = vld [vmem:[#allocation2 + $0x1c8] sm:$0xff]
  %v140 = vld [vmem:[#allocation2 + $0x1d0] sm:$0xff]
  %v141 = vld [vmem:[#allocation2 + $0x1d8] sm:$0xff]
  %v142 = vld [vmem:[#allocation2 + $0x1e0] sm:$0xff]
  %v143 = vld [vmem:[#allocation2 + $0x1e8] sm:$0xff]
  %v144 = vld [vmem:[#allocation2 + $0x1f0] sm:$0xff]
  %v145 = vld [vmem:[#allocation2 + $0x1f8] sm:$0xff]
  %v146 = vld [vmem:[%s0] sm:$0xf]
  %v147 = vld [vmem:[%s0 + $0x4] sm:$0xf]
  %v148 = vld [vmem:[%s0 + $0x8] sm:$0xf]
  %v149 = vld [vmem:[%s0 + $0xc] sm:$0xf]
  %v150 = vld [vmem:[%s0 + $0x10] sm:$0xf]
  %v151 = vld [vmem:[%s0 + $0x14] sm:$0xf]
  %v152 = vld [vmem:[%s0 + $0x18] sm:$0xf]
  %v153 = vld [vmem:[%s0 + $0x1c] sm:$0xf]
  %v154 = vld [vmem:[%s0 + $0x20] sm:$0xf]
  %v155 = vld [vmem:[%s0 + $0x24] sm:$0xf]
  %v156 = vld [vmem:[%s0 + $0x28] sm:$0xf]
  %v157 = vld [vmem:[%s0 + $0x2c] sm:$0xf]
  %v158 = vld [vmem:[%s0 + $0x30] sm:$0xf]
  %v159 = vld [vmem:[%s0 + $0x34] sm:$0xf]
  %v160 = vld [vmem:[%s0 + $0x38] sm:$0xf]
  %v161 = vld [vmem:[%s0 + $0x3c] sm:$0xf]
  %v162 = vld [vmem:[%s0 + $0x40] sm:$0xf]
  %v163 = vld [vmem:[%s0 + $0x44] sm:$0xf]
  %v164 = vld [vmem:[%s0 + $0x48] sm:$0xf]
  %v165 = vld [vmem:[%s0 + $0x4c] sm:$0xf]
  %v166 = vld [vmem:[%s0 + $0x50] sm:$0xf]
  %v167 = vld [vmem:[%s0 + $0x54] sm:$0xf]
  %v168 = vld [vmem:[%s0 + $0x58] sm:$0xf]
  %v169 = vld [vmem:[%s0 + $0x5c] sm:$0xf]
  %v170 = vld [vmem:[%s0 + $0x60] sm:$0xf]
  %v171 = vld [vmem:[%s0 + $0x64] sm:$0xf]
  %v172 = vld [vmem:[%s0 + $0x68] sm:$0xf]
  %v173 = vld [vmem:[%s0 + $0x6c] sm:$0xf]
  %v174 = vld [vmem:[%s0 + $0x70] sm:$0xf]
  %v175 = vld [vmem:[%s0 + $0x74] sm:$0xf]
  %v176 = vld [vmem:[%s0 + $0x78] sm:$0xf]
  %v177 = vld [vmem:[%s0 + $0x7c] sm:$0xf]
  %v178 = vld [vmem:[%s0 + $0x80] sm:$0xf]
  %v179 = vld [vmem:[%s0 + $0x84] sm:$0xf]
  %v180 = vld [vmem:[%s0 + $0x88] sm:$0xf]
  %v181 = vld [vmem:[%s0 + $0x8c] sm:$0xf]
  %v182 = vld [vmem:[%s0 + $0x90] sm:$0xf]
  %v183 = vld [vmem:[%s0 + $0x94] sm:$0xf]
  %v184 = vld [vmem:[%s0 + $0x98] sm:$0xf]
  %v185 = vld [vmem:[%s0 + $0x9c] sm:$0xf]
  %v186 = vld [vmem:[%s0 + $0xa0] sm:$0xf]
  %v187 = vld [vmem:[%s0 + $0xa4] sm:$0xf]
  %v188 = vld [vmem:[%s0 + $0xa8] sm:$0xf]
  %v189 = vld [vmem:[%s0 + $0xac] sm:$0xf]
  %v190 = vld [vmem:[%s0 + $0xb0] sm:$0xf]
  %v191 = vld [vmem:[%s0 + $0xb4] sm:$0xf]
  %v192 = vld [vmem:[%s0 + $0xb8] sm:$0xf]
  %v193 = vld [vmem:[%s0 + $0xbc] sm:$0xf]
  %v194 = vld [vmem:[%s0 + $0xc0] sm:$0xf]
  %v195 = vld [vmem:[%s0 + $0xc4] sm:$0xf]
  %v196 = vld [vmem:[%s0 + $0xc8] sm:$0xf]
  %v197 = vld [vmem:[%s0 + $0xcc] sm:$0xf]
  %v198 = vld [vmem:[%s0 + $0xd0] sm:$0xf]
  %v199 = vld [vmem:[%s0 + $0xd4] sm:$0xf]
  %v200 = vld [vmem:[%s0 + $0xd8] sm:$0xf]
  %v201 = vld [vmem:[%s0 + $0xdc] sm:$0xf]
  %v202 = vld [vmem:[%s0 + $0xe0] sm:$0xf]
  %v203 = vld [vmem:[%s0 + $0xe4] sm:$0xf]
  %v204 = vld [vmem:[%s0 + $0xe8] sm:$0xf]
  %v205 = vld [vmem:[%s0 + $0xec] sm:$0xf]
  %v206 = vld [vmem:[%s0 + $0xf0] sm:$0xf]
  %v207 = vld [vmem:[%s0 + $0xf4] sm:$0xf]
  %v208 = vld [vmem:[%s0 + $0xf8] sm:$0xf]
  %v209 = vld [vmem:[%s0 + $0xfc] sm:$0xf]
  %v210 = vld [vmem:[%s1] sm:$0xf]
  %v211 = vld [vmem:[%s1 + $0x4] sm:$0xf]
  %v212 = vld [vmem:[%s1 + $0x8] sm:$0xf]
  %v213 = vld [vmem:[%s1 + $0xc] sm:$0xf]
  %v214 = vld [vmem:[%s1 + $0x10] sm:$0xf]
  %v215 = vld [vmem:[%s1 + $0x14] sm:$0xf]
  %v216 = vld [vmem:[%s1 + $0x18] sm:$0xf]
  %v217 = vld [vmem:[%s1 + $0x1c] sm:$0xf]
  %v218 = vld [vmem:[%s1 + $0x20] sm:$0xf]
  %v219 = vld [vmem:[%s1 + $0x24] sm:$0xf]
  %v220 = vld [vmem:[%s1 + $0x28] sm:$0xf]
  %v221 = vld [vmem:[%s1 + $0x2c] sm:$0xf]
  %v222 = vld [vmem:[%s1 + $0x30] sm:$0xf]
  %v223 = vld [vmem:[%s1 + $0x34] sm:$0xf]
  %v224 = vld [vmem:[%s1 + $0x38] sm:$0xf]
  %v225 = vld [vmem:[%s1 + $0x3c] sm:$0xf]
  %v290 = vunpack.c.l.b16 %v146
  %v291 = vunpack.c.l.b16 %v147
  %v292 = vunpack.c.l.b16 %v148
  %v293 = vunpack.c.l.b16 %v149
  %v294 = vunpack.c.l.b16 %v150
  %v295 = vunpack.c.l.b16 %v151
  %v296 = vunpack.c.l.b16 %v152
  %v297 = vunpack.c.l.b16 %v153
  %v298 = vunpack.c.l.b16 %v154
  %v299 = vunpack.c.l.b16 %v155
  %v300 = vunpack.c.l.b16 %v156
  %v301 = vunpack.c.l.b16 %v157
  %v302 = vunpack.c.l.b16 %v158
  %v303 = vunpack.c.l.b16 %v159
  %v304 = vunpack.c.l.b16 %v160
  %v305 = vunpack.c.l.b16 %v161
  %v306 = vunpack.c.l.b16 %v162
  %v307 = vunpack.c.l.b16 %v163
  %v308 = vunpack.c.l.b16 %v164
  %v309 = vunpack.c.l.b16 %v165
  %v310 = vunpack.c.l.b16 %v166
  %v311 = vunpack.c.l.b16 %v167
  %v312 = vunpack.c.l.b16 %v168
  %v313 = vunpack.c.l.b16 %v169
  %v314 = vunpack.c.l.b16 %v170
  %v315 = vunpack.c.l.b16 %v171
  %v316 = vunpack.c.l.b16 %v172
  %v317 = vunpack.c.l.b16 %v173
  %v318 = vunpack.c.l.b16 %v174
  %v319 = vunpack.c.l.b16 %v175
  %v320 = vunpack.c.l.b16 %v176
  %v321 = vunpack.c.l.b16 %v177
  %v322 = vunpack.c.l.b16 %v178
  %v323 = vunpack.c.l.b16 %v179
  %v324 = vunpack.c.l.b16 %v180
  %v325 = vunpack.c.l.b16 %v181
  %v326 = vunpack.c.l.b16 %v182
  %v327 = vunpack.c.l.b16 %v183
  %v328 = vunpack.c.l.b16 %v184
  %v329 = vunpack.c.l.b16 %v185
  %v330 = vunpack.c.l.b16 %v186
  %v331 = vunpack.c.l.b16 %v187
  %v332 = vunpack.c.l.b16 %v188
  %v333 = vunpack.c.l.b16 %v189
  %v334 = vunpack.c.l.b16 %v190
  %v335 = vunpack.c.l.b16 %v191
  %v336 = vunpack.c.l.b16 %v192
  %v337 = vunpack.c.l.b16 %v193
  %v338 = vunpack.c.l.b16 %v194
  %v339 = vunpack.c.l.b16 %v195
  %v340 = vunpack.c.l.b16 %v196
  %v341 = vunpack.c.l.b16 %v197
  %v342 = vunpack.c.l.b16 %v198
  %v343 = vunpack.c.l.b16 %v199
  %v344 = vunpack.c.l.b16 %v200
  %v345 = vunpack.c.l.b16 %v201
  %v346 = vunpack.c.l.b16 %v202
  %v347 = vunpack.c.l.b16 %v203
  %v348 = vunpack.c.l.b16 %v204
  %v349 = vunpack.c.l.b16 %v205
  %v350 = vunpack.c.l.b16 %v206
  %v351 = vunpack.c.l.b16 %v207
  %v352 = vunpack.c.l.b16 %v208
  %v353 = vunpack.c.l.b16 %v209
  %v354 = vpack.c.b16 %v291, %v290
  %v355 = vpack.c.b16 %v293, %v292
  %v356 = vpack.c.b16 %v295, %v294
  %v357 = vpack.c.b16 %v297, %v296
  %v358 = vpack.c.b16 %v299, %v298
  %v359 = vpack.c.b16 %v301, %v300
  %v360 = vpack.c.b16 %v303, %v302
  %v361 = vpack.c.b16 %v305, %v304
  %v362 = vpack.c.b16 %v307, %v306
  %v363 = vpack.c.b16 %v309, %v308
  %v364 = vpack.c.b16 %v311, %v310
  %v365 = vpack.c.b16 %v313, %v312
  %v366 = vpack.c.b16 %v315, %v314
  %v367 = vpack.c.b16 %v317, %v316
  %v368 = vpack.c.b16 %v319, %v318
  %v369 = vpack.c.b16 %v321, %v320
  %v370 = vpack.c.b16 %v323, %v322
  %v371 = vpack.c.b16 %v325, %v324
  %v372 = vpack.c.b16 %v327, %v326
  %v373 = vpack.c.b16 %v329, %v328
  %v374 = vpack.c.b16 %v331, %v330
  %v375 = vpack.c.b16 %v333, %v332
  %v376 = vpack.c.b16 %v335, %v334
  %v377 = vpack.c.b16 %v337, %v336
  %v378 = vpack.c.b16 %v339, %v338
  %v379 = vpack.c.b16 %v341, %v340
  %v380 = vpack.c.b16 %v343, %v342
  %v381 = vpack.c.b16 %v345, %v344
  %v382 = vpack.c.b16 %v347, %v346
  %v383 = vpack.c.b16 %v349, %v348
  %v384 = vpack.c.b16 %v351, %v350
  %v385 = vpack.c.b16 %v353, %v352
  %v434 = vunpack.c.l.b16 %v210
  %v435 = vunpack.c.l.b16 %v211
  %v436 = vunpack.c.l.b16 %v212
  %v437 = vunpack.c.l.b16 %v213
  %v438 = vunpack.c.l.b16 %v214
  %v439 = vunpack.c.l.b16 %v215
  %v440 = vunpack.c.l.b16 %v216
  %v441 = vunpack.c.l.b16 %v217
  %v442 = vunpack.c.l.b16 %v218
  %v443 = vunpack.c.l.b16 %v219
  %v444 = vunpack.c.l.b16 %v220
  %v445 = vunpack.c.l.b16 %v221
  %v446 = vunpack.c.l.b16 %v222
  %v447 = vunpack.c.l.b16 %v223
  %v448 = vunpack.c.l.b16 %v224
  %v449 = vunpack.c.l.b16 %v225
  %v450 = vpack.c.b16 %v435, %v434
  %v451 = vpack.c.b16 %v437, %v436
  %v452 = vpack.c.b16 %v439, %v438
  %v453 = vpack.c.b16 %v441, %v440
  %v454 = vpack.c.b16 %v443, %v442
  %v455 = vpack.c.b16 %v445, %v444
  %v456 = vpack.c.b16 %v447, %v446
  %v457 = vpack.c.b16 %v449, %v448
  %466 = vmatprep.subr.bf16.mxu0 0
  %467 = vmatpush1.bf16.msra.mxu0 %v450
  %468 = vmatprep.subr.bf16.mxu0 0
  %469 = vmatpush1.bf16.msra.mxu0 %v451
  %470 = vmatprep.subr.bf16.mxu0 0
  %471 = vmatpush1.bf16.msra.mxu0 %v452
  %472 = vmatprep.subr.bf16.mxu0 0
  %473 = vmatpush1.bf16.msra.mxu0 %v453
  %474 = vmatprep.subr.bf16.mxu0 0
  %475 = vmatpush1.bf16.msra.mxu0 %v454
  %476 = vmatprep.subr.bf16.mxu0 0
  %477 = vmatpush1.bf16.msra.mxu0 %v455
  %478 = vmatprep.subr.bf16.mxu0 0
  %479 = vmatpush1.bf16.msra.mxu0 %v456
  %480 = vmatprep.subr.bf16.mxu0 0
  %481 = vmatpush1.bf16.msra.mxu0 %v457
  %482 = vmatprep.subr.bf16.mxu0 0
  %483 = vmatpush1.bf16.msra.mxu0 0
  %484 = vmatprep.subr.bf16.mxu0 0
  %485 = vmatpush1.bf16.msra.mxu0 0
  %486 = vmatprep.subr.bf16.mxu0 0
  %487 = vmatpush1.bf16.msra.mxu0 0
  %488 = vmatprep.subr.bf16.mxu0 0
  %489 = vmatpush1.bf16.msra.mxu0 0
  %490 = vmatprep.subr.bf16.mxu0 0
  %491 = vmatpush1.bf16.msra.mxu0 0
  %492 = vmatprep.subr.bf16.mxu0 0
  %493 = vmatpush1.bf16.msra.mxu0 0
  %494 = vmatprep.subr.bf16.mxu0 0
  %495 = vmatpush1.bf16.msra.mxu0 0
  %496 = vmatprep.subr.bf16.mxu0 0
  %497 = vmatpush1.bf16.msra.mxu0 0
  %498 = vmatprep.mubr.bf16.mxu0 0
  %499 = vmatmul.mubr.bf16.gmra.mrb[0].mxu0 %v354
  %v500 = vpop.f32.mrb[0].mxu0
  %v501 = vadd.f32 0.0, %v500
  %v502 = vpop.f32.mrb[0].mxu0
  %v503 = vpop.f32.mrb[0].mxu0
  %v504 = vadd.f32 0.0, %v503
  %v505 = vpop.f32.mrb[0].mxu0
  %506 = vmatprep.mubr.bf16.mxu0 0
  %507 = vmatmul.mubr.bf16.gmra.mrb[0].mxu0 %v355
  %v508 = vpop.f32.mrb[0].mxu0
  %v509 = vadd.f32 0.0, %v508
  %v510 = vpop.f32.mrb[0].mxu0
  %v511 = vpop.f32.mrb[0].mxu0
  %v512 = vadd.f32 0.0, %v511
  %v513 = vpop.f32.mrb[0].mxu0
  %514 = vmatprep.mubr.bf16.mxu0 0
  %515 = vmatmul.mubr.bf16.gmra.mrb[0].mxu0 %v356
  %v516 = vpop.f32.mrb[0].mxu0
  %v517 = vadd.f32 0.0, %v516
  %v518 = vpop.f32.mrb[0].mxu0
  %v519 = vpop.f32.mrb[0].mxu0
  %v520 = vadd.f32 0.0, %v519
  %v521 = vpop.f32.mrb[0].mxu0
  %522 = vmatprep.mubr.bf16.mxu0 0
  %523 = vmatmul.mubr.bf16.gmra.mrb[0].mxu0 %v357
  %v524 = vpop.f32.mrb[0].mxu0
  %v525 = vadd.f32 0.0, %v524
  %v526 = vpop.f32.mrb[0].mxu0
  %v527 = vpop.f32.mrb[0].mxu0
  %v528 = vadd.f32 0.0, %v527
  %v529 = vpop.f32.mrb[0].mxu0
  %530 = vmatprep.mubr.bf16.mxu0 0
  %531 = vmatmul.mubr.bf16.gmra.mrb[0].mxu0 %v358
  %v532 = vpop.f32.mrb[0].mxu0
  %v533 = vadd.f32 0.0, %v532
  %v534 = vpop.f32.mrb[0].mxu0
  %v535 = vpop.f32.mrb[0].mxu0
  %v536 = vadd.f32 0.0, %v535
  %v537 = vpop.f32.mrb[0].mxu0
  %538 = vmatprep.mubr.bf16.mxu0 0
  %539 = vmatmul.mubr.bf16.gmra.mrb[0].mxu0 %v359
  %v540 = vpop.f32.mrb[0].mxu0
  %v541 = vadd.f32 0.0, %v540
  %v542 = vpop.f32.mrb[0].mxu0
  %v543 = vpop.f32.mrb[0].mxu0
  %v544 = vadd.f32 0.0, %v543
  %v545 = vpop.f32.mrb[0].mxu0
  %546 = vmatprep.mubr.bf16.mxu0 0
  %547 = vmatmul.mubr.bf16.gmra.mrb[0].mxu0 %v360
  %v548 = vpop.f32.mrb[0].mxu0
  %v549 = vadd.f32 0.0, %v548
  %v550 = vpop.f32.mrb[0].mxu0
  %v551 = vpop.f32.mrb[0].mxu0
  %v552 = vadd.f32 0.0, %v551
  %v553 = vpop.f32.mrb[0].mxu0
  %554 = vmatprep.mubr.bf16.mxu0 0
  %555 = vmatmul.mubr.bf16.gmra.mrb[0].mxu0 %v361
  %v556 = vpop.f32.mrb[0].mxu0
  %v557 = vadd.f32 0.0, %v556
  %v558 = vpop.f32.mrb[0].mxu0
  %v559 = vpop.f32.mrb[0].mxu0
  %v560 = vadd.f32 0.0, %v559
  %v561 = vpop.f32.mrb[0].mxu0
  %562 = vmatprep.mubr.bf16.mxu0 0
  %563 = vmatmul.mubr.bf16.gmra.mrb[0].mxu0 %v362
  %v564 = vpop.f32.mrb[0].mxu0
  %v565 = vadd.f32 0.0, %v564
  %v566 = vpop.f32.mrb[0].mxu0
  %v567 = vpop.f32.mrb[0].mxu0
  %v568 = vadd.f32 0.0, %v567
  %v569 = vpop.f32.mrb[0].mxu0
  %570 = vmatprep.mubr.bf16.mxu0 0
  %571 = vmatmul.mubr.bf16.gmra.mrb[0].mxu0 %v363
  %v572 = vpop.f32.mrb[0].mxu0
  %v573 = vadd.f32 0.0, %v572
  %v574 = vpop.f32.mrb[0].mxu0
  %v575 = vpop.f32.mrb[0].mxu0
  %v576 = vadd.f32 0.0, %v575
  %v577 = vpop.f32.mrb[0].mxu0
  %578 = vmatprep.mubr.bf16.mxu0 0
  %579 = vmatmul.mubr.bf16.gmra.mrb[0].mxu0 %v364
  %v580 = vpop.f32.mrb[0].mxu0
  %v581 = vadd.f32 0.0, %v580
  %v582 = vpop.f32.mrb[0].mxu0
  %v583 = vpop.f32.mrb[0].mxu0
  %v584 = vadd.f32 0.0, %v583
  %v585 = vpop.f32.mrb[0].mxu0
  %586 = vmatprep.mubr.bf16.mxu0 0
  %587 = vmatmul.mubr.bf16.gmra.mrb[0].mxu0 %v365
  %v588 = vpop.f32.mrb[0].mxu0
  %v589 = vadd.f32 0.0, %v588
  %v590 = vpop.f32.mrb[0].mxu0
  %v591 = vpop.f32.mrb[0].mxu0
  %v592 = vadd.f32 0.0, %v591
  %v593 = vpop.f32.mrb[0].mxu0
  %594 = vmatprep.mubr.bf16.mxu0 0
  %595 = vmatmul.mubr.bf16.gmra.mrb[0].mxu0 %v366
  %v596 = vpop.f32.mrb[0].mxu0
  %v597 = vadd.f32 0.0, %v596
  %v598 = vpop.f32.mrb[0].mxu0
  %v599 = vpop.f32.mrb[0].mxu0
  %v600 = vadd.f32 0.0, %v599
  %v601 = vpop.f32.mrb[0].mxu0
  %602 = vmatprep.mubr.bf16.mxu0 0
  %603 = vmatmul.mubr.bf16.gmra.mrb[0].mxu0 %v367
  %v604 = vpop.f32.mrb[0].mxu0
  %v605 = vadd.f32 0.0, %v604
  %v606 = vpop.f32.mrb[0].mxu0
  %v607 = vpop.f32.mrb[0].mxu0
  %v608 = vadd.f32 0.0, %v607
  %v609 = vpop.f32.mrb[0].mxu0
  %610 = vmatprep.mubr.bf16.mxu0 0
  %611 = vmatmul.mubr.bf16.gmra.mrb[0].mxu0 %v368
  %v612 = vpop.f32.mrb[0].mxu0
  %v613 = vadd.f32 0.0, %v612
  %v614 = vpop.f32.mrb[0].mxu0
  %v615 = vpop.f32.mrb[0].mxu0
  %v616 = vadd.f32 0.0, %v615
  %v617 = vpop.f32.mrb[0].mxu0
  %618 = vmatprep.mubr.bf16.mxu0 0
  %619 = vmatmul.mubr.bf16.gmra.mrb[0].mxu0 %v369
  %v620 = vpop.f32.mrb[0].mxu0
  %v621 = vadd.f32 0.0, %v620
  %v622 = vpop.f32.mrb[0].mxu0
  %v623 = vpop.f32.mrb[0].mxu0
  %v624 = vadd.f32 0.0, %v623
  %v625 = vpop.f32.mrb[0].mxu0
  %626 = vmatprep.mubr.bf16.mxu0 0
  %627 = vmatmul.mubr.bf16.gmra.mrb[0].mxu0 %v370
  %v628 = vpop.f32.mrb[0].mxu0
  %v629 = vadd.f32 0.0, %v628
  %v630 = vpop.f32.mrb[0].mxu0
  %v631 = vpop.f32.mrb[0].mxu0
  %v632 = vadd.f32 0.0, %v631
  %v633 = vpop.f32.mrb[0].mxu0
  %634 = vmatprep.mubr.bf16.mxu0 0
  %635 = vmatmul.mubr.bf16.gmra.mrb[0].mxu0 %v371
  %v636 = vpop.f32.mrb[0].mxu0
  %v637 = vadd.f32 0.0, %v636
  %v638 = vpop.f32.mrb[0].mxu0
  %v639 = vpop.f32.mrb[0].mxu0
  %v640 = vadd.f32 0.0, %v639
  %v641 = vpop.f32.mrb[0].mxu0
  %642 = vmatprep.mubr.bf16.mxu0 0
  %643 = vmatmul.mubr.bf16.gmra.mrb[0].mxu0 %v372
  %v644 = vpop.f32.mrb[0].mxu0
  %v645 = vadd.f32 0.0, %v644
  %v646 = vpop.f32.mrb[0].mxu0
  %v647 = vpop.f32.mrb[0].mxu0
  %v648 = vadd.f32 0.0, %v647
  %v649 = vpop.f32.mrb[0].mxu0
  %650 = vmatprep.mubr.bf16.mxu0 0
  %651 = vmatmul.mubr.bf16.gmra.mrb[0].mxu0 %v373
  %v652 = vpop.f32.mrb[0].mxu0
  %v653 = vadd.f32 0.0, %v652
  %v654 = vpop.f32.mrb[0].mxu0
  %v655 = vpop.f32.mrb[0].mxu0
  %v656 = vadd.f32 0.0, %v655
  %v657 = vpop.f32.mrb[0].mxu0
  %658 = vmatprep.mubr.bf16.mxu0 0
  %659 = vmatmul.mubr.bf16.gmra.mrb[0].mxu0 %v374
  %v660 = vpop.f32.mrb[0].mxu0
  %v661 = vadd.f32 0.0, %v660
  %v662 = vpop.f32.mrb[0].mxu0
  %v663 = vpop.f32.mrb[0].mxu0
  %v664 = vadd.f32 0.0, %v663
  %v665 = vpop.f32.mrb[0].mxu0
  %666 = vmatprep.mubr.bf16.mxu0 0
  %667 = vmatmul.mubr.bf16.gmra.mrb[0].mxu0 %v375
  %v668 = vpop.f32.mrb[0].mxu0
  %v669 = vadd.f32 0.0, %v668
  %v670 = vpop.f32.mrb[0].mxu0
  %v671 = vpop.f32.mrb[0].mxu0
  %v672 = vadd.f32 0.0, %v671
  %v673 = vpop.f32.mrb[0].mxu0
  %674 = vmatprep.mubr.bf16.mxu0 0
  %675 = vmatmul.mubr.bf16.gmra.mrb[0].mxu0 %v376
  %v676 = vpop.f32.mrb[0].mxu0
  %v677 = vadd.f32 0.0, %v676
  %v678 = vpop.f32.mrb[0].mxu0
  %v679 = vpop.f32.mrb[0].mxu0
  %v680 = vadd.f32 0.0, %v679
  %v681 = vpop.f32.mrb[0].mxu0
  %682 = vmatprep.mubr.bf16.mxu0 0
  %683 = vmatmul.mubr.bf16.gmra.mrb[0].mxu0 %v377
  %v684 = vpop.f32.mrb[0].mxu0
  %v685 = vadd.f32 0.0, %v684
  %v686 = vpop.f32.mrb[0].mxu0
  %v687 = vpop.f32.mrb[0].mxu0
  %v688 = vadd.f32 0.0, %v687
  %v689 = vpop.f32.mrb[0].mxu0
  %690 = vmatprep.mubr.bf16.mxu0 0
  %691 = vmatmul.mubr.bf16.gmra.mrb[0].mxu0 %v378
  %v692 = vpop.f32.mrb[0].mxu0
  %v693 = vadd.f32 0.0, %v692
  %v694 = vpop.f32.mrb[0].mxu0
  %v695 = vpop.f32.mrb[0].mxu0
  %v696 = vadd.f32 0.0, %v695
  %v697 = vpop.f32.mrb[0].mxu0
  %698 = vmatprep.mubr.bf16.mxu0 0
  %699 = vmatmul.mubr.bf16.gmra.mrb[0].mxu0 %v379
  %v700 = vpop.f32.mrb[0].mxu0
  %v701 = vadd.f32 0.0, %v700
  %v702 = vpop.f32.mrb[0].mxu0
  %v703 = vpop.f32.mrb[0].mxu0
  %v704 = vadd.f32 0.0, %v703
  %v705 = vpop.f32.mrb[0].mxu0
  %706 = vmatprep.mubr.bf16.mxu0 0
  %707 = vmatmul.mubr.bf16.gmra.mrb[0].mxu0 %v380
  %v708 = vpop.f32.mrb[0].mxu0
  %v709 = vadd.f32 0.0, %v708
  %v710 = vpop.f32.mrb[0].mxu0
  %v711 = vpop.f32.mrb[0].mxu0
  %v712 = vadd.f32 0.0, %v711
  %v713 = vpop.f32.mrb[0].mxu0
  %714 = vmatprep.mubr.bf16.mxu0 0
  %715 = vmatmul.mubr.bf16.gmra.mrb[0].mxu0 %v381
  %v716 = vpop.f32.mrb[0].mxu0
  %v717 = vadd.f32 0.0, %v716
  %v718 = vpop.f32.mrb[0].mxu0
  %v719 = vpop.f32.mrb[0].mxu0
  %v720 = vadd.f32 0.0, %v719
  %v721 = vpop.f32.mrb[0].mxu0
  %722 = vmatprep.mubr.bf16.mxu0 0
  %723 = vmatmul.mubr.bf16.gmra.mrb[0].mxu0 %v382
  %v724 = vpop.f32.mrb[0].mxu0
  %v725 = vadd.f32 0.0, %v724
  %v726 = vpop.f32.mrb[0].mxu0
  %v727 = vpop.f32.mrb[0].mxu0
  %v728 = vadd.f32 0.0, %v727
  %v729 = vpop.f32.mrb[0].mxu0
  %730 = vmatprep.mubr.bf16.mxu0 0
  %731 = vmatmul.mubr.bf16.gmra.mrb[0].mxu0 %v383
  %v732 = vpop.f32.mrb[0].mxu0
  %v733 = vadd.f32 0.0, %v732
  %v734 = vpop.f32.mrb[0].mxu0
  %v735 = vpop.f32.mrb[0].mxu0
  %v736 = vadd.f32 0.0, %v735
  %v737 = vpop.f32.mrb[0].mxu0
  %738 = vmatprep.mubr.bf16.mxu0 0
  %739 = vmatmul.mubr.bf16.gmra.mrb[0].mxu0 %v384
  %v740 = vpop.f32.mrb[0].mxu0
  %v741 = vadd.f32 0.0, %v740
  %v742 = vpop.f32.mrb[0].mxu0
  %v743 = vpop.f32.mrb[0].mxu0
  %v744 = vadd.f32 0.0, %v743
  %v745 = vpop.f32.mrb[0].mxu0
  %746 = vmatprep.mubr.bf16.mxu0 0
  %747 = vmatmul.mubr.bf16.gmra.mrb[0].mxu0 %v385
  %v748 = vpop.f32.mrb[0].mxu0
  %v749 = vadd.f32 0.0, %v748
  %v750 = vpop.f32.mrb[0].mxu0
  %v751 = vpop.f32.mrb[0].mxu0
  %v752 = vadd.f32 0.0, %v751
  %v753 = vpop.f32.mrb[0].mxu0
  %754 = vdwg.mxu0
  %v755 = vadd.f32 %v82, %v501
  %v756 = vadd.f32 %v83, %v504
  %v757 = vadd.f32 %v84, %v509
  %v758 = vadd.f32 %v85, %v512
  %v759 = vadd.f32 %v86, %v517
  %v760 = vadd.f32 %v87, %v520
  %v761 = vadd.f32 %v88, %v525
  %v762 = vadd.f32 %v89, %v528
  %v763 = vadd.f32 %v90, %v533
  %v764 = vadd.f32 %v91, %v536
  %v765 = vadd.f32 %v92, %v541
  %v766 = vadd.f32 %v93, %v544
  %v767 = vadd.f32 %v94, %v549
  %v768 = vadd.f32 %v95, %v552
  %v769 = vadd.f32 %v96, %v557
  %v770 = vadd.f32 %v97, %v560
  %v771 = vadd.f32 %v98, %v565
  %v772 = vadd.f32 %v99, %v568
  %v773 = vadd.f32 %v100, %v573
  %v774 = vadd.f32 %v101, %v576
  %v775 = vadd.f32 %v102, %v581
  %v776 = vadd.f32 %v103, %v584
  %v777 = vadd.f32 %v104, %v589
  %v778 = vadd.f32 %v105, %v592
  %v779 = vadd.f32 %v106, %v597
  %v780 = vadd.f32 %v107, %v600
  %v781 = vadd.f32 %v108, %v605
  %v782 = vadd.f32 %v109, %v608
  %v783 = vadd.f32 %v110, %v613
  %v784 = vadd.f32 %v111, %v616
  %v785 = vadd.f32 %v112, %v621
  %v786 = vadd.f32 %v113, %v624
  %v787 = vadd.f32 %v114, %v629
  %v788 = vadd.f32 %v115, %v632
  %v789 = vadd.f32 %v116, %v637
  %v790 = vadd.f32 %v117, %v640
  %v791 = vadd.f32 %v118, %v645
  %v792 = vadd.f32 %v119, %v648
  %v793 = vadd.f32 %v120, %v653
  %v794 = vadd.f32 %v121, %v656
  %v795 = vadd.f32 %v122, %v661
  %v796 = vadd.f32 %v123, %v664
  %v797 = vadd.f32 %v124, %v669
  %v798 = vadd.f32 %v125, %v672
  %v799 = vadd.f32 %v126, %v677
  %v800 = vadd.f32 %v127, %v680
  %v801 = vadd.f32 %v128, %v685
  %v802 = vadd.f32 %v129, %v688
  %v803 = vadd.f32 %v130, %v693
  %v804 = vadd.f32 %v131, %v696
  %v805 = vadd.f32 %v132, %v701
  %v806 = vadd.f32 %v133, %v704
  %v807 = vadd.f32 %v134, %v709
  %v808 = vadd.f32 %v135, %v712
  %v809 = vadd.f32 %v136, %v717
  %v810 = vadd.f32 %v137, %v720
  %v811 = vadd.f32 %v138, %v725
  %v812 = vadd.f32 %v139, %v728
  %v813 = vadd.f32 %v140, %v733
  %v814 = vadd.f32 %v141, %v736
  %v815 = vadd.f32 %v142, %v741
  %v816 = vadd.f32 %v143, %v744
  %v817 = vadd.f32 %v144, %v749
  %v818 = vadd.f32 %v145, %v752
  %819 = vst [vmem:[#allocation2] sm:$0xff] %v755
  %820 = vst [vmem:[#allocation2 + $0x8] sm:$0xff] %v756
  %821 = vst [vmem:[#allocation2 + $0x10] sm:$0xff] %v757
  %822 = vst [vmem:[#allocation2 + $0x18] sm:$0xff] %v758
  %823 = vst [vmem:[#allocation2 + $0x20] sm:$0xff] %v759
  %824 = vst [vmem:[#allocation2 + $0x28] sm:$0xff] %v760
  %825 = vst [vmem:[#allocation2 + $0x30] sm:$0xff] %v761
  %826 = vst [vmem:[#allocation2 + $0x38] sm:$0xff] %v762
  %827 = vst [vmem:[#allocation2 + $0x40] sm:$0xff] %v763
  %828 = vst [vmem:[#allocation2 + $0x48] sm:$0xff] %v764
  %829 = vst [vmem:[#allocation2 + $0x50] sm:$0xff] %v765
  %830 = vst [vmem:[#allocation2 + $0x58] sm:$0xff] %v766
  %831 = vst [vmem:[#allocation2 + $0x60] sm:$0xff] %v767
  %832 = vst [vmem:[#allocation2 + $0x68] sm:$0xff] %v768
  %833 = vst [vmem:[#allocation2 + $0x70] sm:$0xff] %v769
  %834 = vst [vmem:[#allocation2 + $0x78] sm:$0xff] %v770
  %835 = vst [vmem:[#allocation2 + $0x80] sm:$0xff] %v771
  %836 = vst [vmem:[#allocation2 + $0x88] sm:$0xff] %v772
  %837 = vst [vmem:[#allocation2 + $0x90] sm:$0xff] %v773
  %838 = vst [vmem:[#allocation2 + $0x98] sm:$0xff] %v774
  %839 = vst [vmem:[#allocation2 + $0xa0] sm:$0xff] %v775
  %840 = vst [vmem:[#allocation2 + $0xa8] sm:$0xff] %v776
  %841 = vst [vmem:[#allocation2 + $0xb0] sm:$0xff] %v777
  %842 = vst [vmem:[#allocation2 + $0xb8] sm:$0xff] %v778
  %843 = vst [vmem:[#allocation2 + $0xc0] sm:$0xff] %v779
  %844 = vst [vmem:[#allocation2 + $0xc8] sm:$0xff] %v780
  %845 = vst [vmem:[#allocation2 + $0xd0] sm:$0xff] %v781
  %846 = vst [vmem:[#allocation2 + $0xd8] sm:$0xff] %v782
  %847 = vst [vmem:[#allocation2 + $0xe0] sm:$0xff] %v783
  %848 = vst [vmem:[#allocation2 + $0xe8] sm:$0xff] %v784
  %849 = vst [vmem:[#allocation2 + $0xf0] sm:$0xff] %v785
  %850 = vst [vmem:[#allocation2 + $0xf8] sm:$0xff] %v786
  %851 = vst [vmem:[#allocation2 + $0x100] sm:$0xff] %v787
  %852 = vst [vmem:[#allocation2 + $0x108] sm:$0xff] %v788
  %853 = vst [vmem:[#allocation2 + $0x110] sm:$0xff] %v789
  %854 = vst [vmem:[#allocation2 + $0x118] sm:$0xff] %v790
  %855 = vst [vmem:[#allocation2 + $0x120] sm:$0xff] %v791
  %856 = vst [vmem:[#allocation2 + $0x128] sm:$0xff] %v792
  %857 = vst [vmem:[#allocation2 + $0x130] sm:$0xff] %v793
  %858 = vst [vmem:[#allocation2 + $0x138] sm:$0xff] %v794
  %859 = vst [vmem:[#allocation2 + $0x140] sm:$0xff] %v795
  %860 = vst [vmem:[#allocation2 + $0x148] sm:$0xff] %v796
  %861 = vst [vmem:[#allocation2 + $0x150] sm:$0xff] %v797
  %862 = vst [vmem:[#allocation2 + $0x158] sm:$0xff] %v798
  %863 = vst [vmem:[#allocation2 + $0x160] sm:$0xff] %v799
  %864 = vst [vmem:[#allocation2 + $0x168] sm:$0xff] %v800
  %865 = vst [vmem:[#allocation2 + $0x170] sm:$0xff] %v801
  %866 = vst [vmem:[#allocation2 + $0x178] sm:$0xff] %v802
  %867 = vst [vmem:[#allocation2 + $0x180] sm:$0xff] %v803
  %868 = vst [vmem:[#allocation2 + $0x188] sm:$0xff] %v804
  %869 = vst [vmem:[#allocation2 + $0x190] sm:$0xff] %v805
  %870 = vst [vmem:[#allocation2 + $0x198] sm:$0xff] %v806
  %871 = vst [vmem:[#allocation2 + $0x1a0] sm:$0xff] %v807
  %872 = vst [vmem:[#allocation2 + $0x1a8] sm:$0xff] %v808
  %873 = vst [vmem:[#allocation2 + $0x1b0] sm:$0xff] %v809
  %874 = vst [vmem:[#allocation2 + $0x1b8] sm:$0xff] %v810
  %875 = vst [vmem:[#allocation2 + $0x1c0] sm:$0xff] %v811
  %876 = vst [vmem:[#allocation2 + $0x1c8] sm:$0xff] %v812
  %877 = vst [vmem:[#allocation2 + $0x1d0] sm:$0xff] %v813
  %878 = vst [vmem:[#allocation2 + $0x1d8] sm:$0xff] %v814
  %879 = vst [vmem:[#allocation2 + $0x1e0] sm:$0xff] %v815
  %880 = vst [vmem:[#allocation2 + $0x1e8] sm:$0xff] %v816
  %881 = vst [vmem:[#allocation2 + $0x1f0] sm:$0xff] %v817
  %882 = vst [vmem:[#allocation2 + $0x1f8] sm:$0xff] %v818
  // Predicated region
  $region14: #{generator_forward.48} parent=0 // pred_check
    %p883 = pneg %p14
  $region15: #{generator_forward.48} parent=0 // pred_check_branch
    %885 = sbr.rel (%p883) target = $region17
  $region16: #{generator_forward.48} parent=0 // pred_region
    %v886 = vld [vmem:[#allocation2] sm:$0xff]
    %v887 = vld [vmem:[#allocation2 + $0x8] sm:$0xff]
    %v888 = vld [vmem:[#allocation2 + $0x10] sm:$0xff]
    %v889 = vld [vmem:[#allocation2 + $0x18] sm:$0xff]
    %v890 = vld [vmem:[#allocation2 + $0x20] sm:$0xff]
    %v891 = vld [vmem:[#allocation2 + $0x28] sm:$0xff]
    %v892 = vld [vmem:[#allocation2 + $0x30] sm:$0xff]
    %v893 = vld [vmem:[#allocation2 + $0x38] sm:$0xff]
    %v894 = vld [vmem:[#allocation2 + $0x40] sm:$0xff]
    %v895 = vld [vmem:[#allocation2 + $0x48] sm:$0xff]
    %v896 = vld [vmem:[#allocation2 + $0x50] sm:$0xff]
    %v897 = vld [vmem:[#allocation2 + $0x58] sm:$0xff]
    %v898 = vld [vmem:[#allocation2 + $0x60] sm:$0xff]
    %v899 = vld [vmem:[#allocation2 + $0x68] sm:$0xff]
    %v900 = vld [vmem:[#allocation2 + $0x70] sm:$0xff]
    %v901 = vld [vmem:[#allocation2 + $0x78] sm:$0xff]
    %v902 = vld [vmem:[#allocation2 + $0x80] sm:$0xff]
    %v903 = vld [vmem:[#allocation2 + $0x88] sm:$0xff]
    %v904 = vld [vmem:[#allocation2 + $0x90] sm:$0xff]
    %v905 = vld [vmem:[#allocation2 + $0x98] sm:$0xff]
    %v906 = vld [vmem:[#allocation2 + $0xa0] sm:$0xff]
    %v907 = vld [vmem:[#allocation2 + $0xa8] sm:$0xff]
    %v908 = vld [vmem:[#allocation2 + $0xb0] sm:$0xff]
    %v909 = vld [vmem:[#allocation2 + $0xb8] sm:$0xff]
    %v910 = vld [vmem:[#allocation2 + $0xc0] sm:$0xff]
    %v911 = vld [vmem:[#allocation2 + $0xc8] sm:$0xff]
    %v912 = vld [vmem:[#allocation2 + $0xd0] sm:$0xff]
    %v913 = vld [vmem:[#allocation2 + $0xd8] sm:$0xff]
    %v914 = vld [vmem:[#allocation2 + $0xe0] sm:$0xff]
    %v915 = vld [vmem:[#allocation2 + $0xe8] sm:$0xff]
    %v916 = vld [vmem:[#allocation2 + $0xf0] sm:$0xff]
    %v917 = vld [vmem:[#allocation2 + $0xf8] sm:$0xff]
    %v918 = vld [vmem:[#allocation2 + $0x100] sm:$0xff]
    %v919 = vld [vmem:[#allocation2 + $0x108] sm:$0xff]
    %v920 = vld [vmem:[#allocation2 + $0x110] sm:$0xff]
    %v921 = vld [vmem:[#allocation2 + $0x118] sm:$0xff]
    %v922 = vld [vmem:[#allocation2 + $0x120] sm:$0xff]
    %v923 = vld [vmem:[#allocation2 + $0x128] sm:$0xff]
    %v924 = vld [vmem:[#allocation2 + $0x130] sm:$0xff]
    %v925 = vld [vmem:[#allocation2 + $0x138] sm:$0xff]
    %v926 = vld [vmem:[#allocation2 + $0x140] sm:$0xff]
    %v927 = vld [vmem:[#allocation2 + $0x148] sm:$0xff]
    %v928 = vld [vmem:[#allocation2 + $0x150] sm:$0xff]
    %v929 = vld [vmem:[#allocation2 + $0x158] sm:$0xff]
    %v930 = vld [vmem:[#allocation2 + $0x160] sm:$0xff]
    %v931 = vld [vmem:[#allocation2 + $0x168] sm:$0xff]
    %v932 = vld [vmem:[#allocation2 + $0x170] sm:$0xff]
    %v933 = vld [vmem:[#allocation2 + $0x178] sm:$0xff]
    %v934 = vld [vmem:[#allocation2 + $0x180] sm:$0xff]
    %v935 = vld [vmem:[#allocation2 + $0x188] sm:$0xff]
    %v936 = vld [vmem:[#allocation2 + $0x190] sm:$0xff]
    %v937 = vld [vmem:[#allocation2 + $0x198] sm:$0xff]
    %v938 = vld [vmem:[#allocation2 + $0x1a0] sm:$0xff]
    %v939 = vld [vmem:[#allocation2 + $0x1a8] sm:$0xff]
    %v940 = vld [vmem:[#allocation2 + $0x1b0] sm:$0xff]
    %v941 = vld [vmem:[#allocation2 + $0x1b8] sm:$0xff]
    %v942 = vld [vmem:[#allocation2 + $0x1c0] sm:$0xff]
    %v943 = vld [vmem:[#allocation2 + $0x1c8] sm:$0xff]
    %v944 = vld [vmem:[#allocation2 + $0x1d0] sm:$0xff]
    %v945 = vld [vmem:[#allocation2 + $0x1d8] sm:$0xff]
    %v946 = vld [vmem:[#allocation2 + $0x1e0] sm:$0xff]
    %v947 = vld [vmem:[#allocation2 + $0x1e8] sm:$0xff]
    %v948 = vld [vmem:[#allocation2 + $0x1f0] sm:$0xff]
    %v949 = vld [vmem:[#allocation2 + $0x1f8] sm:$0xff]
    %950 = vst [vmem:[%s2] sm:$0xff] %v886
    %951 = vst [vmem:[%s2 + $0x8] sm:$0xff] %v887
    %952 = vst [vmem:[%s2 + $0x10] sm:$0xff] %v888
    %953 = vst [vmem:[%s2 + $0x18] sm:$0xff] %v889
    %954 = vst [vmem:[%s2 + $0x20] sm:$0xff] %v890
    %955 = vst [vmem:[%s2 + $0x28] sm:$0xff] %v891
    %956 = vst [vmem:[%s2 + $0x30] sm:$0xff] %v892
    %957 = vst [vmem:[%s2 + $0x38] sm:$0xff] %v893
    %958 = vst [vmem:[%s2 + $0x40] sm:$0xff] %v894
    %959 = vst [vmem:[%s2 + $0x48] sm:$0xff] %v895
    %960 = vst [vmem:[%s2 + $0x50] sm:$0xff] %v896
    %961 = vst [vmem:[%s2 + $0x58] sm:$0xff] %v897
    %962 = vst [vmem:[%s2 + $0x60] sm:$0xff] %v898
    %963 = vst [vmem:[%s2 + $0x68] sm:$0xff] %v899
    %964 = vst [vmem:[%s2 + $0x70] sm:$0xff] %v900
    %965 = vst [vmem:[%s2 + $0x78] sm:$0xff] %v901
    %966 = vst [vmem:[%s2 + $0x80] sm:$0xff] %v902
    %967 = vst [vmem:[%s2 + $0x88] sm:$0xff] %v903
    %968 = vst [vmem:[%s2 + $0x90] sm:$0xff] %v904
    %969 = vst [vmem:[%s2 + $0x98] sm:$0xff] %v905
    %970 = vst [vmem:[%s2 + $0xa0] sm:$0xff] %v906
    %971 = vst [vmem:[%s2 + $0xa8] sm:$0xff] %v907
    %972 = vst [vmem:[%s2 + $0xb0] sm:$0xff] %v908
    %973 = vst [vmem:[%s2 + $0xb8] sm:$0xff] %v909
    %974 = vst [vmem:[%s2 + $0xc0] sm:$0xff] %v910
    %975 = vst [vmem:[%s2 + $0xc8] sm:$0xff] %v911
    %976 = vst [vmem:[%s2 + $0xd0] sm:$0xff] %v912
    %977 = vst [vmem:[%s2 + $0xd8] sm:$0xff] %v913
    %978 = vst [vmem:[%s2 + $0xe0] sm:$0xff] %v914
    %979 = vst [vmem:[%s2 + $0xe8] sm:$0xff] %v915
    %980 = vst [vmem:[%s2 + $0xf0] sm:$0xff] %v916
    %981 = vst [vmem:[%s2 + $0xf8] sm:$0xff] %v917
    %982 = vst [vmem:[%s2 + $0x100] sm:$0xff] %v918
    %983 = vst [vmem:[%s2 + $0x108] sm:$0xff] %v919
    %984 = vst [vmem:[%s2 + $0x110] sm:$0xff] %v920
    %985 = vst [vmem:[%s2 + $0x118] sm:$0xff] %v921
    %986 = vst [vmem:[%s2 + $0x120] sm:$0xff] %v922
    %987 = vst [vmem:[%s2 + $0x128] sm:$0xff] %v923
    %988 = vst [vmem:[%s2 + $0x130] sm:$0xff] %v924
    %989 = vst [vmem:[%s2 + $0x138] sm:$0xff] %v925
    %990 = vst [vmem:[%s2 + $0x140] sm:$0xff] %v926
    %991 = vst [vmem:[%s2 + $0x148] sm:$0xff] %v927
    %992 = vst [vmem:[%s2 + $0x150] sm:$0xff] %v928
    %993 = vst [vmem:[%s2 + $0x158] sm:$0xff] %v929
    %994 = vst [vmem:[%s2 + $0x160] sm:$0xff] %v930
    %995 = vst [vmem:[%s2 + $0x168] sm:$0xff] %v931
    %996 = vst [vmem:[%s2 + $0x170] sm:$0xff] %v932
    %997 = vst [vmem:[%s2 + $0x178] sm:$0xff] %v933
    %998 = vst [vmem:[%s2 + $0x180] sm:$0xff] %v934
    %999 = vst [vmem:[%s2 + $0x188] sm:$0xff] %v935
    %1000 = vst [vmem:[%s2 + $0x190] sm:$0xff] %v936
    %1001 = vst [vmem:[%s2 + $0x198] sm:$0xff] %v937
    %1002 = vst [vmem:[%s2 + $0x1a0] sm:$0xff] %v938
    %1003 = vst [vmem:[%s2 + $0x1a8] sm:$0xff] %v939
    %1004 = vst [vmem:[%s2 + $0x1b0] sm:$0xff] %v940
    %1005 = vst [vmem:[%s2 + $0x1b8] sm:$0xff] %v941
    %1006 = vst [vmem:[%s2 + $0x1c0] sm:$0xff] %v942
    %1007 = vst [vmem:[%s2 + $0x1c8] sm:$0xff] %v943
    %1008 = vst [vmem:[%s2 + $0x1d0] sm:$0xff] %v944
    %1009 = vst [vmem:[%s2 + $0x1d8] sm:$0xff] %v945
    %1010 = vst [vmem:[%s2 + $0x1e0] sm:$0xff] %v946
    %1011 = vst [vmem:[%s2 + $0x1e8] sm:$0xff] %v947
    %1012 = vst [vmem:[%s2 + $0x1f0] sm:$0xff] %v948
    %1013 = vst [vmem:[%s2 + $0x1f8] sm:$0xff] %v949
    %v1014 = vadd.f32 %v886, %v887
    %v1015 = vadd.f32 %v1014, %v888
    %v1016 = vadd.f32 %v1015, %v889
    %v1017 = vadd.f32 %v1016, %v890
    %v1018 = vadd.f32 %v1017, %v891
    %v1019 = vadd.f32 %v1018, %v892
    %v1020 = vadd.f32 %v1019, %v893
    %v1021 = vadd.f32 %v1020, %v894
    %v1022 = vadd.f32 %v1021, %v895
    %v1023 = vadd.f32 %v1022, %v896
    %v1024 = vadd.f32 %v1023, %v897
    %v1025 = vadd.f32 %v1024, %v898
    %v1026 = vadd.f32 %v1025, %v899
    %v1027 = vadd.f32 %v1026, %v900
    %v1028 = vadd.f32 %v1027, %v901
    %v1029 = vadd.f32 %v1028, %v902
    %v1030 = vadd.f32 %v1029, %v903
    %v1031 = vadd.f32 %v1030, %v904
    %v1032 = vadd.f32 %v1031, %v905
    %v1033 = vadd.f32 %v1032, %v906
    %v1034 = vadd.f32 %v1033, %v907
    %v1035 = vadd.f32 %v1034, %v908
    %v1036 = vadd.f32 %v1035, %v909
    %v1037 = vadd.f32 %v1036, %v910
    %v1038 = vadd.f32 %v1037, %v911
    %v1039 = vadd.f32 %v1038, %v912
    %v1040 = vadd.f32 %v1039, %v913
    %v1041 = vadd.f32 %v1040, %v914
    %v1042 = vadd.f32 %v1041, %v915
    %v1043 = vadd.f32 %v1042, %v916
    %v1044 = vadd.f32 %v1043, %v917
    %v1045 = vadd.f32 %v1044, %v918
    %v1046 = vadd.f32 %v1045, %v919
    %v1047 = vadd.f32 %v1046, %v920
    %v1048 = vadd.f32 %v1047, %v921
    %v1049 = vadd.f32 %v1048, %v922
    %v1050 = vadd.f32 %v1049, %v923
    %v1051 = vadd.f32 %v1050, %v924
    %v1052 = vadd.f32 %v1051, %v925
    %v1053 = vadd.f32 %v1052, %v926
    %v1054 = vadd.f32 %v1053, %v927
    %v1055 = vadd.f32 %v1054, %v928
    %v1056 = vadd.f32 %v1055, %v929
    %v1057 = vadd.f32 %v1056, %v930
    %v1058 = vadd.f32 %v1057, %v931
    %v1059 = vadd.f32 %v1058, %v932
    %v1060 = vadd.f32 %v1059, %v933
    %v1061 = vadd.f32 %v1060, %v934
    %v1062 = vadd.f32 %v1061, %v935
    %v1063 = vadd.f32 %v1062, %v936
    %v1064 = vadd.f32 %v1063, %v937
    %v1065 = vadd.f32 %v1064, %v938
    %v1066 = vadd.f32 %v1065, %v939
    %v1067 = vadd.f32 %v1066, %v940
    %v1068 = vadd.f32 %v1067, %v941
    %v1069 = vadd.f32 %v1068, %v942
    %v1070 = vadd.f32 %v1069, %v943
    %v1071 = vadd.f32 %v1070, %v944
    %v1072 = vadd.f32 %v1071, %v945
    %v1073 = vadd.f32 %v1072, %v946
    %v1074 = vadd.f32 %v1073, %v947
    %v1075 = vadd.f32 %v1074, %v948
    %v1076 = vadd.f32 %v1075, %v949
    %v1077 = vrot.slane %v1076, 4
    %v1078 = vadd.f32 %v1076, %v1077
    %v1079 = vrot.slane %v1078, 2
    %v1080 = vadd.f32 %v1078, %v1079
    %v1081 = vrot.slane %v1080, 1
    %v1082 = vadd.f32 %v1080, %v1081
    %v1083 = vmul.f32 %v886, %v886
    %v1084 = vmul.f32 %v887, %v887
    %v1085 = vmul.f32 %v888, %v888
    %v1086 = vmul.f32 %v889, %v889
    %v1087 = vmul.f32 %v890, %v890
    %v1088 = vmul.f32 %v891, %v891
    %v1089 = vmul.f32 %v892, %v892
    %v1090 = vmul.f32 %v893, %v893
    %v1091 = vmul.f32 %v894, %v894
    %v1092 = vmul.f32 %v895, %v895
    %v1093 = vmul.f32 %v896, %v896
    %v1094 = vmul.f32 %v897, %v897
    %v1095 = vmul.f32 %v898, %v898
    %v1096 = vmul.f32 %v899, %v899
    %v1097 = vmul.f32 %v900, %v900
    %v1098 = vmul.f32 %v901, %v901
    %v1099 = vmul.f32 %v902, %v902
    %v1100 = vmul.f32 %v903, %v903
    %v1101 = vmul.f32 %v904, %v904
    %v1102 = vmul.f32 %v905, %v905
    %v1103 = vmul.f32 %v906, %v906
    %v1104 = vmul.f32 %v907, %v907
    %v1105 = vmul.f32 %v908, %v908
    %v1106 = vmul.f32 %v909, %v909
    %v1107 = vmul.f32 %v910, %v910
    %v1108 = vmul.f32 %v911, %v911
    %v1109 = vmul.f32 %v912, %v912
    %v1110 = vmul.f32 %v913, %v913
    %v1111 = vmul.f32 %v914, %v914
    %v1112 = vmul.f32 %v915, %v915
    %v1113 = vmul.f32 %v916, %v916
    %v1114 = vmul.f32 %v917, %v917
    %v1115 = vmul.f32 %v918, %v918
    %v1116 = vmul.f32 %v919, %v919
    %v1117 = vmul.f32 %v920, %v920
    %v1118 = vmul.f32 %v921, %v921
    %v1119 = vmul.f32 %v922, %v922
    %v1120 = vmul.f32 %v923, %v923
    %v1121 = vmul.f32 %v924, %v924
    %v1122 = vmul.f32 %v925, %v925
    %v1123 = vmul.f32 %v926, %v926
    %v1124 = vmul.f32 %v927, %v927
    %v1125 = vmul.f32 %v928, %v928
    %v1126 = vmul.f32 %v929, %v929
    %v1127 = vmul.f32 %v930, %v930
    %v1128 = vmul.f32 %v931, %v931
    %v1129 = vmul.f32 %v932, %v932
    %v1130 = vmul.f32 %v933, %v933
    %v1131 = vmul.f32 %v934, %v934
    %v1132 = vmul.f32 %v935, %v935
    %v1133 = vmul.f32 %v936, %v936
    %v1134 = vmul.f32 %v937, %v937
    %v1135 = vmul.f32 %v938, %v938
    %v1136 = vmul.f32 %v939, %v939
    %v1137 = vmul.f32 %v940, %v940
    %v1138 = vmul.f32 %v941, %v941
    %v1139 = vmul.f32 %v942, %v942
    %v1140 = vmul.f32 %v943, %v943
    %v1141 = vmul.f32 %v944, %v944
    %v1142 = vmul.f32 %v945, %v945
    %v1143 = vmul.f32 %v946, %v946
    %v1144 = vmul.f32 %v947, %v947
    %v1145 = vmul.f32 %v948, %v948
    %v1146 = vmul.f32 %v949, %v949
    %v1147 = vadd.f32 %v1083, %v1084
    %v1148 = vadd.f32 %v1147, %v1085
    %v1149 = vadd.f32 %v1148, %v1086
    %v1150 = vadd.f32 %v1149, %v1087
    %v1151 = vadd.f32 %v1150, %v1088
    %v1152 = vadd.f32 %v1151, %v1089
    %v1153 = vadd.f32 %v1152, %v1090
    %v1154 = vadd.f32 %v1153, %v1091
    %v1155 = vadd.f32 %v1154, %v1092
    %v1156 = vadd.f32 %v1155, %v1093
    %v1157 = vadd.f32 %v1156, %v1094
    %v1158 = vadd.f32 %v1157, %v1095
    %v1159 = vadd.f32 %v1158, %v1096
    %v1160 = vadd.f32 %v1159, %v1097
    %v1161 = vadd.f32 %v1160, %v1098
    %v1162 = vadd.f32 %v1161, %v1099
    %v1163 = vadd.f32 %v1162, %v1100
    %v1164 = vadd.f32 %v1163, %v1101
    %v1165 = vadd.f32 %v1164, %v1102
    %v1166 = vadd.f32 %v1165, %v1103
    %v1167 = vadd.f32 %v1166, %v1104
    %v1168 = vadd.f32 %v1167, %v1105
    %v1169 = vadd.f32 %v1168, %v1106
    %v1170 = vadd.f32 %v1169, %v1107
    %v1171 = vadd.f32 %v1170, %v1108
    %v1172 = vadd.f32 %v1171, %v1109
    %v1173 = vadd.f32 %v1172, %v1110
    %v1174 = vadd.f32 %v1173, %v1111
    %v1175 = vadd.f32 %v1174, %v1112
    %v1176 = vadd.f32 %v1175, %v1113
    %v1177 = vadd.f32 %v1176, %v1114
    %v1178 = vadd.f32 %v1177, %v1115
    %v1179 = vadd.f32 %v1178, %v1116
    %v1180 = vadd.f32 %v1179, %v1117
    %v1181 = vadd.f32 %v1180, %v1118
    %v1182 = vadd.f32 %v1181, %v1119
    %v1183 = vadd.f32 %v1182, %v1120
    %v1184 = vadd.f32 %v1183, %v1121
    %v1185 = vadd.f32 %v1184, %v1122
    %v1186 = vadd.f32 %v1185, %v1123
    %v1187 = vadd.f32 %v1186, %v1124
    %v1188 = vadd.f32 %v1187, %v1125
    %v1189 = vadd.f32 %v1188, %v1126
    %v1190 = vadd.f32 %v1189, %v1127
    %v1191 = vadd.f32 %v1190, %v1128
    %v1192 = vadd.f32 %v1191, %v1129
    %v1193 = vadd.f32 %v1192, %v1130
    %v1194 = vadd.f32 %v1193, %v1131
    %v1195 = vadd.f32 %v1194, %v1132
    %v1196 = vadd.f32 %v1195, %v1133
    %v1197 = vadd.f32 %v1196, %v1134
    %v1198 = vadd.f32 %v1197, %v1135
    %v1199 = vadd.f32 %v1198, %v1136
    %v1200 = vadd.f32 %v1199, %v1137
    %v1201 = vadd.f32 %v1200, %v1138
    %v1202 = vadd.f32 %v1201, %v1139
    %v1203 = vadd.f32 %v1202, %v1140
    %v1204 = vadd.f32 %v1203, %v1141
    %v1205 = vadd.f32 %v1204, %v1142
    %v1206 = vadd.f32 %v1205, %v1143
    %v1207 = vadd.f32 %v1206, %v1144
    %v1208 = vadd.f32 %v1207, %v1145
    %v1209 = vadd.f32 %v1208, %v1146
    %v1210 = vrot.slane %v1209, 4
    %v1211 = vadd.f32 %v1209, %v1210
    %v1212 = vrot.slane %v1211, 2
    %v1213 = vadd.f32 %v1211, %v1212
    %v1214 = vrot.slane %v1213, 1
    %v1215 = vadd.f32 %v1213, %v1214
    %vm1216 = vcmask 1040384
    %v1217 = vsel %vm1216, %v1082, %v1215
    %1218 = vst [vmem:[%s3] sm:$0x3] %v1217
  $region17: #{generator_forward.48} parent=0 // pred_fallthru
    _
  // Predicated region
  $region18: #{generator_forward.48} parent=0 // pred_check
    _
  $region19: #{generator_forward.48} parent=0 // pred_check_branch
    %1220 = sbr.rel (0) target = $region21
  $region20: #{generator_forward.48} parent=0 // pred_region
    _
  $region21: #{generator_forward.48} parent=0 // pred_fallthru
    _
  // Predicated region
  $region22: #{generator_forward.48} parent=0 // pred_check
    _
  $region23: #{generator_forward.48} parent=0 // pred_check_branch
    %1222 = sbr.rel (0) target = $region25
  $region24: #{generator_forward.48} parent=0 // pred_region
    _
  $region25: #{generator_forward.48} parent=0 // pred_fallthru
    _
  // Predicated region
  $region26: #{generator_forward.48} parent=0 // pred_check
    _
  $region27: #{generator_forward.48} parent=0 // pred_check_branch
    %1224 = sbr.rel (0) target = $region29
  $region28: #{generator_forward.48} parent=0 // pred_region
    _
  $region29: #{generator_forward.48} parent=0 // pred_fallthru
    _
  // Predicated region
  $region30: #{generator_forward.48} parent=0 // pred_check
    _
  $region31: #{generator_forward.48} parent=0 // pred_check_branch
    %1226 = sbr.rel (0) target = $region33
  $region32: #{generator_forward.48} parent=0 // pred_region
    _
  $region33: #{generator_forward.48} parent=0 // pred_fallthru
    _

// kernel: generator_forward.52
$region0: #{generator_forward.52}
  #allocation0 [shape = 'u32[]', space=smem, size = 0x4, offset = 0x4, fixed_abs, tag = 'smem constant byte address 0x4 - core index']
  #allocation1 [shape = 'u32[144,128]{1,0:T(1,128)}', space=vmem, size = 0x12000, scoped, tag = 'internal scratch']
  %s0 = inlined_call_operand.vmem [shape: f32[512,128], index: 0, kind: input, shape index: {}]
  %s1 = inlined_call_operand.vmem [shape: f32[1,128], index: 1, kind: input, shape index: {}]
  %s2 = inlined_call_operand.vmem [shape: f32[1,128], index: 2, kind: input, shape index: {}]
  %s3 = inlined_call_operand.vmem [shape: bf16[512,128], index: 3, kind: output, shape index: {}]
  %s4 = sld [smem:[#allocation0]]
  $region22: #{generator_forward.52} parent=0
    _
  %s6 = ssub.s32 1, %s4
  %s7 = scalar_select 0, %s6, %s4
  // Predicated region
  $region2: #{generator_forward.52} parent=0 // pred_check
    _
  $region3: #{generator_forward.52} parent=0 // pred_check_branch
    %9 = sbr.rel (0) target = $region5
  $region4: #{generator_forward.52} parent=0 // pred_region
    _
  $region5: #{generator_forward.52} parent=0 // pred_fallthru
    _
  // Predicated region
  $region6: #{generator_forward.52} parent=0 // pred_check
    _
  $region7: #{generator_forward.52} parent=0 // pred_check_branch
    %11 = sbr.rel (0) target = $region9
  $region8: #{generator_forward.52} parent=0 // pred_region
    _
  $region9: #{generator_forward.52} parent=0 // pred_fallthru
    _
  // Predicated region
  $region10: #{generator_forward.52} parent=0 // pred_check
    _
  $region11: #{generator_forward.52} parent=0 // pred_check_branch
    %13 = sbr.rel (0) target = $region13
  $region12: #{generator_forward.52} parent=0 // pred_region
    _
  $region13: #{generator_forward.52} parent=0 // pred_fallthru
    _
  %v14 = vld [vmem:[%s0] sm:$0xff]
  %v15 = vld [vmem:[%s0 + $0x8] sm:$0xff]
  %v16 = vld [vmem:[%s0 + $0x10] sm:$0xff]
  %v17 = vld [vmem:[%s0 + $0x18] sm:$0xff]
  %v18 = vld [vmem:[%s0 + $0x20] sm:$0xff]
  %v19 = vld [vmem:[%s0 + $0x28] sm:$0xff]
  %v20 = vld [vmem:[%s0 + $0x30] sm:$0xff]
  %v21 = vld [vmem:[%s0 + $0x38] sm:$0xff]
  %v22 = vld [vmem:[%s0 + $0x40] sm:$0xff]
  %v23 = vld [vmem:[%s0 + $0x48] sm:$0xff]
  %v24 = vld [vmem:[%s0 + $0x50] sm:$0xff]
  %v25 = vld [vmem:[%s0 + $0x58] sm:$0xff]
  %v26 = vld [vmem:[%s0 + $0x60] sm:$0xff]
  %v27 = vld [vmem:[%s0 + $0x68] sm:$0xff]
  %v28 = vld [vmem:[%s0 + $0x70] sm:$0xff]
  %v29 = vld [vmem:[%s0 + $0x78] sm:$0xff]
  %v30 = vld [vmem:[%s0 + $0x80] sm:$0xff]
  %v31 = vld [vmem:[%s0 + $0x88] sm:$0xff]
  %v32 = vld [vmem:[%s0 + $0x90] sm:$0xff]
  %v33 = vld [vmem:[%s0 + $0x98] sm:$0xff]
  %v34 = vld [vmem:[%s0 + $0xa0] sm:$0xff]
  %v35 = vld [vmem:[%s0 + $0xa8] sm:$0xff]
  %v36 = vld [vmem:[%s0 + $0xb0] sm:$0xff]
  %v37 = vld [vmem:[%s0 + $0xb8] sm:$0xff]
  %v38 = vld [vmem:[%s0 + $0xc0] sm:$0xff]
  %v39 = vld [vmem:[%s0 + $0xc8] sm:$0xff]
  %v40 = vld [vmem:[%s0 + $0xd0] sm:$0xff]
  %v41 = vld [vmem:[%s0 + $0xd8] sm:$0xff]
  %v42 = vld [vmem:[%s0 + $0xe0] sm:$0xff]
  %v43 = vld [vmem:[%s0 + $0xe8] sm:$0xff]
  %v44 = vld [vmem:[%s0 + $0xf0] sm:$0xff]
  %v45 = vld [vmem:[%s0 + $0xf8] sm:$0xff]
  %v46 = vld [vmem:[%s0 + $0x100] sm:$0xff]
  %v47 = vld [vmem:[%s0 + $0x108] sm:$0xff]
  %v48 = vld [vmem:[%s0 + $0x110] sm:$0xff]
  %v49 = vld [vmem:[%s0 + $0x118] sm:$0xff]
  %v50 = vld [vmem:[%s0 + $0x120] sm:$0xff]
  %v51 = vld [vmem:[%s0 + $0x128] sm:$0xff]
  %v52 = vld [vmem:[%s0 + $0x130] sm:$0xff]
  %v53 = vld [vmem:[%s0 + $0x138] sm:$0xff]
  %v54 = vld [vmem:[%s0 + $0x140] sm:$0xff]
  %v55 = vld [vmem:[%s0 + $0x148] sm:$0xff]
  %v56 = vld [vmem:[%s0 + $0x150] sm:$0xff]
  %v57 = vld [vmem:[%s0 + $0x158] sm:$0xff]
  %v58 = vld [vmem:[%s0 + $0x160] sm:$0xff]
  %v59 = vld [vmem:[%s0 + $0x168] sm:$0xff]
  %v60 = vld [vmem:[%s0 + $0x170] sm:$0xff]
  %v61 = vld [vmem:[%s0 + $0x178] sm:$0xff]
  %v62 = vld [vmem:[%s0 + $0x180] sm:$0xff]
  %v63 = vld [vmem:[%s0 + $0x188] sm:$0xff]
  %v64 = vld [vmem:[%s0 + $0x190] sm:$0xff]
  %v65 = vld [vmem:[%s0 + $0x198] sm:$0xff]
  %v66 = vld [vmem:[%s0 + $0x1a0] sm:$0xff]
  %v67 = vld [vmem:[%s0 + $0x1a8] sm:$0xff]
  %v68 = vld [vmem:[%s0 + $0x1b0] sm:$0xff]
  %v69 = vld [vmem:[%s0 + $0x1b8] sm:$0xff]
  %v70 = vld [vmem:[%s0 + $0x1c0] sm:$0xff]
  %v71 = vld [vmem:[%s0 + $0x1c8] sm:$0xff]
  %v72 = vld [vmem:[%s0 + $0x1d0] sm:$0xff]
  %v73 = vld [vmem:[%s0 + $0x1d8] sm:$0xff]
  %v74 = vld [vmem:[%s0 + $0x1e0] sm:$0xff]
  %v75 = vld [vmem:[%s0 + $0x1e8] sm:$0xff]
  %v76 = vld [vmem:[%s0 + $0x1f0] sm:$0xff]
  %v77 = vld [vmem:[%s0 + $0x1f8] sm:$0xff]
  %v78 = vld [vmem:[%s1] sm:$0x1]
  %v80 = vlaneseq
  %v81 = vshrl.u32 %v80, 7
  %v82 = vsub.s32 0, %v81
  %v83 = vrot.slane %v78, %v82
  %v85 = vmul.f32 %v14, %v83
  %v86 = vmul.f32 %v15, %v83
  %v87 = vmul.f32 %v16, %v83
  %v88 = vmul.f32 %v17, %v83
  %v89 = vmul.f32 %v18, %v83
  %v90 = vmul.f32 %v19, %v83
  %v91 = vmul.f32 %v20, %v83
  %v92 = vmul.f32 %v21, %v83
  %v93 = vmul.f32 %v22, %v83
  %v94 = vmul.f32 %v23, %v83
  %v95 = vmul.f32 %v24, %v83
  %v96 = vmul.f32 %v25, %v83
  %v97 = vmul.f32 %v26, %v83
  %v98 = vmul.f32 %v27, %v83
  %v99 = vmul.f32 %v28, %v83
  %v100 = vmul.f32 %v29, %v83
  %v101 = vmul.f32 %v30, %v83
  %v102 = vmul.f32 %v31, %v83
  %v103 = vmul.f32 %v32, %v83
  %v104 = vmul.f32 %v33, %v83
  %v105 = vmul.f32 %v34, %v83
  %v106 = vmul.f32 %v35, %v83
  %v107 = vmul.f32 %v36, %v83
  %v108 = vmul.f32 %v37, %v83
  %v109 = vmul.f32 %v38, %v83
  %v110 = vmul.f32 %v39, %v83
  %v111 = vmul.f32 %v40, %v83
  %v112 = vmul.f32 %v41, %v83
  %v113 = vmul.f32 %v42, %v83
  %v114 = vmul.f32 %v43, %v83
  %v115 = vmul.f32 %v44, %v83
  %v116 = vmul.f32 %v45, %v83
  %v117 = vmul.f32 %v46, %v83
  %v118 = vmul.f32 %v47, %v83
  %v119 = vmul.f32 %v48, %v83
  %v120 = vmul.f32 %v49, %v83
  %v121 = vmul.f32 %v50, %v83
  %v122 = vmul.f32 %v51, %v83
  %v123 = vmul.f32 %v52, %v83
  %v124 = vmul.f32 %v53, %v83
  %v125 = vmul.f32 %v54, %v83
  %v126 = vmul.f32 %v55, %v83
  %v127 = vmul.f32 %v56, %v83
  %v128 = vmul.f32 %v57, %v83
  %v129 = vmul.f32 %v58, %v83
  %v130 = vmul.f32 %v59, %v83
  %v131 = vmul.f32 %v60, %v83
  %v132 = vmul.f32 %v61, %v83
  %v133 = vmul.f32 %v62, %v83
  %v134 = vmul.f32 %v63, %v83
  %v135 = vmul.f32 %v64, %v83
  %v136 = vmul.f32 %v65, %v83
  %v137 = vmul.f32 %v66, %v83
  %v138 = vmul.f32 %v67, %v83
  %v139 = vmul.f32 %v68, %v83
  %v140 = vmul.f32 %v69, %v83
  %v141 = vmul.f32 %v70, %v83
  %v142 = vmul.f32 %v71, %v83
  %v143 = vmul.f32 %v72, %v83
  %v144 = vmul.f32 %v73, %v83
  %v145 = vmul.f32 %v74, %v83
  %v146 = vmul.f32 %v75, %v83
  %v147 = vmul.f32 %v76, %v83
  %v148 = vmul.f32 %v77, %v83
  %v149 = vld [vmem:[%s2] sm:$0x1]
  %v151 = vlaneseq
  %v152 = vshrl.u32 %v151, 7
  %v153 = vsub.s32 0, %v152
  %v154 = vrot.slane %v149, %v153
  %v156 = vadd.f32 %v85, %v154
  %v157 = vadd.f32 %v86, %v154
  %v158 = vadd.f32 %v87, %v154
  %v159 = vadd.f32 %v88, %v154
  %v160 = vadd.f32 %v89, %v154
  %v161 = vadd.f32 %v90, %v154
  %v162 = vadd.f32 %v91, %v154
  %v163 = vadd.f32 %v92, %v154
  %v164 = vadd.f32 %v93, %v154
  %v165 = vadd.f32 %v94, %v154
  %v166 = vadd.f32 %v95, %v154
  %v167 = vadd.f32 %v96, %v154
  %v168 = vadd.f32 %v97, %v154
  %v169 = vadd.f32 %v98, %v154
  %v170 = vadd.f32 %v99, %v154
  %v171 = vadd.f32 %v100, %v154
  %v172 = vadd.f32 %v101, %v154
  %v173 = vadd.f32 %v102, %v154
  %v174 = vadd.f32 %v103, %v154
  %v175 = vadd.f32 %v104, %v154
  %v176 = vadd.f32 %v105, %v154
  %v177 = vadd.f32 %v106, %v154
  %v178 = vadd.f32 %v107, %v154
  %v179 = vadd.f32 %v108, %v154
  %v180 = vadd.f32 %v109, %v154
  %v181 = vadd.f32 %v110, %v154
  %v182 = vadd.f32 %v111, %v154
  %v183 = vadd.f32 %v112, %v154
  %v184 = vadd.f32 %v113, %v154
  %v185 = vadd.f32 %v114, %v154
  %v186 = vadd.f32 %v115, %v154
  %v187 = vadd.f32 %v116, %v154
  %v188 = vadd.f32 %v117, %v154
  %v189 = vadd.f32 %v118, %v154
  %v190 = vadd.f32 %v119, %v154
  %v191 = vadd.f32 %v120, %v154
  %v192 = vadd.f32 %v121, %v154
  %v193 = vadd.f32 %v122, %v154
  %v194 = vadd.f32 %v123, %v154
  %v195 = vadd.f32 %v124, %v154
  %v196 = vadd.f32 %v125, %v154
  %v197 = vadd.f32 %v126, %v154
  %v198 = vadd.f32 %v127, %v154
  %v199 = vadd.f32 %v128, %v154
  %v200 = vadd.f32 %v129, %v154
  %v201 = vadd.f32 %v130, %v154
  %v202 = vadd.f32 %v131, %v154
  %v203 = vadd.f32 %v132, %v154
  %v204 = vadd.f32 %v133, %v154
  %v205 = vadd.f32 %v134, %v154
  %v206 = vadd.f32 %v135, %v154
  %v207 = vadd.f32 %v136, %v154
  %v208 = vadd.f32 %v137, %v154
  %v209 = vadd.f32 %v138, %v154
  %v210 = vadd.f32 %v139, %v154
  %v211 = vadd.f32 %v140, %v154
  %v212 = vadd.f32 %v141, %v154
  %v213 = vadd.f32 %v142, %v154
  %v214 = vadd.f32 %v143, %v154
  %v215 = vadd.f32 %v144, %v154
  %v216 = vadd.f32 %v145, %v154
  %v217 = vadd.f32 %v146, %v154
  %v218 = vadd.f32 %v147, %v154
  %v219 = vadd.f32 %v148, %v154
  %v220 = vmax.f32 %v156, 0.0
  %v221 = vmax.f32 %v157, 0.0
  %v222 = vmax.f32 %v158, 0.0
  %v223 = vmax.f32 %v159, 0.0
  %v224 = vmax.f32 %v160, 0.0
  %v225 = vmax.f32 %v161, 0.0
  %v226 = vmax.f32 %v162, 0.0
  %v227 = vmax.f32 %v163, 0.0
  %v228 = vmax.f32 %v164, 0.0
  %v229 = vmax.f32 %v165, 0.0
  %v230 = vmax.f32 %v166, 0.0
  %v231 = vmax.f32 %v167, 0.0
  %v232 = vmax.f32 %v168, 0.0
  %v233 = vmax.f32 %v169, 0.0
  %v234 = vmax.f32 %v170, 0.0
  %v235 = vmax.f32 %v171, 0.0
  %v236 = vmax.f32 %v172, 0.0
  %v237 = vmax.f32 %v173, 0.0
  %v238 = vmax.f32 %v174, 0.0
  %v239 = vmax.f32 %v175, 0.0
  %v240 = vmax.f32 %v176, 0.0
  %v241 = vmax.f32 %v177, 0.0
  %v242 = vmax.f32 %v178, 0.0
  %v243 = vmax.f32 %v179, 0.0
  %v244 = vmax.f32 %v180, 0.0
  %v245 = vmax.f32 %v181, 0.0
  %v246 = vmax.f32 %v182, 0.0
  %v247 = vmax.f32 %v183, 0.0
  %v248 = vmax.f32 %v184, 0.0
  %v249 = vmax.f32 %v185, 0.0
  %v250 = vmax.f32 %v186, 0.0
  %v251 = vmax.f32 %v187, 0.0
  %v252 = vmax.f32 %v188, 0.0
  %v253 = vmax.f32 %v189, 0.0
  %v254 = vmax.f32 %v190, 0.0
  %v255 = vmax.f32 %v191, 0.0
  %v256 = vmax.f32 %v192, 0.0
  %v257 = vmax.f32 %v193, 0.0
  %v258 = vmax.f32 %v194, 0.0
  %v259 = vmax.f32 %v195, 0.0
  %v260 = vmax.f32 %v196, 0.0
  %v261 = vmax.f32 %v197, 0.0
  %v262 = vmax.f32 %v198, 0.0
  %v263 = vmax.f32 %v199, 0.0
  %v264 = vmax.f32 %v200, 0.0
  %v265 = vmax.f32 %v201, 0.0
  %v266 = vmax.f32 %v202, 0.0
  %v267 = vmax.f32 %v203, 0.0
  %v268 = vmax.f32 %v204, 0.0
  %v269 = vmax.f32 %v205, 0.0
  %v270 = vmax.f32 %v206, 0.0
  %v271 = vmax.f32 %v207, 0.0
  %v272 = vmax.f32 %v208, 0.0
  %v273 = vmax.f32 %v209, 0.0
  %v274 = vmax.f32 %v210, 0.0
  %v275 = vmax.f32 %v211, 0.0
  %v276 = vmax.f32 %v212, 0.0
  %v277 = vmax.f32 %v213, 0.0
  %v278 = vmax.f32 %v214, 0.0
  %v279 = vmax.f32 %v215, 0.0
  %v280 = vmax.f32 %v216, 0.0
  %v281 = vmax.f32 %v217, 0.0
  %v282 = vmax.f32 %v218, 0.0
  %v283 = vmax.f32 %v219, 0.0
  %v284 = vpack.c.bf16 %v221, %v220
  %v285 = vpack.c.bf16 %v223, %v222
  %v286 = vpack.c.bf16 %v225, %v224
  %v287 = vpack.c.bf16 %v227, %v226
  %v288 = vpack.c.bf16 %v229, %v228
  %v289 = vpack.c.bf16 %v231, %v230
  %v290 = vpack.c.bf16 %v233, %v232
  %v291 = vpack.c.bf16 %v235, %v234
  %v292 = vpack.c.bf16 %v237, %v236
  %v293 = vpack.c.bf16 %v239, %v238
  %v294 = vpack.c.bf16 %v241, %v240
  %v295 = vpack.c.bf16 %v243, %v242
  %v296 = vpack.c.bf16 %v245, %v244
  %v297 = vpack.c.bf16 %v247, %v246
  %v298 = vpack.c.bf16 %v249, %v248
  %v299 = vpack.c.bf16 %v251, %v250
  %v300 = vpack.c.bf16 %v253, %v252
  %v301 = vpack.c.bf16 %v255, %v254
  %v302 = vpack.c.bf16 %v257, %v256
  %v303 = vpack.c.bf16 %v259, %v258
  %v304 = vpack.c.bf16 %v261, %v260
  %v305 = vpack.c.bf16 %v263, %v262
  %v306 = vpack.c.bf16 %v265, %v264
  %v307 = vpack.c.bf16 %v267, %v266
  %v308 = vpack.c.bf16 %v269, %v268
  %v309 = vpack.c.bf16 %v271, %v270
  %v310 = vpack.c.bf16 %v273, %v272
  %v311 = vpack.c.bf16 %v275, %v274
  %v312 = vpack.c.bf16 %v277, %v276
  %v313 = vpack.c.bf16 %v279, %v278
  %v314 = vpack.c.bf16 %v281, %v280
  %v315 = vpack.c.bf16 %v283, %v282
  %v348 = vunpack.c.l.b16 %v284
  %v349 = vunpack.c.h.b16 %v284
  %v350 = vunpack.c.l.b16 %v285
  %v351 = vunpack.c.h.b16 %v285
  %v352 = vunpack.c.l.b16 %v286
  %v353 = vunpack.c.h.b16 %v286
  %v354 = vunpack.c.l.b16 %v287
  %v355 = vunpack.c.h.b16 %v287
  %v356 = vunpack.c.l.b16 %v288
  %v357 = vunpack.c.h.b16 %v288
  %v358 = vunpack.c.l.b16 %v289
  %v359 = vunpack.c.h.b16 %v289
  %v360 = vunpack.c.l.b16 %v290
  %v361 = vunpack.c.h.b16 %v290
  %v362 = vunpack.c.l.b16 %v291
  %v363 = vunpack.c.h.b16 %v291
  %v364 = vunpack.c.l.b16 %v292
  %v365 = vunpack.c.h.b16 %v292
  %v366 = vunpack.c.l.b16 %v293
  %v367 = vunpack.c.h.b16 %v293
  %v368 = vunpack.c.l.b16 %v294
  %v369 = vunpack.c.h.b16 %v294
  %v370 = vunpack.c.l.b16 %v295
  %v371 = vunpack.c.h.b16 %v295
  %v372 = vunpack.c.l.b16 %v296
  %v373 = vunpack.c.h.b16 %v296
  %v374 = vunpack.c.l.b16 %v297
  %v375 = vunpack.c.h.b16 %v297
  %v376 = vunpack.c.l.b16 %v298
  %v377 = vunpack.c.h.b16 %v298
  %v378 = vunpack.c.l.b16 %v299
  %v379 = vunpack.c.h.b16 %v299
  %v380 = vunpack.c.l.b16 %v300
  %v381 = vunpack.c.h.b16 %v300
  %v382 = vunpack.c.l.b16 %v301
  %v383 = vunpack.c.h.b16 %v301
  %v384 = vunpack.c.l.b16 %v302
  %v385 = vunpack.c.h.b16 %v302
  %v386 = vunpack.c.l.b16 %v303
  %v387 = vunpack.c.h.b16 %v303
  %v388 = vunpack.c.l.b16 %v304
  %v389 = vunpack.c.h.b16 %v304
  %v390 = vunpack.c.l.b16 %v305
  %v391 = vunpack.c.h.b16 %v305
  %v392 = vunpack.c.l.b16 %v306
  %v393 = vunpack.c.h.b16 %v306
  %v394 = vunpack.c.l.b16 %v307
  %v395 = vunpack.c.h.b16 %v307
  %v396 = vunpack.c.l.b16 %v308
  %v397 = vunpack.c.h.b16 %v308
  %v398 = vunpack.c.l.b16 %v309
  %v399 = vunpack.c.h.b16 %v309
  %v400 = vunpack.c.l.b16 %v310
  %v401 = vunpack.c.h.b16 %v310
  %v402 = vunpack.c.l.b16 %v311
  %v403 = vunpack.c.h.b16 %v311
  %v404 = vunpack.c.l.b16 %v312
  %v405 = vunpack.c.h.b16 %v312
  %v406 = vunpack.c.l.b16 %v313
  %v407 = vunpack.c.h.b16 %v313
  %v408 = vunpack.c.l.b16 %v314
  %v409 = vunpack.c.h.b16 %v314
  %v410 = vunpack.c.l.b16 %v315
  %v411 = vunpack.c.h.b16 %v315
  %v412 = vpack.c.b16 %v348, %v348
  %v413 = vpack.c.b16 %v349, %v349
  %v414 = vpack.c.b16 %v350, %v350
  %v415 = vpack.c.b16 %v351, %v351
  %v416 = vpack.c.b16 %v352, %v352
  %v417 = vpack.c.b16 %v353, %v353
  %v418 = vpack.c.b16 %v354, %v354
  %v419 = vpack.c.b16 %v355, %v355
  %v420 = vpack.c.b16 %v356, %v356
  %v421 = vpack.c.b16 %v357, %v357
  %v422 = vpack.c.b16 %v358, %v358
  %v423 = vpack.c.b16 %v359, %v359
  %v424 = vpack.c.b16 %v360, %v360
  %v425 = vpack.c.b16 %v361, %v361
  %v426 = vpack.c.b16 %v362, %v362
  %v427 = vpack.c.b16 %v363, %v363
  %v428 = vpack.c.b16 %v364, %v364
  %v429 = vpack.c.b16 %v365, %v365
  %v430 = vpack.c.b16 %v366, %v366
  %v431 = vpack.c.b16 %v367, %v367
  %v432 = vpack.c.b16 %v368, %v368
  %v433 = vpack.c.b16 %v369, %v369
  %v434 = vpack.c.b16 %v370, %v370
  %v435 = vpack.c.b16 %v371, %v371
  %v436 = vpack.c.b16 %v372, %v372
  %v437 = vpack.c.b16 %v373, %v373
  %v438 = vpack.c.b16 %v374, %v374
  %v439 = vpack.c.b16 %v375, %v375
  %v440 = vpack.c.b16 %v376, %v376
  %v441 = vpack.c.b16 %v377, %v377
  %v442 = vpack.c.b16 %v378, %v378
  %v443 = vpack.c.b16 %v379, %v379
  %v444 = vpack.c.b16 %v380, %v380
  %v445 = vpack.c.b16 %v381, %v381
  %v446 = vpack.c.b16 %v382, %v382
  %v447 = vpack.c.b16 %v383, %v383
  %v448 = vpack.c.b16 %v384, %v384
  %v449 = vpack.c.b16 %v385, %v385
  %v450 = vpack.c.b16 %v386, %v386
  %v451 = vpack.c.b16 %v387, %v387
  %v452 = vpack.c.b16 %v388, %v388
  %v453 = vpack.c.b16 %v389, %v389
  %v454 = vpack.c.b16 %v390, %v390
  %v455 = vpack.c.b16 %v391, %v391
  %v456 = vpack.c.b16 %v392, %v392
  %v457 = vpack.c.b16 %v393, %v393
  %v458 = vpack.c.b16 %v394, %v394
  %v459 = vpack.c.b16 %v395, %v395
  %v460 = vpack.c.b16 %v396, %v396
  %v461 = vpack.c.b16 %v397, %v397
  %v462 = vpack.c.b16 %v398, %v398
  %v463 = vpack.c.b16 %v399, %v399
  %v464 = vpack.c.b16 %v400, %v400
  %v465 = vpack.c.b16 %v401, %v401
  %v466 = vpack.c.b16 %v402, %v402
  %v467 = vpack.c.b16 %v403, %v403
  %v468 = vpack.c.b16 %v404, %v404
  %v469 = vpack.c.b16 %v405, %v405
  %v470 = vpack.c.b16 %v406, %v406
  %v471 = vpack.c.b16 %v407, %v407
  %v472 = vpack.c.b16 %v408, %v408
  %v473 = vpack.c.b16 %v409, %v409
  %v474 = vpack.c.b16 %v410, %v410
  %v475 = vpack.c.b16 %v411, %v411
  %540 = vst [vmem:[%s3] sm:$0xf] %v412
  %541 = vst [vmem:[%s3 + $0x4] sm:$0xf] %v413
  %542 = vst [vmem:[%s3 + $0x8] sm:$0xf] %v414
  %543 = vst [vmem:[%s3 + $0xc] sm:$0xf] %v415
  %544 = vst [vmem:[%s3 + $0x10] sm:$0xf] %v416
  %545 = vst [vmem:[%s3 + $0x14] sm:$0xf] %v417
  %546 = vst [vmem:[%s3 + $0x18] sm:$0xf] %v418
  %547 = vst [vmem:[%s3 + $0x1c] sm:$0xf] %v419
  %548 = vst [vmem:[%s3 + $0x20] sm:$0xf] %v420
  %549 = vst [vmem:[%s3 + $0x24] sm:$0xf] %v421
  %550 = vst [vmem:[%s3 + $0x28] sm:$0xf] %v422
  %551 = vst [vmem:[%s3 + $0x2c] sm:$0xf] %v423
  %552 = vst [vmem:[%s3 + $0x30] sm:$0xf] %v424
  %553 = vst [vmem:[%s3 + $0x34] sm:$0xf] %v425
  %554 = vst [vmem:[%s3 + $0x38] sm:$0xf] %v426
  %555 = vst [vmem:[%s3 + $0x3c] sm:$0xf] %v427
  %556 = vst [vmem:[%s3 + $0x40] sm:$0xf] %v428
  %557 = vst [vmem:[%s3 + $0x44] sm:$0xf] %v429
  %558 = vst [vmem:[%s3 + $0x48] sm:$0xf] %v430
  %559 = vst [vmem:[%s3 + $0x4c] sm:$0xf] %v431
  %560 = vst [vmem:[%s3 + $0x50] sm:$0xf] %v432
  %561 = vst [vmem:[%s3 + $0x54] sm:$0xf] %v433
  %562 = vst [vmem:[%s3 + $0x58] sm:$0xf] %v434
  %563 = vst [vmem:[%s3 + $0x5c] sm:$0xf] %v435
  %564 = vst [vmem:[%s3 + $0x60] sm:$0xf] %v436
  %565 = vst [vmem:[%s3 + $0x64] sm:$0xf] %v437
  %566 = vst [vmem:[%s3 + $0x68] sm:$0xf] %v438
  %567 = vst [vmem:[%s3 + $0x6c] sm:$0xf] %v439
  %568 = vst [vmem:[%s3 + $0x70] sm:$0xf] %v440
  %569 = vst [vmem:[%s3 + $0x74] sm:$0xf] %v441
  %570 = vst [vmem:[%s3 + $0x78] sm:$0xf] %v442
  %571 = vst [vmem:[%s3 + $0x7c] sm:$0xf] %v443
  %572 = vst [vmem:[%s3 + $0x80] sm:$0xf] %v444
  %573 = vst [vmem:[%s3 + $0x84] sm:$0xf] %v445
  %574 = vst [vmem:[%s3 + $0x88] sm:$0xf] %v446
  %575 = vst [vmem:[%s3 + $0x8c] sm:$0xf] %v447
  %576 = vst [vmem:[%s3 + $0x90] sm:$0xf] %v448
  %577 = vst [vmem:[%s3 + $0x94] sm:$0xf] %v449
  %578 = vst [vmem:[%s3 + $0x98] sm:$0xf] %v450
  %579 = vst [vmem:[%s3 + $0x9c] sm:$0xf] %v451
  %580 = vst [vmem:[%s3 + $0xa0] sm:$0xf] %v452
  %581 = vst [vmem:[%s3 + $0xa4] sm:$0xf] %v453
  %582 = vst [vmem:[%s3 + $0xa8] sm:$0xf] %v454
  %583 = vst [vmem:[%s3 + $0xac] sm:$0xf] %v455
  %584 = vst [vmem:[%s3 + $0xb0] sm:$0xf] %v456
  %585 = vst [vmem:[%s3 + $0xb4] sm:$0xf] %v457
  %586 = vst [vmem:[%s3 + $0xb8] sm:$0xf] %v458
  %587 = vst [vmem:[%s3 + $0xbc] sm:$0xf] %v459
  %588 = vst [vmem:[%s3 + $0xc0] sm:$0xf] %v460
  %589 = vst [vmem:[%s3 + $0xc4] sm:$0xf] %v461
  %590 = vst [vmem:[%s3 + $0xc8] sm:$0xf] %v462
  %591 = vst [vmem:[%s3 + $0xcc] sm:$0xf] %v463
  %592 = vst [vmem:[%s3 + $0xd0] sm:$0xf] %v464
  %593 = vst [vmem:[%s3 + $0xd4] sm:$0xf] %v465
  %594 = vst [vmem:[%s3 + $0xd8] sm:$0xf] %v466
  %595 = vst [vmem:[%s3 + $0xdc] sm:$0xf] %v467
  %596 = vst [vmem:[%s3 + $0xe0] sm:$0xf] %v468
  %597 = vst [vmem:[%s3 + $0xe4] sm:$0xf] %v469
  %598 = vst [vmem:[%s3 + $0xe8] sm:$0xf] %v470
  %599 = vst [vmem:[%s3 + $0xec] sm:$0xf] %v471
  %600 = vst [vmem:[%s3 + $0xf0] sm:$0xf] %v472
  %601 = vst [vmem:[%s3 + $0xf4] sm:$0xf] %v473
  %602 = vst [vmem:[%s3 + $0xf8] sm:$0xf] %v474
  %603 = vst [vmem:[%s3 + $0xfc] sm:$0xf] %v475
  // Predicated region
  $region14: #{generator_forward.52} parent=0 // pred_check
    _
  $region15: #{generator_forward.52} parent=0 // pred_check_branch
    %605 = sbr.rel (0) target = $region17
  $region16: #{generator_forward.52} parent=0 // pred_region
    _
  $region17: #{generator_forward.52} parent=0 // pred_fallthru
    _
  // Predicated region
  $region18: #{generator_forward.52} parent=0 // pred_check
    _
  $region19: #{generator_forward.52} parent=0 // pred_check_branch
    %607 = sbr.rel (0) target = $region21
  $region20: #{generator_forward.52} parent=0 // pred_region
    _
  $region21: #{generator_forward.52} parent=0 // pred_fallthru
    _

// kernel: generator_forward.56
$region0: #{generator_forward.56}
  #allocation0 [shape = 'u32[]', space=smem, size = 0x4, offset = 0x4, fixed_abs, tag = 'smem constant byte address 0x4 - core index']
  #allocation1 [shape = 'u32[144,128]{1,0:T(1,128)}', space=vmem, size = 0x12000, scoped, tag = 'internal scratch']
  #allocation2 [shape = 'f32[512,128]{1,0:T(8,128)}', space=vmem, size = 0x40000, scoped, tag = 'scratch operand']
  %s0 = inlined_call_operand.vmem [shape: bf16[2048,128], index: 0, kind: input, shape index: {}]
  %s1 = inlined_call_operand.vmem [shape: bf16[128,128], index: 1, kind: input, shape index: {}]
  %s2 = inlined_call_operand.vmem [shape: f32[2048,128], index: 2, kind: output, shape index: {}]
  %s3 = sld [smem:[#allocation0]]
  $region49: #{generator_forward.56} parent=0
    _
  %s5 = ssub.s32 1, %s3
  %s6 = scalar_select 0, %s5, %s3
  loop: start=0, step=1, limit=6
  $region2: #{generator_forward.56} parent=0 // loop_pre_header
    _
  $region3: #{generator_forward.56} parent=0 // loop_header
    %s8 = sphi 0, %s12
    %p9 = scmp.ge.s32.totalorder %s8, 6
    %s15 = sphi 0, %s34
    %s16 = sphi 0, %s30
    %s17 = sphi 0, %s26
    %s18 = sphi 0, %s15
    %s19 = sphi 0, %s16
    %s20 = sphi 0, %s17
    %s21 = sphi 0, %s18
    %s22 = sphi 0, %s19
    %s23 = sphi 0, %s20
    %s39 = sphi 0, %s41
    %s42 = sphi 0, %s39
    %s43 = sphi 0, %s42
    %s59 = sphi 0, %s43
    %s67 = sphi 0, %s69
    %s70 = sphi 0, %s67
    %s71 = sphi 0, %s70
    %s87 = sphi 0, %s71
    %s95 = sphi 0, %s97
    %s98 = sphi 0, %s95
    %s99 = sphi 0, %s98
    %s115 = sphi 0, %s99
  $region4: #{generator_forward.56} parent=0 // loop_header_branch
    %11 = sbr.rel (%p9) target = $region8
  $region5: #{generator_forward.56} parent=0 // loop_body
    %s13 = ssub.s32 %s8, 1
    %s14 = ssub.s32 %s8, 2
    %s24 = sadd.s32 1, %s17
    %p25 = scmp.ge.s32.totalorder %s24, 1
    %s26 = scalar_select %p25, 0, %s24
    %s27 = sadd.s32 1, %s16
    %s28 = scalar_select %p25, %s27, %s16
    %p29 = scmp.ge.s32.totalorder %s28, 1
    %s30 = scalar_select %p29, 0, %s28
    %s31 = sadd.s32 1, %s15
    %s32 = scalar_select %p29, %s31, %s15
    %p33 = scmp.ge.s32.totalorder %s32, 4
    %s34 = scalar_select %p33, 0, %s32
    %s35 = ssub.s32 %s15, %s34
    %s36 = ssub.s32 %s17, %s26
    %s37 = sor.u32 %s35, %s36
    %p38 = scmp.eq.s32.totalorder %s37, 0
    %s40 = sadd.s32 %s39, 1
    %s41 = scalar_select %p38, %s39, %s40
    %p44 = pneg %p38
    %p45 = scmp.eq.s32.totalorder %s8, 3
    %p46 = por %p44, %p45
    %p47 = scmp.ne.s32.totalorder %s39, %s42
    %p48 = scmp.eq.s32.totalorder %s8, 0
    %p49 = por %p47, %p48
    %p50 = scmp.ne.s32.totalorder %s39, %s42
    %p51 = scmp.eq.s32.totalorder %s13, 3
    %p52 = por %p50, %p51
    %p53 = scmp.ne.s32.totalorder %s42, %s43
    %p54 = scmp.eq.s32.totalorder %s13, 0
    %p55 = por %p53, %p54
    %p56 = scmp.ne.s32.totalorder %s42, %s43
    %p57 = scmp.eq.s32.totalorder %s14, 3
    %p58 = por %p56, %p57
    %p60 = scmp.ne.s32.totalorder %s43, %s59
    %p61 = scmp.eq.s32.totalorder %s14, 0
    %p62 = por %p60, %p61
    %s63 = ssub.s32 %s17, %s26
    %s64 = ssub.s32 %s16, %s30
    %s65 = sor.u32 %s63, %s64
    %p66 = scmp.eq.s32.totalorder %s65, 0
    %s68 = sadd.s32 %s67, 1
    %s69 = scalar_select %p66, %s67, %s68
    %p72 = pneg %p66
    %p73 = scmp.eq.s32.totalorder %s8, 3
    %p74 = por %p72, %p73
    %p75 = scmp.ne.s32.totalorder %s67, %s70
    %p76 = scmp.eq.s32.totalorder %s8, 0
    %p77 = por %p75, %p76
    %p78 = scmp.ne.s32.totalorder %s67, %s70
    %p79 = scmp.eq.s32.totalorder %s13, 3
    %p80 = por %p78, %p79
    %p81 = scmp.ne.s32.totalorder %s70, %s71
    %p82 = scmp.eq.s32.totalorder %s13, 0
    %p83 = por %p81, %p82
    %p84 = scmp.ne.s32.totalorder %s70, %s71
    %p85 = scmp.eq.s32.totalorder %s14, 3
    %p86 = por %p84, %p85
    %p88 = scmp.ne.s32.totalorder %s71, %s87
    %p89 = scmp.eq.s32.totalorder %s14, 0
    %p90 = por %p88, %p89
    %s91 = ssub.s32 %s15, %s34
    %s92 = ssub.s32 %s16, %s30
    %s93 = sor.u32 %s91, %s92
    %p94 = scmp.eq.s32.totalorder %s93, 0
    %s96 = sadd.s32 %s95, 1
    %s97 = scalar_select %p94, %s95, %s96
    %p100 = pneg %p94
    %p101 = scmp.eq.s32.totalorder %s8, 3
    %p102 = por %p100, %p101
    %p103 = scmp.ne.s32.totalorder %s95, %s98
    %p104 = scmp.eq.s32.totalorder %s8, 0
    %p105 = por %p103, %p104
    %p106 = scmp.ne.s32.totalorder %s95, %s98
    %p107 = scmp.eq.s32.totalorder %s13, 3
    %p108 = por %p106, %p107
    %p109 = scmp.ne.s32.totalorder %s98, %s99
    %p110 = scmp.eq.s32.totalorder %s13, 0
    %p111 = por %p109, %p110
    %p112 = scmp.ne.s32.totalorder %s98, %s99
    %p113 = scmp.eq.s32.totalorder %s14, 3
    %p114 = por %p112, %p113
    %p116 = scmp.ne.s32.totalorder %s99, %s115
    %p117 = scmp.eq.s32.totalorder %s14, 0
    %p118 = por %p116, %p117
    %p119 = scmp.le.s32.totalorder 1, %s8
    %p120 = scmp.lt.s32.totalorder %s8, 5
    %p121 = pnand %p119, %p120
    %p122 = pneg %p121
    // Predicated region
    $region9: #{generator_forward.56} parent=5 // pred_check
      _
    $region10: #{generator_forward.56} parent=5 // pred_check_branch
      %124 = sbr.rel (%p121) target = $region12
    $region11: #{generator_forward.56} parent=5 // pred_region
      %s125 = ssub.s32 %s8, 1
      // Predicated region
      $region13: #{generator_forward.56} parent=11 // pred_check
        %p126 = pneg %p83
      $region14: #{generator_forward.56} parent=11 // pred_check_branch
        %128 = sbr.rel (%p126) target = $region16
      $region15: #{generator_forward.56} parent=11 // pred_region
        %s129 = smul.u32 16, %s20
        %p130 = scmp.lt.s32.totalorder %s129, 15
        %s131 = scalar_select %p130, %s129, 15
        %p132 = scmp.lt.s32.totalorder %s19, 0
        %s133 = scalar_select %p132, %s19, 0
        %s134 = sadd.s32 %s133, %s131
        %s135 = smul.addr %s134, 4
        %s136 = scalar_lea.vmem %s1, %s135
        %s137 = smul.u32 16, %s20
      $region16: #{generator_forward.56} parent=11 // pred_fallthru
        _
    $region12: #{generator_forward.56} parent=5 // pred_fallthru
      _
    %p138 = scmp.lt.s32.totalorder %s8, 4
    // Predicated region
    $region17: #{generator_forward.56} parent=5 // pred_check
      %p139 = pneg %p138
    $region18: #{generator_forward.56} parent=5 // pred_check_branch
      %141 = sbr.rel (%p139) target = $region20
    $region19: #{generator_forward.56} parent=5 // pred_region
      // Predicated region
      $region21: #{generator_forward.56} parent=19 // pred_check
        %p142 = pneg %p49
      $region22: #{generator_forward.56} parent=19 // pred_check_branch
        %144 = sbr.rel (%p142) target = $region24
      $region23: #{generator_forward.56} parent=19 // pred_region
        %s145 = smul.u32 64, %s15
        %p146 = scmp.lt.s32.totalorder %s145, 255
        %s147 = scalar_select %p146, %s145, 255
        %p148 = scmp.lt.s32.totalorder %s17, 0
        %s149 = scalar_select %p148, %s17, 0
        %s150 = sadd.s32 %s149, %s147
        %s151 = smul.addr %s150, 4
        %s152 = scalar_lea.vmem %s0, %s151
        %s153 = smul.u32 64, %s15
      $region24: #{generator_forward.56} parent=19 // pred_fallthru
        _
    $region20: #{generator_forward.56} parent=5 // pred_fallthru
      _
    %p154 = scmp.le.s32.totalorder 1, %s8
    %p155 = scmp.lt.s32.totalorder %s8, 5
    %p156 = pnand %p154, %p155
    %p157 = pneg %p156
    // Predicated region
    $region25: #{generator_forward.56} parent=5 // pred_check
      _
    $region26: #{generator_forward.56} parent=5 // pred_check_branch
      %159 = sbr.rel (%p156) target = $region28
    $region27: #{generator_forward.56} parent=5 // pred_region
      %s160 = ssub.s32 %s8, 1
      %s161 = smul.u32 64, %s18
      %p162 = scmp.lt.s32.totalorder %s161, 255
      %s163 = scalar_select %p162, %s161, 255
      %p164 = scmp.lt.s32.totalorder %s20, 0
      %s165 = scalar_select %p164, %s20, 0
      %s166 = sadd.s32 %s165, %s163
      %s167 = smul.addr %s166, 4
      %s168 = scalar_lea.vmem %s0, %s167
      %p169 = pneg %p55
      %p170 = pneg %p52
      %s171 = smul.u32 16, %s20
      %p172 = scmp.lt.s32.totalorder %s171, 15
      %s173 = scalar_select %p172, %s171, 15
      %p174 = scmp.lt.s32.totalorder %s19, 0
      %s175 = scalar_select %p174, %s19, 0
      %s176 = sadd.s32 %s175, %s173
      %s177 = smul.addr %s176, 4
      %s178 = scalar_lea.vmem %s1, %s177
      %p179 = pneg %p83
      %p180 = pneg %p80
      %p181 = pneg %p111
      %p182 = pneg %p108
      %s183 = smul.u32 64, %s18
      %p184 = scmp.lt.s32.totalorder %s183, 255
      %s185 = scalar_select %p184, %s183, 255
      %p186 = scmp.lt.s32.totalorder %s19, 0
      %s187 = scalar_select %p186, %s19, 0
      %s188 = sadd.s32 %s187, %s185
      %s189 = smul.addr %s188, 8
      %s190 = scalar_lea.vmem %s2, %s189
      %s191 = smul.u32 64, %s18
      %p192 = scmp.lt.s32.totalorder %s191, 255
      %s193 = scalar_select %p192, %s191, 255
      %p194 = scmp.lt.s32.totalorder %s20, 0
      %s195 = scalar_select %p194, %s20, 0
      %s196 = sadd.s32 %s195, %s193
      %s197 = smul.addr %s196, 4
      %s198 = scalar_lea.vmem %s0, %s197
      %s199 = smul.u32 64, %s18
      %s200 = smul.u32 16, %s20
      %p201 = scmp.lt.s32.totalorder %s200, 15
      %s202 = scalar_select %p201, %s200, 15
      %p203 = scmp.lt.s32.totalorder %s19, 0
      %s204 = scalar_select %p203, %s19, 0
      %s205 = sadd.s32 %s204, %s202
      %s206 = smul.addr %s205, 4
      %s207 = scalar_lea.vmem %s1, %s206
      %s208 = smul.u32 16, %s20
      %s209 = smul.u32 64, %s18
      %p210 = scmp.lt.s32.totalorder %s209, 255
      %s211 = scalar_select %p210, %s209, 255
      %p212 = scmp.lt.s32.totalorder %s19, 0
      %s213 = scalar_select %p212, %s19, 0
      %s214 = sadd.s32 %s213, %s211
      %s215 = smul.addr %s214, 8
      %s216 = scalar_lea.vmem %s2, %s215
      %s217 = smul.u32 64, %s18
      %p219 = scmp.eq.s32.totalorder %s20, 0
      // Predicated region
      $region29: #{generator_forward.56} parent=27 // pred_check
        %p220 = pneg %p219
      $region30: #{generator_forward.56} parent=27 // pred_check_branch
        %222 = sbr.rel (%p220) target = $region32
      $region31: #{generator_forward.56} parent=27 // pred_region
        %223 = vst [vmem:[#allocation2] sm:$0xff] 0.0
        %224 = vst [vmem:[#allocation2 + $0x8] sm:$0xff] 0.0
        %225 = vst [vmem:[#allocation2 + $0x10] sm:$0xff] 0.0
        %226 = vst [vmem:[#allocation2 + $0x18] sm:$0xff] 0.0
        %227 = vst [vmem:[#allocation2 + $0x20] sm:$0xff] 0.0
        %228 = vst [vmem:[#allocation2 + $0x28] sm:$0xff] 0.0
        %229 = vst [vmem:[#allocation2 + $0x30] sm:$0xff] 0.0
        %230 = vst [vmem:[#allocation2 + $0x38] sm:$0xff] 0.0
        %231 = vst [vmem:[#allocation2 + $0x40] sm:$0xff] 0.0
        %232 = vst [vmem:[#allocation2 + $0x48] sm:$0xff] 0.0
        %233 = vst [vmem:[#allocation2 + $0x50] sm:$0xff] 0.0
        %234 = vst [vmem:[#allocation2 + $0x58] sm:$0xff] 0.0
        %235 = vst [vmem:[#allocation2 + $0x60] sm:$0xff] 0.0
        %236 = vst [vmem:[#allocation2 + $0x68] sm:$0xff] 0.0
        %237 = vst [vmem:[#allocation2 + $0x70] sm:$0xff] 0.0
        %238 = vst [vmem:[#allocation2 + $0x78] sm:$0xff] 0.0
        %239 = vst [vmem:[#allocation2 + $0x80] sm:$0xff] 0.0
        %240 = vst [vmem:[#allocation2 + $0x88] sm:$0xff] 0.0
        %241 = vst [vmem:[#allocation2 + $0x90] sm:$0xff] 0.0
        %242 = vst [vmem:[#allocation2 + $0x98] sm:$0xff] 0.0
        %243 = vst [vmem:[#allocation2 + $0xa0] sm:$0xff] 0.0
        %244 = vst [vmem:[#allocation2 + $0xa8] sm:$0xff] 0.0
        %245 = vst [vmem:[#allocation2 + $0xb0] sm:$0xff] 0.0
        %246 = vst [vmem:[#allocation2 + $0xb8] sm:$0xff] 0.0
        %247 = vst [vmem:[#allocation2 + $0xc0] sm:$0xff] 0.0
        %248 = vst [vmem:[#allocation2 + $0xc8] sm:$0xff] 0.0
        %249 = vst [vmem:[#allocation2 + $0xd0] sm:$0xff] 0.0
        %250 = vst [vmem:[#allocation2 + $0xd8] sm:$0xff] 0.0
        %251 = vst [vmem:[#allocation2 + $0xe0] sm:$0xff] 0.0
        %252 = vst [vmem:[#allocation2 + $0xe8] sm:$0xff] 0.0
        %253 = vst [vmem:[#allocation2 + $0xf0] sm:$0xff] 0.0
        %254 = vst [vmem:[#allocation2 + $0xf8] sm:$0xff] 0.0
        %255 = vst [vmem:[#allocation2 + $0x100] sm:$0xff] 0.0
        %256 = vst [vmem:[#allocation2 + $0x108] sm:$0xff] 0.0
        %257 = vst [vmem:[#allocation2 + $0x110] sm:$0xff] 0.0
        %258 = vst [vmem:[#allocation2 + $0x118] sm:$0xff] 0.0
        %259 = vst [vmem:[#allocation2 + $0x120] sm:$0xff] 0.0
        %260 = vst [vmem:[#allocation2 + $0x128] sm:$0xff] 0.0
        %261 = vst [vmem:[#allocation2 + $0x130] sm:$0xff] 0.0
        %262 = vst [vmem:[#allocation2 + $0x138] sm:$0xff] 0.0
        %263 = vst [vmem:[#allocation2 + $0x140] sm:$0xff] 0.0
        %264 = vst [vmem:[#allocation2 + $0x148] sm:$0xff] 0.0
        %265 = vst [vmem:[#allocation2 + $0x150] sm:$0xff] 0.0
        %266 = vst [vmem:[#allocation2 + $0x158] sm:$0xff] 0.0
        %267 = vst [vmem:[#allocation2 + $0x160] sm:$0xff] 0.0
        %268 = vst [vmem:[#allocation2 + $0x168] sm:$0xff] 0.0
        %269 = vst [vmem:[#allocation2 + $0x170] sm:$0xff] 0.0
        %270 = vst [vmem:[#allocation2 + $0x178] sm:$0xff] 0.0
        %271 = vst [vmem:[#allocation2 + $0x180] sm:$0xff] 0.0
        %272 = vst [vmem:[#allocation2 + $0x188] sm:$0xff] 0.0
        %273 = vst [vmem:[#allocation2 + $0x190] sm:$0xff] 0.0
        %274 = vst [vmem:[#allocation2 + $0x198] sm:$0xff] 0.0
        %275 = vst [vmem:[#allocation2 + $0x1a0] sm:$0xff] 0.0
        %276 = vst [vmem:[#allocation2 + $0x1a8] sm:$0xff] 0.0
        %277 = vst [vmem:[#allocation2 + $0x1b0] sm:$0xff] 0.0
        %278 = vst [vmem:[#allocation2 + $0x1b8] sm:$0xff] 0.0
        %279 = vst [vmem:[#allocation2 + $0x1c0] sm:$0xff] 0.0
        %280 = vst [vmem:[#allocation2 + $0x1c8] sm:$0xff] 0.0
        %281 = vst [vmem:[#allocation2 + $0x1d0] sm:$0xff] 0.0
        %282 = vst [vmem:[#allocation2 + $0x1d8] sm:$0xff] 0.0
        %283 = vst [vmem:[#allocation2 + $0x1e0] sm:$0xff] 0.0
        %284 = vst [vmem:[#allocation2 + $0x1e8] sm:$0xff] 0.0
        %285 = vst [vmem:[#allocation2 + $0x1f0] sm:$0xff] 0.0
        %286 = vst [vmem:[#allocation2 + $0x1f8] sm:$0xff] 0.0
      $region32: #{generator_forward.56} parent=27 // pred_fallthru
        _
      %v287 = vld [vmem:[#allocation2] sm:$0xff]
      %v288 = vld [vmem:[#allocation2 + $0x8] sm:$0xff]
      %v289 = vld [vmem:[#allocation2 + $0x10] sm:$0xff]
      %v290 = vld [vmem:[#allocation2 + $0x18] sm:$0xff]
      %v291 = vld [vmem:[#allocation2 + $0x20] sm:$0xff]
      %v292 = vld [vmem:[#allocation2 + $0x28] sm:$0xff]
      %v293 = vld [vmem:[#allocation2 + $0x30] sm:$0xff]
      %v294 = vld [vmem:[#allocation2 + $0x38] sm:$0xff]
      %v295 = vld [vmem:[#allocation2 + $0x40] sm:$0xff]
      %v296 = vld [vmem:[#allocation2 + $0x48] sm:$0xff]
      %v297 = vld [vmem:[#allocation2 + $0x50] sm:$0xff]
      %v298 = vld [vmem:[#allocation2 + $0x58] sm:$0xff]
      %v299 = vld [vmem:[#allocation2 + $0x60] sm:$0xff]
      %v300 = vld [vmem:[#allocation2 + $0x68] sm:$0xff]
      %v301 = vld [vmem:[#allocation2 + $0x70] sm:$0xff]
      %v302 = vld [vmem:[#allocation2 + $0x78] sm:$0xff]
      %v303 = vld [vmem:[#allocation2 + $0x80] sm:$0xff]
      %v304 = vld [vmem:[#allocation2 + $0x88] sm:$0xff]
      %v305 = vld [vmem:[#allocation2 + $0x90] sm:$0xff]
      %v306 = vld [vmem:[#allocation2 + $0x98] sm:$0xff]
      %v307 = vld [vmem:[#allocation2 + $0xa0] sm:$0xff]
      %v308 = vld [vmem:[#allocation2 + $0xa8] sm:$0xff]
      %v309 = vld [vmem:[#allocation2 + $0xb0] sm:$0xff]
      %v310 = vld [vmem:[#allocation2 + $0xb8] sm:$0xff]
      %v311 = vld [vmem:[#allocation2 + $0xc0] sm:$0xff]
      %v312 = vld [vmem:[#allocation2 + $0xc8] sm:$0xff]
      %v313 = vld [vmem:[#allocation2 + $0xd0] sm:$0xff]
      %v314 = vld [vmem:[#allocation2 + $0xd8] sm:$0xff]
      %v315 = vld [vmem:[#allocation2 + $0xe0] sm:$0xff]
      %v316 = vld [vmem:[#allocation2 + $0xe8] sm:$0xff]
      %v317 = vld [vmem:[#allocation2 + $0xf0] sm:$0xff]
      %v318 = vld [vmem:[#allocation2 + $0xf8] sm:$0xff]
      %v319 = vld [vmem:[#allocation2 + $0x100] sm:$0xff]
      %v320 = vld [vmem:[#allocation2 + $0x108] sm:$0xff]
      %v321 = vld [vmem:[#allocation2 + $0x110] sm:$0xff]
      %v322 = vld [vmem:[#allocation2 + $0x118] sm:$0xff]
      %v323 = vld [vmem:[#allocation2 + $0x120] sm:$0xff]
      %v324 = vld [vmem:[#allocation2 + $0x128] sm:$0xff]
      %v325 = vld [vmem:[#allocation2 + $0x130] sm:$0xff]
      %v326 = vld [vmem:[#allocation2 + $0x138] sm:$0xff]
      %v327 = vld [vmem:[#allocation2 + $0x140] sm:$0xff]
      %v328 = vld [vmem:[#allocation2 + $0x148] sm:$0xff]
      %v329 = vld [vmem:[#allocation2 + $0x150] sm:$0xff]
      %v330 = vld [vmem:[#allocation2 + $0x158] sm:$0xff]
      %v331 = vld [vmem:[#allocation2 + $0x160] sm:$0xff]
      %v332 = vld [vmem:[#allocation2 + $0x168] sm:$0xff]
      %v333 = vld [vmem:[#allocation2 + $0x170] sm:$0xff]
      %v334 = vld [vmem:[#allocation2 + $0x178] sm:$0xff]
      %v335 = vld [vmem:[#allocation2 + $0x180] sm:$0xff]
      %v336 = vld [vmem:[#allocation2 + $0x188] sm:$0xff]
      %v337 = vld [vmem:[#allocation2 + $0x190] sm:$0xff]
      %v338 = vld [vmem:[#allocation2 + $0x198] sm:$0xff]
      %v339 = vld [vmem:[#allocation2 + $0x1a0] sm:$0xff]
      %v340 = vld [vmem:[#allocation2 + $0x1a8] sm:$0xff]
      %v341 = vld [vmem:[#allocation2 + $0x1b0] sm:$0xff]
      %v342 = vld [vmem:[#allocation2 + $0x1b8] sm:$0xff]
      %v343 = vld [vmem:[#allocation2 + $0x1c0] sm:$0xff]
      %v344 = vld [vmem:[#allocation2 + $0x1c8] sm:$0xff]
      %v345 = vld [vmem:[#allocation2 + $0x1d0] sm:$0xff]
      %v346 = vld [vmem:[#allocation2 + $0x1d8] sm:$0xff]
      %v347 = vld [vmem:[#allocation2 + $0x1e0] sm:$0xff]
      %v348 = vld [vmem:[#allocation2 + $0x1e8] sm:$0xff]
      %v349 = vld [vmem:[#allocation2 + $0x1f0] sm:$0xff]
      %v350 = vld [vmem:[#allocation2 + $0x1f8] sm:$0xff]
      %v351 = vld [vmem:[%s198] sm:$0xf]
      %v352 = vld [vmem:[%s198 + $0x4] sm:$0xf]
      %v353 = vld [vmem:[%s198 + $0x8] sm:$0xf]
      %v354 = vld [vmem:[%s198 + $0xc] sm:$0xf]
      %v355 = vld [vmem:[%s198 + $0x10] sm:$0xf]
      %v356 = vld [vmem:[%s198 + $0x14] sm:$0xf]
      %v357 = vld [vmem:[%s198 + $0x18] sm:$0xf]
      %v358 = vld [vmem:[%s198 + $0x1c] sm:$0xf]
      %v359 = vld [vmem:[%s198 + $0x20] sm:$0xf]
      %v360 = vld [vmem:[%s198 + $0x24] sm:$0xf]
      %v361 = vld [vmem:[%s198 + $0x28] sm:$0xf]
      %v362 = vld [vmem:[%s198 + $0x2c] sm:$0xf]
      %v363 = vld [vmem:[%s198 + $0x30] sm:$0xf]
      %v364 = vld [vmem:[%s198 + $0x34] sm:$0xf]
      %v365 = vld [vmem:[%s198 + $0x38] sm:$0xf]
      %v366 = vld [vmem:[%s198 + $0x3c] sm:$0xf]
      %v367 = vld [vmem:[%s198 + $0x40] sm:$0xf]
      %v368 = vld [vmem:[%s198 + $0x44] sm:$0xf]
      %v369 = vld [vmem:[%s198 + $0x48] sm:$0xf]
      %v370 = vld [vmem:[%s198 + $0x4c] sm:$0xf]
      %v371 = vld [vmem:[%s198 + $0x50] sm:$0xf]
      %v372 = vld [vmem:[%s198 + $0x54] sm:$0xf]
      %v373 = vld [vmem:[%s198 + $0x58] sm:$0xf]
      %v374 = vld [vmem:[%s198 + $0x5c] sm:$0xf]
      %v375 = vld [vmem:[%s198 + $0x60] sm:$0xf]
      %v376 = vld [vmem:[%s198 + $0x64] sm:$0xf]
      %v377 = vld [vmem:[%s198 + $0x68] sm:$0xf]
      %v378 = vld [vmem:[%s198 + $0x6c] sm:$0xf]
      %v379 = vld [vmem:[%s198 + $0x70] sm:$0xf]
      %v380 = vld [vmem:[%s198 + $0x74] sm:$0xf]
      %v381 = vld [vmem:[%s198 + $0x78] sm:$0xf]
      %v382 = vld [vmem:[%s198 + $0x7c] sm:$0xf]
      %v383 = vld [vmem:[%s198 + $0x80] sm:$0xf]
      %v384 = vld [vmem:[%s198 + $0x84] sm:$0xf]
      %v385 = vld [vmem:[%s198 + $0x88] sm:$0xf]
      %v386 = vld [vmem:[%s198 + $0x8c] sm:$0xf]
      %v387 = vld [vmem:[%s198 + $0x90] sm:$0xf]
      %v388 = vld [vmem:[%s198 + $0x94] sm:$0xf]
      %v389 = vld [vmem:[%s198 + $0x98] sm:$0xf]
      %v390 = vld [vmem:[%s198 + $0x9c] sm:$0xf]
      %v391 = vld [vmem:[%s198 + $0xa0] sm:$0xf]
      %v392 = vld [vmem:[%s198 + $0xa4] sm:$0xf]
      %v393 = vld [vmem:[%s198 + $0xa8] sm:$0xf]
      %v394 = vld [vmem:[%s198 + $0xac] sm:$0xf]
      %v395 = vld [vmem:[%s198 + $0xb0] sm:$0xf]
      %v396 = vld [vmem:[%s198 + $0xb4] sm:$0xf]
      %v397 = vld [vmem:[%s198 + $0xb8] sm:$0xf]
      %v398 = vld [vmem:[%s198 + $0xbc] sm:$0xf]
      %v399 = vld [vmem:[%s198 + $0xc0] sm:$0xf]
      %v400 = vld [vmem:[%s198 + $0xc4] sm:$0xf]
      %v401 = vld [vmem:[%s198 + $0xc8] sm:$0xf]
      %v402 = vld [vmem:[%s198 + $0xcc] sm:$0xf]
      %v403 = vld [vmem:[%s198 + $0xd0] sm:$0xf]
      %v404 = vld [vmem:[%s198 + $0xd4] sm:$0xf]
      %v405 = vld [vmem:[%s198 + $0xd8] sm:$0xf]
      %v406 = vld [vmem:[%s198 + $0xdc] sm:$0xf]
      %v407 = vld [vmem:[%s198 + $0xe0] sm:$0xf]
      %v408 = vld [vmem:[%s198 + $0xe4] sm:$0xf]
      %v409 = vld [vmem:[%s198 + $0xe8] sm:$0xf]
      %v410 = vld [vmem:[%s198 + $0xec] sm:$0xf]
      %v411 = vld [vmem:[%s198 + $0xf0] sm:$0xf]
      %v412 = vld [vmem:[%s198 + $0xf4] sm:$0xf]
      %v413 = vld [vmem:[%s198 + $0xf8] sm:$0xf]
      %v414 = vld [vmem:[%s198 + $0xfc] sm:$0xf]
      %v415 = vld [vmem:[%s207] sm:$0xf]
      %v416 = vld [vmem:[%s207 + $0x4] sm:$0xf]
      %v417 = vld [vmem:[%s207 + $0x8] sm:$0xf]
      %v418 = vld [vmem:[%s207 + $0xc] sm:$0xf]
      %v419 = vld [vmem:[%s207 + $0x10] sm:$0xf]
      %v420 = vld [vmem:[%s207 + $0x14] sm:$0xf]
      %v421 = vld [vmem:[%s207 + $0x18] sm:$0xf]
      %v422 = vld [vmem:[%s207 + $0x1c] sm:$0xf]
      %v423 = vld [vmem:[%s207 + $0x20] sm:$0xf]
      %v424 = vld [vmem:[%s207 + $0x24] sm:$0xf]
      %v425 = vld [vmem:[%s207 + $0x28] sm:$0xf]
      %v426 = vld [vmem:[%s207 + $0x2c] sm:$0xf]
      %v427 = vld [vmem:[%s207 + $0x30] sm:$0xf]
      %v428 = vld [vmem:[%s207 + $0x34] sm:$0xf]
      %v429 = vld [vmem:[%s207 + $0x38] sm:$0xf]
      %v430 = vld [vmem:[%s207 + $0x3c] sm:$0xf]
      %v495 = vunpack.c.l.b16 %v351
      %v496 = vunpack.c.l.b16 %v352
      %v497 = vunpack.c.l.b16 %v353
      %v498 = vunpack.c.l.b16 %v354
      %v499 = vunpack.c.l.b16 %v355
      %v500 = vunpack.c.l.b16 %v356
      %v501 = vunpack.c.l.b16 %v357
      %v502 = vunpack.c.l.b16 %v358
      %v503 = vunpack.c.l.b16 %v359
      %v504 = vunpack.c.l.b16 %v360
      %v505 = vunpack.c.l.b16 %v361
      %v506 = vunpack.c.l.b16 %v362
      %v507 = vunpack.c.l.b16 %v363
      %v508 = vunpack.c.l.b16 %v364
      %v509 = vunpack.c.l.b16 %v365
      %v510 = vunpack.c.l.b16 %v366
      %v511 = vunpack.c.l.b16 %v367
      %v512 = vunpack.c.l.b16 %v368
      %v513 = vunpack.c.l.b16 %v369
      %v514 = vunpack.c.l.b16 %v370
      %v515 = vunpack.c.l.b16 %v371
      %v516 = vunpack.c.l.b16 %v372
      %v517 = vunpack.c.l.b16 %v373
      %v518 = vunpack.c.l.b16 %v374
      %v519 = vunpack.c.l.b16 %v375
      %v520 = vunpack.c.l.b16 %v376
      %v521 = vunpack.c.l.b16 %v377
      %v522 = vunpack.c.l.b16 %v378
      %v523 = vunpack.c.l.b16 %v379
      %v524 = vunpack.c.l.b16 %v380
      %v525 = vunpack.c.l.b16 %v381
      %v526 = vunpack.c.l.b16 %v382
      %v527 = vunpack.c.l.b16 %v383
      %v528 = vunpack.c.l.b16 %v384
      %v529 = vunpack.c.l.b16 %v385
      %v530 = vunpack.c.l.b16 %v386
      %v531 = vunpack.c.l.b16 %v387
      %v532 = vunpack.c.l.b16 %v388
      %v533 = vunpack.c.l.b16 %v389
      %v534 = vunpack.c.l.b16 %v390
      %v535 = vunpack.c.l.b16 %v391
      %v536 = vunpack.c.l.b16 %v392
      %v537 = vunpack.c.l.b16 %v393
      %v538 = vunpack.c.l.b16 %v394
      %v539 = vunpack.c.l.b16 %v395
      %v540 = vunpack.c.l.b16 %v396
      %v541 = vunpack.c.l.b16 %v397
      %v542 = vunpack.c.l.b16 %v398
      %v543 = vunpack.c.l.b16 %v399
      %v544 = vunpack.c.l.b16 %v400
      %v545 = vunpack.c.l.b16 %v401
      %v546 = vunpack.c.l.b16 %v402
      %v547 = vunpack.c.l.b16 %v403
      %v548 = vunpack.c.l.b16 %v404
      %v549 = vunpack.c.l.b16 %v405
      %v550 = vunpack.c.l.b16 %v406
      %v551 = vunpack.c.l.b16 %v407
      %v552 = vunpack.c.l.b16 %v408
      %v553 = vunpack.c.l.b16 %v409
      %v554 = vunpack.c.l.b16 %v410
      %v555 = vunpack.c.l.b16 %v411
      %v556 = vunpack.c.l.b16 %v412
      %v557 = vunpack.c.l.b16 %v413
      %v558 = vunpack.c.l.b16 %v414
      %v559 = vpack.c.b16 %v496, %v495
      %v560 = vpack.c.b16 %v498, %v497
      %v561 = vpack.c.b16 %v500, %v499
      %v562 = vpack.c.b16 %v502, %v501
      %v563 = vpack.c.b16 %v504, %v503
      %v564 = vpack.c.b16 %v506, %v505
      %v565 = vpack.c.b16 %v508, %v507
      %v566 = vpack.c.b16 %v510, %v509
      %v567 = vpack.c.b16 %v512, %v511
      %v568 = vpack.c.b16 %v514, %v513
      %v569 = vpack.c.b16 %v516, %v515
      %v570 = vpack.c.b16 %v518, %v517
      %v571 = vpack.c.b16 %v520, %v519
      %v572 = vpack.c.b16 %v522, %v521
      %v573 = vpack.c.b16 %v524, %v523
      %v574 = vpack.c.b16 %v526, %v525
      %v575 = vpack.c.b16 %v528, %v527
      %v576 = vpack.c.b16 %v530, %v529
      %v577 = vpack.c.b16 %v532, %v531
      %v578 = vpack.c.b16 %v534, %v533
      %v579 = vpack.c.b16 %v536, %v535
      %v580 = vpack.c.b16 %v538, %v537
      %v581 = vpack.c.b16 %v540, %v539
      %v582 = vpack.c.b16 %v542, %v541
      %v583 = vpack.c.b16 %v544, %v543
      %v584 = vpack.c.b16 %v546, %v545
      %v585 = vpack.c.b16 %v548, %v547
      %v586 = vpack.c.b16 %v550, %v549
      %v587 = vpack.c.b16 %v552, %v551
      %v588 = vpack.c.b16 %v554, %v553
      %v589 = vpack.c.b16 %v556, %v555
      %v590 = vpack.c.b16 %v558, %v557
      %v639 = vunpack.c.l.b16 %v415
      %v640 = vunpack.c.l.b16 %v416
      %v641 = vunpack.c.l.b16 %v417
      %v642 = vunpack.c.l.b16 %v418
      %v643 = vunpack.c.l.b16 %v419
      %v644 = vunpack.c.l.b16 %v420
      %v645 = vunpack.c.l.b16 %v421
      %v646 = vunpack.c.l.b16 %v422
      %v647 = vunpack.c.l.b16 %v423
      %v648 = vunpack.c.l.b16 %v424
      %v649 = vunpack.c.l.b16 %v425
      %v650 = vunpack.c.l.b16 %v426
      %v651 = vunpack.c.l.b16 %v427
      %v652 = vunpack.c.l.b16 %v428
      %v653 = vunpack.c.l.b16 %v429
      %v654 = vunpack.c.l.b16 %v430
      %v655 = vpack.c.b16 %v640, %v639
      %v656 = vpack.c.b16 %v642, %v641
      %v657 = vpack.c.b16 %v644, %v643
      %v658 = vpack.c.b16 %v646, %v645
      %v659 = vpack.c.b16 %v648, %v647
      %v660 = vpack.c.b16 %v650, %v649
      %v661 = vpack.c.b16 %v652, %v651
      %v662 = vpack.c.b16 %v654, %v653
      %671 = vmatprep.subr.bf16.mxu0 0
      %672 = vmatpush1.bf16.msra.mxu0 %v655
      %673 = vmatprep.subr.bf16.mxu0 0
      %674 = vmatpush1.bf16.msra.mxu0 %v656
      %675 = vmatprep.subr.bf16.mxu0 0
      %676 = vmatpush1.bf16.msra.mxu0 %v657
      %677 = vmatprep.subr.bf16.mxu0 0
      %678 = vmatpush1.bf16.msra.mxu0 %v658
      %679 = vmatprep.subr.bf16.mxu0 0
      %680 = vmatpush1.bf16.msra.mxu0 %v659
      %681 = vmatprep.subr.bf16.mxu0 0
      %682 = vmatpush1.bf16.msra.mxu0 %v660
      %683 = vmatprep.subr.bf16.mxu0 0
      %684 = vmatpush1.bf16.msra.mxu0 %v661
      %685 = vmatprep.subr.bf16.mxu0 0
      %686 = vmatpush1.bf16.msra.mxu0 %v662
      %687 = vmatprep.subr.bf16.mxu0 0
      %688 = vmatpush1.bf16.msra.mxu0 0
      %689 = vmatprep.subr.bf16.mxu0 0
      %690 = vmatpush1.bf16.msra.mxu0 0
      %691 = vmatprep.subr.bf16.mxu0 0
      %692 = vmatpush1.bf16.msra.mxu0 0
      %693 = vmatprep.subr.bf16.mxu0 0
      %694 = vmatpush1.bf16.msra.mxu0 0
      %695 = vmatprep.subr.bf16.mxu0 0
      %696 = vmatpush1.bf16.msra.mxu0 0
      %697 = vmatprep.subr.bf16.mxu0 0
      %698 = vmatpush1.bf16.msra.mxu0 0
      %699 = vmatprep.subr.bf16.mxu0 0
      %700 = vmatpush1.bf16.msra.mxu0 0
      %701 = vmatprep.subr.bf16.mxu0 0
      %702 = vmatpush1.bf16.msra.mxu0 0
      %703 = vmatprep.mubr.bf16.mxu0 0
      %704 = vmatmul.mubr.bf16.gmra.mrb[0].mxu0 %v559
      %v705 = vpop.f32.mrb[0].mxu0
      %v706 = vadd.f32 0.0, %v705
      %v707 = vpop.f32.mrb[0].mxu0
      %v708 = vpop.f32.mrb[0].mxu0
      %v709 = vadd.f32 0.0, %v708
      %v710 = vpop.f32.mrb[0].mxu0
      %711 = vmatprep.mubr.bf16.mxu0 0
      %712 = vmatmul.mubr.bf16.gmra.mrb[0].mxu0 %v560
      %v713 = vpop.f32.mrb[0].mxu0
      %v714 = vadd.f32 0.0, %v713
      %v715 = vpop.f32.mrb[0].mxu0
      %v716 = vpop.f32.mrb[0].mxu0
      %v717 = vadd.f32 0.0, %v716
      %v718 = vpop.f32.mrb[0].mxu0
      %719 = vmatprep.mubr.bf16.mxu0 0
      %720 = vmatmul.mubr.bf16.gmra.mrb[0].mxu0 %v561
      %v721 = vpop.f32.mrb[0].mxu0
      %v722 = vadd.f32 0.0, %v721
      %v723 = vpop.f32.mrb[0].mxu0
      %v724 = vpop.f32.mrb[0].mxu0
      %v725 = vadd.f32 0.0, %v724
      %v726 = vpop.f32.mrb[0].mxu0
      %727 = vmatprep.mubr.bf16.mxu0 0
      %728 = vmatmul.mubr.bf16.gmra.mrb[0].mxu0 %v562
      %v729 = vpop.f32.mrb[0].mxu0
      %v730 = vadd.f32 0.0, %v729
      %v731 = vpop.f32.mrb[0].mxu0
      %v732 = vpop.f32.mrb[0].mxu0
      %v733 = vadd.f32 0.0, %v732
      %v734 = vpop.f32.mrb[0].mxu0
      %735 = vmatprep.mubr.bf16.mxu0 0
      %736 = vmatmul.mubr.bf16.gmra.mrb[0].mxu0 %v563
      %v737 = vpop.f32.mrb[0].mxu0
      %v738 = vadd.f32 0.0, %v737
      %v739 = vpop.f32.mrb[0].mxu0
      %v740 = vpop.f32.mrb[0].mxu0
      %v741 = vadd.f32 0.0, %v740
      %v742 = vpop.f32.mrb[0].mxu0
      %743 = vmatprep.mubr.bf16.mxu0 0
      %744 = vmatmul.mubr.bf16.gmra.mrb[0].mxu0 %v564
      %v745 = vpop.f32.mrb[0].mxu0
      %v746 = vadd.f32 0.0, %v745
      %v747 = vpop.f32.mrb[0].mxu0
      %v748 = vpop.f32.mrb[0].mxu0
      %v749 = vadd.f32 0.0, %v748
      %v750 = vpop.f32.mrb[0].mxu0
      %751 = vmatprep.mubr.bf16.mxu0 0
      %752 = vmatmul.mubr.bf16.gmra.mrb[0].mxu0 %v565
      %v753 = vpop.f32.mrb[0].mxu0
      %v754 = vadd.f32 0.0, %v753
      %v755 = vpop.f32.mrb[0].mxu0
      %v756 = vpop.f32.mrb[0].mxu0
      %v757 = vadd.f32 0.0, %v756
      %v758 = vpop.f32.mrb[0].mxu0
      %759 = vmatprep.mubr.bf16.mxu0 0
      %760 = vmatmul.mubr.bf16.gmra.mrb[0].mxu0 %v566
      %v761 = vpop.f32.mrb[0].mxu0
      %v762 = vadd.f32 0.0, %v761
      %v763 = vpop.f32.mrb[0].mxu0
      %v764 = vpop.f32.mrb[0].mxu0
      %v765 = vadd.f32 0.0, %v764
      %v766 = vpop.f32.mrb[0].mxu0
      %767 = vmatprep.mubr.bf16.mxu0 0
      %768 = vmatmul.mubr.bf16.gmra.mrb[0].mxu0 %v567
      %v769 = vpop.f32.mrb[0].mxu0
      %v770 = vadd.f32 0.0, %v769
      %v771 = vpop.f32.mrb[0].mxu0
      %v772 = vpop.f32.mrb[0].mxu0
      %v773 = vadd.f32 0.0, %v772
      %v774 = vpop.f32.mrb[0].mxu0
      %775 = vmatprep.mubr.bf16.mxu0 0
      %776 = vmatmul.mubr.bf16.gmra.mrb[0].mxu0 %v568
      %v777 = vpop.f32.mrb[0].mxu0
      %v778 = vadd.f32 0.0, %v777
      %v779 = vpop.f32.mrb[0].mxu0
      %v780 = vpop.f32.mrb[0].mxu0
      %v781 = vadd.f32 0.0, %v780
      %v782 = vpop.f32.mrb[0].mxu0
      %783 = vmatprep.mubr.bf16.mxu0 0
      %784 = vmatmul.mubr.bf16.gmra.mrb[0].mxu0 %v569
      %v785 = vpop.f32.mrb[0].mxu0
      %v786 = vadd.f32 0.0, %v785
      %v787 = vpop.f32.mrb[0].mxu0
      %v788 = vpop.f32.mrb[0].mxu0
      %v789 = vadd.f32 0.0, %v788
      %v790 = vpop.f32.mrb[0].mxu0
      %791 = vmatprep.mubr.bf16.mxu0 0
      %792 = vmatmul.mubr.bf16.gmra.mrb[0].mxu0 %v570
      %v793 = vpop.f32.mrb[0].mxu0
      %v794 = vadd.f32 0.0, %v793
      %v795 = vpop.f32.mrb[0].mxu0
      %v796 = vpop.f32.mrb[0].mxu0
      %v797 = vadd.f32 0.0, %v796
      %v798 = vpop.f32.mrb[0].mxu0
      %799 = vmatprep.mubr.bf16.mxu0 0
      %800 = vmatmul.mubr.bf16.gmra.mrb[0].mxu0 %v571
      %v801 = vpop.f32.mrb[0].mxu0
      %v802 = vadd.f32 0.0, %v801
      %v803 = vpop.f32.mrb[0].mxu0
      %v804 = vpop.f32.mrb[0].mxu0
      %v805 = vadd.f32 0.0, %v804
      %v806 = vpop.f32.mrb[0].mxu0
      %807 = vmatprep.mubr.bf16.mxu0 0
      %808 = vmatmul.mubr.bf16.gmra.mrb[0].mxu0 %v572
      %v809 = vpop.f32.mrb[0].mxu0
      %v810 = vadd.f32 0.0, %v809
      %v811 = vpop.f32.mrb[0].mxu0
      %v812 = vpop.f32.mrb[0].mxu0
      %v813 = vadd.f32 0.0, %v812
      %v814 = vpop.f32.mrb[0].mxu0
      %815 = vmatprep.mubr.bf16.mxu0 0
      %816 = vmatmul.mubr.bf16.gmra.mrb[0].mxu0 %v573
      %v817 = vpop.f32.mrb[0].mxu0
      %v818 = vadd.f32 0.0, %v817
      %v819 = vpop.f32.mrb[0].mxu0
      %v820 = vpop.f32.mrb[0].mxu0
      %v821 = vadd.f32 0.0, %v820
      %v822 = vpop.f32.mrb[0].mxu0
      %823 = vmatprep.mubr.bf16.mxu0 0
      %824 = vmatmul.mubr.bf16.gmra.mrb[0].mxu0 %v574
      %v825 = vpop.f32.mrb[0].mxu0
      %v826 = vadd.f32 0.0, %v825
      %v827 = vpop.f32.mrb[0].mxu0
      %v828 = vpop.f32.mrb[0].mxu0
      %v829 = vadd.f32 0.0, %v828
      %v830 = vpop.f32.mrb[0].mxu0
      %831 = vmatprep.mubr.bf16.mxu0 0
      %832 = vmatmul.mubr.bf16.gmra.mrb[0].mxu0 %v575
      %v833 = vpop.f32.mrb[0].mxu0
      %v834 = vadd.f32 0.0, %v833
      %v835 = vpop.f32.mrb[0].mxu0
      %v836 = vpop.f32.mrb[0].mxu0
      %v837 = vadd.f32 0.0, %v836
      %v838 = vpop.f32.mrb[0].mxu0
      %839 = vmatprep.mubr.bf16.mxu0 0
      %840 = vmatmul.mubr.bf16.gmra.mrb[0].mxu0 %v576
      %v841 = vpop.f32.mrb[0].mxu0
      %v842 = vadd.f32 0.0, %v841
      %v843 = vpop.f32.mrb[0].mxu0
      %v844 = vpop.f32.mrb[0].mxu0
      %v845 = vadd.f32 0.0, %v844
      %v846 = vpop.f32.mrb[0].mxu0
      %847 = vmatprep.mubr.bf16.mxu0 0
      %848 = vmatmul.mubr.bf16.gmra.mrb[0].mxu0 %v577
      %v849 = vpop.f32.mrb[0].mxu0
      %v850 = vadd.f32 0.0, %v849
      %v851 = vpop.f32.mrb[0].mxu0
      %v852 = vpop.f32.mrb[0].mxu0
      %v853 = vadd.f32 0.0, %v852
      %v854 = vpop.f32.mrb[0].mxu0
      %855 = vmatprep.mubr.bf16.mxu0 0
      %856 = vmatmul.mubr.bf16.gmra.mrb[0].mxu0 %v578
      %v857 = vpop.f32.mrb[0].mxu0
      %v858 = vadd.f32 0.0, %v857
      %v859 = vpop.f32.mrb[0].mxu0
      %v860 = vpop.f32.mrb[0].mxu0
      %v861 = vadd.f32 0.0, %v860
      %v862 = vpop.f32.mrb[0].mxu0
      %863 = vmatprep.mubr.bf16.mxu0 0
      %864 = vmatmul.mubr.bf16.gmra.mrb[0].mxu0 %v579
      %v865 = vpop.f32.mrb[0].mxu0
      %v866 = vadd.f32 0.0, %v865
      %v867 = vpop.f32.mrb[0].mxu0
      %v868 = vpop.f32.mrb[0].mxu0
      %v869 = vadd.f32 0.0, %v868
      %v870 = vpop.f32.mrb[0].mxu0
      %871 = vmatprep.mubr.bf16.mxu0 0
      %872 = vmatmul.mubr.bf16.gmra.mrb[0].mxu0 %v580
      %v873 = vpop.f32.mrb[0].mxu0
      %v874 = vadd.f32 0.0, %v873
      %v875 = vpop.f32.mrb[0].mxu0
      %v876 = vpop.f32.mrb[0].mxu0
      %v877 = vadd.f32 0.0, %v876
      %v878 = vpop.f32.mrb[0].mxu0
      %879 = vmatprep.mubr.bf16.mxu0 0
      %880 = vmatmul.mubr.bf16.gmra.mrb[0].mxu0 %v581
      %v881 = vpop.f32.mrb[0].mxu0
      %v882 = vadd.f32 0.0, %v881
      %v883 = vpop.f32.mrb[0].mxu0
      %v884 = vpop.f32.mrb[0].mxu0
      %v885 = vadd.f32 0.0, %v884
      %v886 = vpop.f32.mrb[0].mxu0
      %887 = vmatprep.mubr.bf16.mxu0 0
      %888 = vmatmul.mubr.bf16.gmra.mrb[0].mxu0 %v582
      %v889 = vpop.f32.mrb[0].mxu0
      %v890 = vadd.f32 0.0, %v889
      %v891 = vpop.f32.mrb[0].mxu0
      %v892 = vpop.f32.mrb[0].mxu0
      %v893 = vadd.f32 0.0, %v892
      %v894 = vpop.f32.mrb[0].mxu0
      %895 = vmatprep.mubr.bf16.mxu0 0
      %896 = vmatmul.mubr.bf16.gmra.mrb[0].mxu0 %v583
      %v897 = vpop.f32.mrb[0].mxu0
      %v898 = vadd.f32 0.0, %v897
      %v899 = vpop.f32.mrb[0].mxu0
      %v900 = vpop.f32.mrb[0].mxu0
      %v901 = vadd.f32 0.0, %v900
      %v902 = vpop.f32.mrb[0].mxu0
      %903 = vmatprep.mubr.bf16.mxu0 0
      %904 = vmatmul.mubr.bf16.gmra.mrb[0].mxu0 %v584
      %v905 = vpop.f32.mrb[0].mxu0
      %v906 = vadd.f32 0.0, %v905
      %v907 = vpop.f32.mrb[0].mxu0
      %v908 = vpop.f32.mrb[0].mxu0
      %v909 = vadd.f32 0.0, %v908
      %v910 = vpop.f32.mrb[0].mxu0
      %911 = vmatprep.mubr.bf16.mxu0 0
      %912 = vmatmul.mubr.bf16.gmra.mrb[0].mxu0 %v585
      %v913 = vpop.f32.mrb[0].mxu0
      %v914 = vadd.f32 0.0, %v913
      %v915 = vpop.f32.mrb[0].mxu0
      %v916 = vpop.f32.mrb[0].mxu0
      %v917 = vadd.f32 0.0, %v916
      %v918 = vpop.f32.mrb[0].mxu0
      %919 = vmatprep.mubr.bf16.mxu0 0
      %920 = vmatmul.mubr.bf16.gmra.mrb[0].mxu0 %v586
      %v921 = vpop.f32.mrb[0].mxu0
      %v922 = vadd.f32 0.0, %v921
      %v923 = vpop.f32.mrb[0].mxu0
      %v924 = vpop.f32.mrb[0].mxu0
      %v925 = vadd.f32 0.0, %v924
      %v926 = vpop.f32.mrb[0].mxu0
      %927 = vmatprep.mubr.bf16.mxu0 0
      %928 = vmatmul.mubr.bf16.gmra.mrb[0].mxu0 %v587
      %v929 = vpop.f32.mrb[0].mxu0
      %v930 = vadd.f32 0.0, %v929
      %v931 = vpop.f32.mrb[0].mxu0
      %v932 = vpop.f32.mrb[0].mxu0
      %v933 = vadd.f32 0.0, %v932
      %v934 = vpop.f32.mrb[0].mxu0
      %935 = vmatprep.mubr.bf16.mxu0 0
      %936 = vmatmul.mubr.bf16.gmra.mrb[0].mxu0 %v588
      %v937 = vpop.f32.mrb[0].mxu0
      %v938 = vadd.f32 0.0, %v937
      %v939 = vpop.f32.mrb[0].mxu0
      %v940 = vpop.f32.mrb[0].mxu0
      %v941 = vadd.f32 0.0, %v940
      %v942 = vpop.f32.mrb[0].mxu0
      %943 = vmatprep.mubr.bf16.mxu0 0
      %944 = vmatmul.mubr.bf16.gmra.mrb[0].mxu0 %v589
      %v945 = vpop.f32.mrb[0].mxu0
      %v946 = vadd.f32 0.0, %v945
      %v947 = vpop.f32.mrb[0].mxu0
      %v948 = vpop.f32.mrb[0].mxu0
      %v949 = vadd.f32 0.0, %v948
      %v950 = vpop.f32.mrb[0].mxu0
      %951 = vmatprep.mubr.bf16.mxu0 0
      %952 = vmatmul.mubr.bf16.gmra.mrb[0].mxu0 %v590
      %v953 = vpop.f32.mrb[0].mxu0
      %v954 = vadd.f32 0.0, %v953
      %v955 = vpop.f32.mrb[0].mxu0
      %v956 = vpop.f32.mrb[0].mxu0
      %v957 = vadd.f32 0.0, %v956
      %v958 = vpop.f32.mrb[0].mxu0
      %959 = vdwg.mxu0
      %v960 = vadd.f32 %v287, %v706
      %v961 = vadd.f32 %v288, %v709
      %v962 = vadd.f32 %v289, %v714
      %v963 = vadd.f32 %v290, %v717
      %v964 = vadd.f32 %v291, %v722
      %v965 = vadd.f32 %v292, %v725
      %v966 = vadd.f32 %v293, %v730
      %v967 = vadd.f32 %v294, %v733
      %v968 = vadd.f32 %v295, %v738
      %v969 = vadd.f32 %v296, %v741
      %v970 = vadd.f32 %v297, %v746
      %v971 = vadd.f32 %v298, %v749
      %v972 = vadd.f32 %v299, %v754
      %v973 = vadd.f32 %v300, %v757
      %v974 = vadd.f32 %v301, %v762
      %v975 = vadd.f32 %v302, %v765
      %v976 = vadd.f32 %v303, %v770
      %v977 = vadd.f32 %v304, %v773
      %v978 = vadd.f32 %v305, %v778
      %v979 = vadd.f32 %v306, %v781
      %v980 = vadd.f32 %v307, %v786
      %v981 = vadd.f32 %v308, %v789
      %v982 = vadd.f32 %v309, %v794
      %v983 = vadd.f32 %v310, %v797
      %v984 = vadd.f32 %v311, %v802
      %v985 = vadd.f32 %v312, %v805
      %v986 = vadd.f32 %v313, %v810
      %v987 = vadd.f32 %v314, %v813
      %v988 = vadd.f32 %v315, %v818
      %v989 = vadd.f32 %v316, %v821
      %v990 = vadd.f32 %v317, %v826
      %v991 = vadd.f32 %v318, %v829
      %v992 = vadd.f32 %v319, %v834
      %v993 = vadd.f32 %v320, %v837
      %v994 = vadd.f32 %v321, %v842
      %v995 = vadd.f32 %v322, %v845
      %v996 = vadd.f32 %v323, %v850
      %v997 = vadd.f32 %v324, %v853
      %v998 = vadd.f32 %v325, %v858
      %v999 = vadd.f32 %v326, %v861
      %v1000 = vadd.f32 %v327, %v866
      %v1001 = vadd.f32 %v328, %v869
      %v1002 = vadd.f32 %v329, %v874
      %v1003 = vadd.f32 %v330, %v877
      %v1004 = vadd.f32 %v331, %v882
      %v1005 = vadd.f32 %v332, %v885
      %v1006 = vadd.f32 %v333, %v890
      %v1007 = vadd.f32 %v334, %v893
      %v1008 = vadd.f32 %v335, %v898
      %v1009 = vadd.f32 %v336, %v901
      %v1010 = vadd.f32 %v337, %v906
      %v1011 = vadd.f32 %v338, %v909
      %v1012 = vadd.f32 %v339, %v914
      %v1013 = vadd.f32 %v340, %v917
      %v1014 = vadd.f32 %v341, %v922
      %v1015 = vadd.f32 %v342, %v925
      %v1016 = vadd.f32 %v343, %v930
      %v1017 = vadd.f32 %v344, %v933
      %v1018 = vadd.f32 %v345, %v938
      %v1019 = vadd.f32 %v346, %v941
      %v1020 = vadd.f32 %v347, %v946
      %v1021 = vadd.f32 %v348, %v949
      %v1022 = vadd.f32 %v349, %v954
      %v1023 = vadd.f32 %v350, %v957
      %1024 = vst [vmem:[#allocation2] sm:$0xff] %v960
      %1025 = vst [vmem:[#allocation2 + $0x8] sm:$0xff] %v961
      %1026 = vst [vmem:[#allocation2 + $0x10] sm:$0xff] %v962
      %1027 = vst [vmem:[#allocation2 + $0x18] sm:$0xff] %v963
      %1028 = vst [vmem:[#allocation2 + $0x20] sm:$0xff] %v964
      %1029 = vst [vmem:[#allocation2 + $0x28] sm:$0xff] %v965
      %1030 = vst [vmem:[#allocation2 + $0x30] sm:$0xff] %v966
      %1031 = vst [vmem:[#allocation2 + $0x38] sm:$0xff] %v967
      %1032 = vst [vmem:[#allocation2 + $0x40] sm:$0xff] %v968
      %1033 = vst [vmem:[#allocation2 + $0x48] sm:$0xff] %v969
      %1034 = vst [vmem:[#allocation2 + $0x50] sm:$0xff] %v970
      %1035 = vst [vmem:[#allocation2 + $0x58] sm:$0xff] %v971
      %1036 = vst [vmem:[#allocation2 + $0x60] sm:$0xff] %v972
      %1037 = vst [vmem:[#allocation2 + $0x68] sm:$0xff] %v973
      %1038 = vst [vmem:[#allocation2 + $0x70] sm:$0xff] %v974
      %1039 = vst [vmem:[#allocation2 + $0x78] sm:$0xff] %v975
      %1040 = vst [vmem:[#allocation2 + $0x80] sm:$0xff] %v976
      %1041 = vst [vmem:[#allocation2 + $0x88] sm:$0xff] %v977
      %1042 = vst [vmem:[#allocation2 + $0x90] sm:$0xff] %v978
      %1043 = vst [vmem:[#allocation2 + $0x98] sm:$0xff] %v979
      %1044 = vst [vmem:[#allocation2 + $0xa0] sm:$0xff] %v980
      %1045 = vst [vmem:[#allocation2 + $0xa8] sm:$0xff] %v981
      %1046 = vst [vmem:[#allocation2 + $0xb0] sm:$0xff] %v982
      %1047 = vst [vmem:[#allocation2 + $0xb8] sm:$0xff] %v983
      %1048 = vst [vmem:[#allocation2 + $0xc0] sm:$0xff] %v984
      %1049 = vst [vmem:[#allocation2 + $0xc8] sm:$0xff] %v985
      %1050 = vst [vmem:[#allocation2 + $0xd0] sm:$0xff] %v986
      %1051 = vst [vmem:[#allocation2 + $0xd8] sm:$0xff] %v987
      %1052 = vst [vmem:[#allocation2 + $0xe0] sm:$0xff] %v988
      %1053 = vst [vmem:[#allocation2 + $0xe8] sm:$0xff] %v989
      %1054 = vst [vmem:[#allocation2 + $0xf0] sm:$0xff] %v990
      %1055 = vst [vmem:[#allocation2 + $0xf8] sm:$0xff] %v991
      %1056 = vst [vmem:[#allocation2 + $0x100] sm:$0xff] %v992
      %1057 = vst [vmem:[#allocation2 + $0x108] sm:$0xff] %v993
      %1058 = vst [vmem:[#allocation2 + $0x110] sm:$0xff] %v994
      %1059 = vst [vmem:[#allocation2 + $0x118] sm:$0xff] %v995
      %1060 = vst [vmem:[#allocation2 + $0x120] sm:$0xff] %v996
      %1061 = vst [vmem:[#allocation2 + $0x128] sm:$0xff] %v997
      %1062 = vst [vmem:[#allocation2 + $0x130] sm:$0xff] %v998
      %1063 = vst [vmem:[#allocation2 + $0x138] sm:$0xff] %v999
      %1064 = vst [vmem:[#allocation2 + $0x140] sm:$0xff] %v1000
      %1065 = vst [vmem:[#allocation2 + $0x148] sm:$0xff] %v1001
      %1066 = vst [vmem:[#allocation2 + $0x150] sm:$0xff] %v1002
      %1067 = vst [vmem:[#allocation2 + $0x158] sm:$0xff] %v1003
      %1068 = vst [vmem:[#allocation2 + $0x160] sm:$0xff] %v1004
      %1069 = vst [vmem:[#allocation2 + $0x168] sm:$0xff] %v1005
      %1070 = vst [vmem:[#allocation2 + $0x170] sm:$0xff] %v1006
      %1071 = vst [vmem:[#allocation2 + $0x178] sm:$0xff] %v1007
      %1072 = vst [vmem:[#allocation2 + $0x180] sm:$0xff] %v1008
      %1073 = vst [vmem:[#allocation2 + $0x188] sm:$0xff] %v1009
      %1074 = vst [vmem:[#allocation2 + $0x190] sm:$0xff] %v1010
      %1075 = vst [vmem:[#allocation2 + $0x198] sm:$0xff] %v1011
      %1076 = vst [vmem:[#allocation2 + $0x1a0] sm:$0xff] %v1012
      %1077 = vst [vmem:[#allocation2 + $0x1a8] sm:$0xff] %v1013
      %1078 = vst [vmem:[#allocation2 + $0x1b0] sm:$0xff] %v1014
      %1079 = vst [vmem:[#allocation2 + $0x1b8] sm:$0xff] %v1015
      %1080 = vst [vmem:[#allocation2 + $0x1c0] sm:$0xff] %v1016
      %1081 = vst [vmem:[#allocation2 + $0x1c8] sm:$0xff] %v1017
      %1082 = vst [vmem:[#allocation2 + $0x1d0] sm:$0xff] %v1018
      %1083 = vst [vmem:[#allocation2 + $0x1d8] sm:$0xff] %v1019
      %1084 = vst [vmem:[#allocation2 + $0x1e0] sm:$0xff] %v1020
      %1085 = vst [vmem:[#allocation2 + $0x1e8] sm:$0xff] %v1021
      %1086 = vst [vmem:[#allocation2 + $0x1f0] sm:$0xff] %v1022
      %1087 = vst [vmem:[#allocation2 + $0x1f8] sm:$0xff] %v1023
      // Predicated region
      $region33: #{generator_forward.56} parent=27 // pred_check
        %p1088 = pneg %p219
      $region34: #{generator_forward.56} parent=27 // pred_check_branch
        %1090 = sbr.rel (%p1088) target = $region36
      $region35: #{generator_forward.56} parent=27 // pred_region
        %v1091 = vld [vmem:[#allocation2] sm:$0xff]
        %v1092 = vld [vmem:[#allocation2 + $0x8] sm:$0xff]
        %v1093 = vld [vmem:[#allocation2 + $0x10] sm:$0xff]
        %v1094 = vld [vmem:[#allocation2 + $0x18] sm:$0xff]
        %v1095 = vld [vmem:[#allocation2 + $0x20] sm:$0xff]
        %v1096 = vld [vmem:[#allocation2 + $0x28] sm:$0xff]
        %v1097 = vld [vmem:[#allocation2 + $0x30] sm:$0xff]
        %v1098 = vld [vmem:[#allocation2 + $0x38] sm:$0xff]
        %v1099 = vld [vmem:[#allocation2 + $0x40] sm:$0xff]
        %v1100 = vld [vmem:[#allocation2 + $0x48] sm:$0xff]
        %v1101 = vld [vmem:[#allocation2 + $0x50] sm:$0xff]
        %v1102 = vld [vmem:[#allocation2 + $0x58] sm:$0xff]
        %v1103 = vld [vmem:[#allocation2 + $0x60] sm:$0xff]
        %v1104 = vld [vmem:[#allocation2 + $0x68] sm:$0xff]
        %v1105 = vld [vmem:[#allocation2 + $0x70] sm:$0xff]
        %v1106 = vld [vmem:[#allocation2 + $0x78] sm:$0xff]
        %v1107 = vld [vmem:[#allocation2 + $0x80] sm:$0xff]
        %v1108 = vld [vmem:[#allocation2 + $0x88] sm:$0xff]
        %v1109 = vld [vmem:[#allocation2 + $0x90] sm:$0xff]
        %v1110 = vld [vmem:[#allocation2 + $0x98] sm:$0xff]
        %v1111 = vld [vmem:[#allocation2 + $0xa0] sm:$0xff]
        %v1112 = vld [vmem:[#allocation2 + $0xa8] sm:$0xff]
        %v1113 = vld [vmem:[#allocation2 + $0xb0] sm:$0xff]
        %v1114 = vld [vmem:[#allocation2 + $0xb8] sm:$0xff]
        %v1115 = vld [vmem:[#allocation2 + $0xc0] sm:$0xff]
        %v1116 = vld [vmem:[#allocation2 + $0xc8] sm:$0xff]
        %v1117 = vld [vmem:[#allocation2 + $0xd0] sm:$0xff]
        %v1118 = vld [vmem:[#allocation2 + $0xd8] sm:$0xff]
        %v1119 = vld [vmem:[#allocation2 + $0xe0] sm:$0xff]
        %v1120 = vld [vmem:[#allocation2 + $0xe8] sm:$0xff]
        %v1121 = vld [vmem:[#allocation2 + $0xf0] sm:$0xff]
        %v1122 = vld [vmem:[#allocation2 + $0xf8] sm:$0xff]
        %v1123 = vld [vmem:[#allocation2 + $0x100] sm:$0xff]
        %v1124 = vld [vmem:[#allocation2 + $0x108] sm:$0xff]
        %v1125 = vld [vmem:[#allocation2 + $0x110] sm:$0xff]
        %v1126 = vld [vmem:[#allocation2 + $0x118] sm:$0xff]
        %v1127 = vld [vmem:[#allocation2 + $0x120] sm:$0xff]
        %v1128 = vld [vmem:[#allocation2 + $0x128] sm:$0xff]
        %v1129 = vld [vmem:[#allocation2 + $0x130] sm:$0xff]
        %v1130 = vld [vmem:[#allocation2 + $0x138] sm:$0xff]
        %v1131 = vld [vmem:[#allocation2 + $0x140] sm:$0xff]
        %v1132 = vld [vmem:[#allocation2 + $0x148] sm:$0xff]
        %v1133 = vld [vmem:[#allocation2 + $0x150] sm:$0xff]
        %v1134 = vld [vmem:[#allocation2 + $0x158] sm:$0xff]
        %v1135 = vld [vmem:[#allocation2 + $0x160] sm:$0xff]
        %v1136 = vld [vmem:[#allocation2 + $0x168] sm:$0xff]
        %v1137 = vld [vmem:[#allocation2 + $0x170] sm:$0xff]
        %v1138 = vld [vmem:[#allocation2 + $0x178] sm:$0xff]
        %v1139 = vld [vmem:[#allocation2 + $0x180] sm:$0xff]
        %v1140 = vld [vmem:[#allocation2 + $0x188] sm:$0xff]
        %v1141 = vld [vmem:[#allocation2 + $0x190] sm:$0xff]
        %v1142 = vld [vmem:[#allocation2 + $0x198] sm:$0xff]
        %v1143 = vld [vmem:[#allocation2 + $0x1a0] sm:$0xff]
        %v1144 = vld [vmem:[#allocation2 + $0x1a8] sm:$0xff]
        %v1145 = vld [vmem:[#allocation2 + $0x1b0] sm:$0xff]
        %v1146 = vld [vmem:[#allocation2 + $0x1b8] sm:$0xff]
        %v1147 = vld [vmem:[#allocation2 + $0x1c0] sm:$0xff]
        %v1148 = vld [vmem:[#allocation2 + $0x1c8] sm:$0xff]
        %v1149 = vld [vmem:[#allocation2 + $0x1d0] sm:$0xff]
        %v1150 = vld [vmem:[#allocation2 + $0x1d8] sm:$0xff]
        %v1151 = vld [vmem:[#allocation2 + $0x1e0] sm:$0xff]
        %v1152 = vld [vmem:[#allocation2 + $0x1e8] sm:$0xff]
        %v1153 = vld [vmem:[#allocation2 + $0x1f0] sm:$0xff]
        %v1154 = vld [vmem:[#allocation2 + $0x1f8] sm:$0xff]
        %v1155 = vtanh.pop %v1091
        %v1156 = vtanh.pop %v1092
        %v1157 = vtanh.pop %v1093
        %v1158 = vtanh.pop %v1094
        %v1159 = vtanh.pop %v1095
        %v1160 = vtanh.pop %v1096
        %v1161 = vtanh.pop %v1097
        %v1162 = vtanh.pop %v1098
        %v1163 = vtanh.pop %v1099
        %v1164 = vtanh.pop %v1100
        %v1165 = vtanh.pop %v1101
        %v1166 = vtanh.pop %v1102
        %v1167 = vtanh.pop %v1103
        %v1168 = vtanh.pop %v1104
        %v1169 = vtanh.pop %v1105
        %v1170 = vtanh.pop %v1106
        %v1171 = vtanh.pop %v1107
        %v1172 = vtanh.pop %v1108
        %v1173 = vtanh.pop %v1109
        %v1174 = vtanh.pop %v1110
        %v1175 = vtanh.pop %v1111
        %v1176 = vtanh.pop %v1112
        %v1177 = vtanh.pop %v1113
        %v1178 = vtanh.pop %v1114
        %v1179 = vtanh.pop %v1115
        %v1180 = vtanh.pop %v1116
        %v1181 = vtanh.pop %v1117
        %v1182 = vtanh.pop %v1118
        %v1183 = vtanh.pop %v1119
        %v1184 = vtanh.pop %v1120
        %v1185 = vtanh.pop %v1121
        %v1186 = vtanh.pop %v1122
        %v1187 = vtanh.pop %v1123
        %v1188 = vtanh.pop %v1124
        %v1189 = vtanh.pop %v1125
        %v1190 = vtanh.pop %v1126
        %v1191 = vtanh.pop %v1127
        %v1192 = vtanh.pop %v1128
        %v1193 = vtanh.pop %v1129
        %v1194 = vtanh.pop %v1130
        %v1195 = vtanh.pop %v1131
        %v1196 = vtanh.pop %v1132
        %v1197 = vtanh.pop %v1133
        %v1198 = vtanh.pop %v1134
        %v1199 = vtanh.pop %v1135
        %v1200 = vtanh.pop %v1136
        %v1201 = vtanh.pop %v1137
        %v1202 = vtanh.pop %v1138
        %v1203 = vtanh.pop %v1139
        %v1204 = vtanh.pop %v1140
        %v1205 = vtanh.pop %v1141
        %v1206 = vtanh.pop %v1142
        %v1207 = vtanh.pop %v1143
        %v1208 = vtanh.pop %v1144
        %v1209 = vtanh.pop %v1145
        %v1210 = vtanh.pop %v1146
        %v1211 = vtanh.pop %v1147
        %v1212 = vtanh.pop %v1148
        %v1213 = vtanh.pop %v1149
        %v1214 = vtanh.pop %v1150
        %v1215 = vtanh.pop %v1151
        %v1216 = vtanh.pop %v1152
        %v1217 = vtanh.pop %v1153
        %v1218 = vtanh.pop %v1154
        %1219 = vst [vmem:[%s216] sm:$0xff] %v1155
        %1220 = vst [vmem:[%s216 + $0x8] sm:$0xff] %v1156
        %1221 = vst [vmem:[%s216 + $0x10] sm:$0xff] %v1157
        %1222 = vst [vmem:[%s216 + $0x18] sm:$0xff] %v1158
        %1223 = vst [vmem:[%s216 + $0x20] sm:$0xff] %v1159
        %1224 = vst [vmem:[%s216 + $0x28] sm:$0xff] %v1160
        %1225 = vst [vmem:[%s216 + $0x30] sm:$0xff] %v1161
        %1226 = vst [vmem:[%s216 + $0x38] sm:$0xff] %v1162
        %1227 = vst [vmem:[%s216 + $0x40] sm:$0xff] %v1163
        %1228 = vst [vmem:[%s216 + $0x48] sm:$0xff] %v1164
        %1229 = vst [vmem:[%s216 + $0x50] sm:$0xff] %v1165
        %1230 = vst [vmem:[%s216 + $0x58] sm:$0xff] %v1166
        %1231 = vst [vmem:[%s216 + $0x60] sm:$0xff] %v1167
        %1232 = vst [vmem:[%s216 + $0x68] sm:$0xff] %v1168
        %1233 = vst [vmem:[%s216 + $0x70] sm:$0xff] %v1169
        %1234 = vst [vmem:[%s216 + $0x78] sm:$0xff] %v1170
        %1235 = vst [vmem:[%s216 + $0x80] sm:$0xff] %v1171
        %1236 = vst [vmem:[%s216 + $0x88] sm:$0xff] %v1172
        %1237 = vst [vmem:[%s216 + $0x90] sm:$0xff] %v1173
        %1238 = vst [vmem:[%s216 + $0x98] sm:$0xff] %v1174
        %1239 = vst [vmem:[%s216 + $0xa0] sm:$0xff] %v1175
        %1240 = vst [vmem:[%s216 + $0xa8] sm:$0xff] %v1176
        %1241 = vst [vmem:[%s216 + $0xb0] sm:$0xff] %v1177
        %1242 = vst [vmem:[%s216 + $0xb8] sm:$0xff] %v1178
        %1243 = vst [vmem:[%s216 + $0xc0] sm:$0xff] %v1179
        %1244 = vst [vmem:[%s216 + $0xc8] sm:$0xff] %v1180
        %1245 = vst [vmem:[%s216 + $0xd0] sm:$0xff] %v1181
        %1246 = vst [vmem:[%s216 + $0xd8] sm:$0xff] %v1182
        %1247 = vst [vmem:[%s216 + $0xe0] sm:$0xff] %v1183
        %1248 = vst [vmem:[%s216 + $0xe8] sm:$0xff] %v1184
        %1249 = vst [vmem:[%s216 + $0xf0] sm:$0xff] %v1185
        %1250 = vst [vmem:[%s216 + $0xf8] sm:$0xff] %v1186
        %1251 = vst [vmem:[%s216 + $0x100] sm:$0xff] %v1187
        %1252 = vst [vmem:[%s216 + $0x108] sm:$0xff] %v1188
        %1253 = vst [vmem:[%s216 + $0x110] sm:$0xff] %v1189
        %1254 = vst [vmem:[%s216 + $0x118] sm:$0xff] %v1190
        %1255 = vst [vmem:[%s216 + $0x120] sm:$0xff] %v1191
        %1256 = vst [vmem:[%s216 + $0x128] sm:$0xff] %v1192
        %1257 = vst [vmem:[%s216 + $0x130] sm:$0xff] %v1193
        %1258 = vst [vmem:[%s216 + $0x138] sm:$0xff] %v1194
        %1259 = vst [vmem:[%s216 + $0x140] sm:$0xff] %v1195
        %1260 = vst [vmem:[%s216 + $0x148] sm:$0xff] %v1196
        %1261 = vst [vmem:[%s216 + $0x150] sm:$0xff] %v1197
        %1262 = vst [vmem:[%s216 + $0x158] sm:$0xff] %v1198
        %1263 = vst [vmem:[%s216 + $0x160] sm:$0xff] %v1199
        %1264 = vst [vmem:[%s216 + $0x168] sm:$0xff] %v1200
        %1265 = vst [vmem:[%s216 + $0x170] sm:$0xff] %v1201
        %1266 = vst [vmem:[%s216 + $0x178] sm:$0xff] %v1202
        %1267 = vst [vmem:[%s216 + $0x180] sm:$0xff] %v1203
        %1268 = vst [vmem:[%s216 + $0x188] sm:$0xff] %v1204
        %1269 = vst [vmem:[%s216 + $0x190] sm:$0xff] %v1205
        %1270 = vst [vmem:[%s216 + $0x198] sm:$0xff] %v1206
        %1271 = vst [vmem:[%s216 + $0x1a0] sm:$0xff] %v1207
        %1272 = vst [vmem:[%s216 + $0x1a8] sm:$0xff] %v1208
        %1273 = vst [vmem:[%s216 + $0x1b0] sm:$0xff] %v1209
        %1274 = vst [vmem:[%s216 + $0x1b8] sm:$0xff] %v1210
        %1275 = vst [vmem:[%s216 + $0x1c0] sm:$0xff] %v1211
        %1276 = vst [vmem:[%s216 + $0x1c8] sm:$0xff] %v1212
        %1277 = vst [vmem:[%s216 + $0x1d0] sm:$0xff] %v1213
        %1278 = vst [vmem:[%s216 + $0x1d8] sm:$0xff] %v1214
        %1279 = vst [vmem:[%s216 + $0x1e0] sm:$0xff] %v1215
        %1280 = vst [vmem:[%s216 + $0x1e8] sm:$0xff] %v1216
        %1281 = vst [vmem:[%s216 + $0x1f0] sm:$0xff] %v1217
        %1282 = vst [vmem:[%s216 + $0x1f8] sm:$0xff] %v1218
      $region36: #{generator_forward.56} parent=27 // pred_fallthru
        _
      %s1283 = smul.u32 64, %s18
      %p1284 = scmp.lt.s32.totalorder %s1283, 255
      %s1285 = scalar_select %p1284, %s1283, 255
      %p1286 = scmp.lt.s32.totalorder %s19, 0
      %s1287 = scalar_select %p1286, %s19, 0
      %s1288 = sadd.s32 %s1287, %s1285
      %s1289 = smul.addr %s1288, 8
      %s1290 = scalar_lea.vmem %s2, %s1289
      // Predicated region
      $region37: #{generator_forward.56} parent=27 // pred_check
        %p1291 = pneg %p108
      $region38: #{generator_forward.56} parent=27 // pred_check_branch
        %1293 = sbr.rel (%p1291) target = $region40
      $region39: #{generator_forward.56} parent=27 // pred_region
        %s1294 = smul.u32 64, %s18
      $region40: #{generator_forward.56} parent=27 // pred_fallthru
        _
    $region28: #{generator_forward.56} parent=5 // pred_fallthru
      _
    %p1295 = scmp.le.s32.totalorder 2, %s8
    // Predicated region
    $region41: #{generator_forward.56} parent=5 // pred_check
      %p1296 = pneg %p1295
    $region42: #{generator_forward.56} parent=5 // pred_check_branch
      %1298 = sbr.rel (%p1296) target = $region44
    $region43: #{generator_forward.56} parent=5 // pred_region
      %s1299 = ssub.s32 %s8, 2
      // Predicated region
      $region45: #{generator_forward.56} parent=43 // pred_check
        %p1300 = pneg %p114
      $region46: #{generator_forward.56} parent=43 // pred_check_branch
        %1302 = sbr.rel (%p1300) target = $region48
      $region47: #{generator_forward.56} parent=43 // pred_region
        %s1303 = smul.u32 64, %s21
        %p1304 = scmp.lt.s32.totalorder %s1303, 255
        %s1305 = scalar_select %p1304, %s1303, 255
        %p1306 = scmp.lt.s32.totalorder %s22, 0
        %s1307 = scalar_select %p1306, %s22, 0
        %s1308 = sadd.s32 %s1307, %s1305
        %s1309 = smul.addr %s1308, 8
        %s1310 = scalar_lea.vmem %s2, %s1309
      $region48: #{generator_forward.56} parent=43 // pred_fallthru
        _
    $region44: #{generator_forward.56} parent=5 // pred_fallthru
      _
  $region6: #{generator_forward.56} parent=0 // loop_footer
    %s12 = sadd.s32 1, %s8
  $region7: #{generator_forward.56} parent=0 // loop_footer_branch
    %7 = sbr.rel target = $region3
  $region8: #{generator_forward.56} parent=0 // loop_exit
    _

</llo_original>
